<compile_context>
chip_gen: v6e
topology: v6e:2x2x1
jax: 0.10.0
libtpu: 0.0.40
codegen_flags: <defaults>
</compile_context>

<pallas_src>
import functools

import numpy as np
import jax
import jax.numpy as jnp
from jax import lax
from jax.experimental import pallas as pl
from jax.experimental.pallas import tpu as pltpu

EPS = 1e-5


def _round_up(v, m):
    return (v + m - 1) // m * m


def _fold_bn(gamma, beta, mean, var):
    scale = gamma / jnp.sqrt(var + EPS)
    bias = beta - mean * scale
    return scale, bias


# ------------------------------ kernel ------------------------------------- #

def _basic_block_kernel(x_ref, w1_ref, b1_ref, w2_ref, b2_ref, s_ref, c_ref,
                        *rest, dims, identity):
    """Fused BasicBlockNoAct for one image.

    x_ref : (1, CinP, L1) bf16   zero-padded, channel-padded, flattened input
    w1_ref: (9, Cout, CinP) bf16 conv1 taps (BN1 scale folded in)
    b1_ref: (Cout, 1) f32        BN1 bias
    w2_ref: (9, Cout, Cout) bf16 conv2 taps (BN2 scale folded in)
    b2_ref: (Cout, 1) f32        BN2 bias (+ shortcut-BN bias if projection)
    s_ref : (H*Wp, L2) bf16      0/1 scatter: conv1 output -> conv2 padded input
                                 (also performs the stride-s subsample)
    c_ref : (HO*Wp2, HO*WO) f32  0/1 compaction: drop the padding columns
    rest  : [ws_ref (Cout, CinP) bf16]  (projection only), then o_ref
    o_ref : (1, Cout, HO*WO) f32
    """
    H, W, HO, WO, stride = dims
    Wp, Wp2 = W + 2, WO + 2
    HWp, HOWp2 = H * Wp, HO * Wp2
    Cout = w1_ref.shape[1]

    if identity:
        (o_ref,) = rest
        ws_ref = None
    else:
        ws_ref, o_ref = rest

    xv = x_ref[0]                                          # (CinP, L1) bf16

    # ---- conv1 (BN1 scale folded) over the padded-flat image ---------------
    acc1 = jnp.zeros((Cout, HWp), jnp.float32)
    for t in range(9):
        off = (t // 3) * Wp + (t % 3)                      # tap (kh, kw) shift
        acc1 = acc1 + jnp.dot(w1_ref[t], xv[:, off:off + HWp],
                              preferred_element_type=jnp.float32)
    a1 = jnp.maximum(acc1 + b1_ref[...], 0.0).astype(jnp.bfloat16)  # BN1 + ReLU

    # ---- re-pad (+ stride-s subsample) for conv2 via 0/1 selection matmul ---
    x2 = jnp.dot(a1, s_ref[...],
                 preferred_element_type=jnp.float32).astype(jnp.bfloat16)

    # ---- conv2 (BN2 scale folded) -------------------------------------------
    acc2 = jnp.zeros((Cout, HOWp2), jnp.float32)
    for t in range(9):
        off = (t // 3) * Wp2 + (t % 3)
        acc2 = acc2 + jnp.dot(w2_ref[t], x2[:, off:off + HOWp2],
                              preferred_element_type=jnp.float32)
    acc2 = acc2 + b2_ref[...]

    # ---- shortcut (no final activation: BasicBlockNoAct) --------------------
    if identity:
        acc2 = acc2 + xv[:, Wp + 1:Wp + 1 + HOWp2].astype(jnp.float32)
    else:
        if stride == 1:
            xs = xv[:, Wp + 1:Wp + 1 + HOWp2]              # (CinP, HO*Wp2) bf16
        else:
            # exact stride-s subsample of the raw input, reusing S.
            xs = jnp.dot(xv[:, Wp + 1:Wp + 1 + HWp], s_ref[...],
                         preferred_element_type=jnp.float32)
            xs = xs[:, Wp2 + 1:Wp2 + 1 + HOWp2].astype(jnp.bfloat16)
        acc2 = acc2 + jnp.dot(ws_ref[...], xs,
                              preferred_element_type=jnp.float32)

    # ---- drop the padding columns (lane compaction) and store (lane-dense) --
    out = jnp.dot(acc2, c_ref[...], preferred_element_type=jnp.float32)
    o_ref[0] = out.astype(o_ref.dtype)


# ------------------------------ wrapper ------------------------------------ #

@functools.partial(jax.jit, static_argnames=("stride",))
def basic_block_forward(x_nchw, params, *, stride=1):
    """BasicBlockNoAct forward (inference-mode BN). NCHW in/out like PyTorch."""
    N, Cin, H, W = x_nchw.shape
    Cout = params["conv1_w"].shape[0]
    identity = "shortcut_w" not in params
    if identity:
        assert stride == 1 and Cin == Cout, \
            "identity shortcut requires stride == 1 and Cin == Cout"

    HO = (H - 1) // stride + 1
    WO = (W - 1) // stride + 1
    Wp, Wp2 = W + 2, WO + 2
    Hp, Hp2 = H + 2, HO + 2
    HWp, HOWp2, HOWO = H * Wp, HO * Wp2, HO * WO
    # Flat-padded lengths: long enough for the largest tap offset, lane-rounded.
    L1 = _round_up(max(Hp * Wp, 2 * Wp + 2 + HWp), 128)
    L2 = _round_up(max(Hp2 * Wp2, 2 * Wp2 + 2 + HOWp2), 128)
    CinP = _round_up(Cin, 8)          # pad channels so K / sublane dims are 8-aligned

    # ---- fold BN into conv weights (scale) + f32 bias ------------------------
    s1, b1 = _fold_bn(*params["bn1"])
    s2, b2 = _fold_bn(*params["bn2"])
    w1 = params["conv1_w"] * s1[:, None, None, None]       # (Cout, Cin, 3, 3)
    w2 = params["conv2_w"] * s2[:, None, None, None]
    w1 = jnp.transpose(w1, (2, 3, 0, 1)).reshape(9, Cout, Cin)
    w2 = jnp.transpose(w2, (2, 3, 0, 1)).reshape(9, Cout, Cout)
    w1 = jnp.pad(w1, ((0, 0), (0, 0), (0, CinP - Cin))).astype(jnp.bfloat16)
    w2 = w2.astype(jnp.bfloat16)
    b1v = b1.reshape(Cout, 1).astype(jnp.float32)
    if identity:
        b2v = b2.reshape(Cout, 1).astype(jnp.float32)
        ws = None
    else:
        ss, bs = _fold_bn(*params["bn_s"])
        ws = params["shortcut_w"][:, :, 0, 0] * ss[:, None]  # (Cout, Cin)
        ws = jnp.pad(ws, ((0, 0), (0, CinP - Cin))).astype(jnp.bfloat16)
        b2v = (b2 + bs).reshape(Cout, 1).astype(jnp.float32)

    # ---- constant 0/1 selection matrices (exact; one nonzero per column) -----
    # S: conv1 base space (H*Wp) -> conv2 padded-flat space (L2); also performs
    #    the stride-s subsample and drops conv1's padding-column garbage.
    S = np.zeros((HWp, L2), np.float32)
    for ho in range(HO):
        for wo in range(WO):
            S[stride * ho * Wp + stride * wo, (ho + 1) * Wp2 + (wo + 1)] = 1.0
    # C: conv2 base space (HO*Wp2) -> compact output space (HO*WO).
    C = np.zeros((HOWp2, HOWO), np.float32)
    for ho in range(HO):
        for wo in range(WO):
            C[ho * Wp2 + wo, ho * WO + wo] = 1.0
    S = jnp.asarray(S, jnp.bfloat16)
    C = jnp.asarray(C, jnp.float32)

    # ---- NCHW -> channel-padded, zero-padded, flattened (NO transposes) ------
    xb = x_nchw.astype(jnp.bfloat16)
    xb = jnp.pad(xb, ((0, 0), (0, CinP - Cin), (1, 1), (1, 1)))   # (N,CinP,Hp,Wp)
    xb = xb.reshape(N, CinP, Hp * Wp)
    xb = jnp.pad(xb, ((0, 0), (0, 0), (0, L1 - Hp * Wp)))         # (N,CinP,L1)

    args = [xb, w1, b1v, w2, b2v, S, C]
    in_specs = [
        pl.BlockSpec((1, CinP, L1), lambda n: (n, 0, 0)),
        pl.BlockSpec((9, Cout, CinP), lambda n: (0, 0, 0)),
        pl.BlockSpec((Cout, 1), lambda n: (0, 0)),
        pl.BlockSpec((9, Cout, Cout), lambda n: (0, 0, 0)),
        pl.BlockSpec((Cout, 1), lambda n: (0, 0)),
        pl.BlockSpec((HWp, L2), lambda n: (0, 0)),
        pl.BlockSpec((HOWp2, HOWO), lambda n: (0, 0)),
    ]
    if not identity:
        args.append(ws)
        in_specs.append(pl.BlockSpec((Cout, CinP), lambda n: (0, 0)))

    kernel = functools.partial(_basic_block_kernel,
                               dims=(H, W, HO, WO, stride), identity=identity)

    flops = 2 * N * (HWp * 9 * CinP * Cout + Cout * HWp * L2
                     + HOWp2 * 9 * Cout * Cout + Cout * HOWp2 * HOWO)
    if not identity:
        flops += 2 * N * Cout * CinP * HOWp2
    bytes_accessed = sum(int(a.size) * a.dtype.itemsize for a in args)
    bytes_accessed += N * Cout * HOWO * 4

    out = pl.pallas_call(
        kernel,
        out_shape=jax.ShapeDtypeStruct((N, Cout, HOWO), jnp.float32),
        grid_spec=pltpu.PrefetchScalarGridSpec(
            num_scalar_prefetch=0,
            grid=(N,),
            in_specs=in_specs,
            out_specs=pl.BlockSpec((1, Cout, HOWO), lambda n: (n, 0, 0)),
        ),
        compiler_params=pltpu.CompilerParams(
            dimension_semantics=("parallel",),
            vmem_limit_bytes=32 * 1024 * 1024,
        ),
        cost_estimate=pl.CostEstimate(flops=int(flops), transcendentals=0,
                                      bytes_accessed=int(bytes_accessed)),
    )(*args)

    return out.reshape(N, Cout, HO, WO)       # already NCHW: no transpose needed


# ------------------------------ reference ----------------------------------- #

def ref_forward(x, params, *, stride=1):
    """Pure-JAX f32 reference matching BasicBlockNoAct (no final activation)."""
    def bn(y, g, b, m, v):
        g, b, m, v = [a[None, :, None, None] for a in (g, b, m, v)]
        return g * (y - m) / jnp.sqrt(v + EPS) + b

    def conv(y, w, s, pad):
        return lax.conv_general_dilated(
            y, w, (s, s), ((pad, pad), (pad, pad)),
            dimension_numbers=("NCHW", "OIHW", "NCHW"))

    out = jax.nn.relu(bn(conv(x, params["conv1_w"], stride, 1), *params["bn1"]))
    out = bn(conv(out, params["conv2_w"], 1, 1), *params["bn2"])
    if "shortcut_w" in params:
        sc = bn(conv(x, params["shortcut_w"], stride, 0), *params["bn_s"])
    else:
        sc = x
    return out + sc                                        # NOTE: no final ReLU


# -------------------------------- main --------------------------------------- #

if __name__ == "__main__":
    key = jax.random.PRNGKey(0)

    def bn_params(k, c):
        k0, k1, k2, k3 = jax.random.split(k, 4)
        return (1.0 + 0.1 * jax.random.normal(k0, (c,), jnp.float32),           # gamma
                0.1 * jax.random.normal(k1, (c,), jnp.float32),                 # beta
                0.05 * jax.random.normal(k2, (c,), jnp.float32),                # running_mean
                jnp.abs(1.0 + 0.1 * jax.random.normal(k3, (c,), jnp.float32)))  # running_var

    def make_params(k, in_planes, planes, stride):
        ks = jax.random.split(k, 6)
        p = {
            "conv1_w": 0.2 * jax.random.normal(ks[0], (planes, in_planes, 3, 3), jnp.float32),
            "conv2_w": 0.2 * jax.random.normal(ks[1], (planes, planes, 3, 3), jnp.float32),
            "bn1": bn_params(ks[2], planes),
            "bn2": bn_params(ks[3], planes),
        }
        if stride != 1 or in_planes != planes:
            p["shortcut_w"] = 0.2 * jax.random.normal(
                ks[4], (planes, in_planes, 1, 1), jnp.float32)
            p["bn_s"] = bn_params(ks[5], planes)
        return p

    configs = [
        # (N, in_planes, planes, H, W, stride)
        (2, 4, 8, 16, 16, 1),   # projection shortcut (channel change)
        (2, 8, 8, 16, 16, 1),   # identity shortcut
        (2, 4, 8, 16, 16, 2),   # strided block + projection shortcut
    ]
    for i, (N, cin, cpl, H, W, stride) in enumerate(configs):
        kp, kx = jax.random.split(jax.random.fold_in(key, i))
        params = make_params(kp, cin, cpl, stride)
        x = jax.random.normal(kx, (N, cin, H, W), jnp.float32)

        out = jax.block_until_ready(basic_block_forward(x, params, stride=stride))
        ref = jax.block_until_ready(ref_forward(x, params, stride=stride))
        assert out.shape == ref.shape, (out.shape, ref.shape)
        # bf16 MXU inputs (f32 accumulation) vs. a pure-f32 reference.
        np.testing.assert_allclose(np.asarray(out), np.asarray(ref),
                                   rtol=5e-2, atol=5e-2)

    print("KERNEL_OK")
</pallas_src>

<mosaic_0001>
module attributes {stable_mosaic.version = 11 : i64} {
  func.func @_basic_block_kernel(%arg0: i32, %arg1: memref<1x8x384xbf16, #tpu.memory_space<vmem>>, %arg2: memref<9x8x8xbf16, #tpu.memory_space<vmem>>, %arg3: memref<8x1xf32, #tpu.memory_space<vmem>>, %arg4: memref<9x8x8xbf16, #tpu.memory_space<vmem>>, %arg5: memref<8x1xf32, #tpu.memory_space<vmem>>, %arg6: memref<288x384xbf16, #tpu.memory_space<vmem>>, %arg7: memref<288x256xf32, #tpu.memory_space<vmem>>, %arg8: memref<8x8xbf16, #tpu.memory_space<vmem>>, %arg9: memref<1x8x256xf32, #tpu.memory_space<vmem>>) attributes {dimension_semantics = [#tpu.dimension_semantics<parallel>], iteration_bounds = array<i64: 2>, scalar_prefetch = 0 : i64, scratch_operands = 0 : i64, tpu.core_type = #tpu.core_type<tc>, window_params = [{transform_indices = @transform_0, window_bounds = array<i64: 1, 8, 384>}, {pipeline_mode = #tpu.pipeline_mode<synchronous>, transform_indices = @transform_1, window_bounds = array<i64: 9, 8, 8>}, {pipeline_mode = #tpu.pipeline_mode<synchronous>, transform_indices = @transform_2, window_bounds = array<i64: 8, 1>}, {pipeline_mode = #tpu.pipeline_mode<synchronous>, transform_indices = @transform_3, window_bounds = array<i64: 9, 8, 8>}, {pipeline_mode = #tpu.pipeline_mode<synchronous>, transform_indices = @transform_4, window_bounds = array<i64: 8, 1>}, {pipeline_mode = #tpu.pipeline_mode<synchronous>, transform_indices = @transform_5, window_bounds = array<i64: 288, 384>}, {pipeline_mode = #tpu.pipeline_mode<synchronous>, transform_indices = @transform_6, window_bounds = array<i64: 288, 256>}, {pipeline_mode = #tpu.pipeline_mode<synchronous>, transform_indices = @transform_7, window_bounds = array<i64: 8, 8>}, {transform_indices = @transform_8, window_bounds = array<i64: 1, 8, 256>}]} {
    %c0 = arith.constant 0 : index
    %c0_0 = arith.constant 0 : index
    %c0_1 = arith.constant 0 : index
    %0 = vector.load %arg1[%c0, %c0_0, %c0_1] : memref<1x8x384xbf16, #tpu.memory_space<vmem>>, vector<1x8x384xbf16>
    %1 = vector.shape_cast %0 : vector<1x8x384xbf16> to vector<8x384xbf16>
    %cst = arith.constant 0.000000e+00 : f32
    %2 = vector.broadcast %cst : f32 to vector<8x288xf32>
    %c0_2 = arith.constant 0 : index
    %c0_3 = arith.constant 0 : index
    %c0_4 = arith.constant 0 : index
    %3 = vector.load %arg2[%c0_2, %c0_3, %c0_4] : memref<9x8x8xbf16, #tpu.memory_space<vmem>>, vector<1x8x8xbf16>
    %4 = vector.shape_cast %3 : vector<1x8x8xbf16> to vector<8x8xbf16>
    %5 = vector.extract_strided_slice %1 {offsets = [0, 0], sizes = [8, 288], strides = [1, 1]} : vector<8x384xbf16> to vector<8x288xbf16>
    %cst_5 = arith.constant dense<0.000000e+00> : vector<8x288xf32>
    %6 = tpu.matmul %4, %5, %cst_5 {dimension_numbers = #tpu.dot_dimension_numbers<[1], [0], [0], [1], [0, 0, 1, 1], [], []>} : vector<8x8xbf16>, vector<8x288xbf16>, vector<8x288xf32> -> vector<8x288xf32>
    %7 = arith.addf %2, %6 : vector<8x288xf32>
    %c1 = arith.constant 1 : index
    %c0_6 = arith.constant 0 : index
    %c0_7 = arith.constant 0 : index
    %8 = vector.load %arg2[%c1, %c0_6, %c0_7] : memref<9x8x8xbf16, #tpu.memory_space<vmem>>, vector<1x8x8xbf16>
    %9 = vector.shape_cast %8 : vector<1x8x8xbf16> to vector<8x8xbf16>
    %10 = vector.extract_strided_slice %1 {offsets = [0, 1], sizes = [8, 288], strides = [1, 1]} : vector<8x384xbf16> to vector<8x288xbf16>
    %cst_8 = arith.constant dense<0.000000e+00> : vector<8x288xf32>
    %11 = tpu.matmul %9, %10, %cst_8 {dimension_numbers = #tpu.dot_dimension_numbers<[1], [0], [0], [1], [0, 0, 1, 1], [], []>} : vector<8x8xbf16>, vector<8x288xbf16>, vector<8x288xf32> -> vector<8x288xf32>
    %12 = arith.addf %7, %11 : vector<8x288xf32>
    %c2 = arith.constant 2 : index
    %c0_9 = arith.constant 0 : index
    %c0_10 = arith.constant 0 : index
    %13 = vector.load %arg2[%c2, %c0_9, %c0_10] : memref<9x8x8xbf16, #tpu.memory_space<vmem>>, vector<1x8x8xbf16>
    %14 = vector.shape_cast %13 : vector<1x8x8xbf16> to vector<8x8xbf16>
    %15 = vector.extract_strided_slice %1 {offsets = [0, 2], sizes = [8, 288], strides = [1, 1]} : vector<8x384xbf16> to vector<8x288xbf16>
    %cst_11 = arith.constant dense<0.000000e+00> : vector<8x288xf32>
    %16 = tpu.matmul %14, %15, %cst_11 {dimension_numbers = #tpu.dot_dimension_numbers<[1], [0], [0], [1], [0, 0, 1, 1], [], []>} : vector<8x8xbf16>, vector<8x288xbf16>, vector<8x288xf32> -> vector<8x288xf32>
    %17 = arith.addf %12, %16 : vector<8x288xf32>
    %c3 = arith.constant 3 : index
    %c0_12 = arith.constant 0 : index
    %c0_13 = arith.constant 0 : index
    %18 = vector.load %arg2[%c3, %c0_12, %c0_13] : memref<9x8x8xbf16, #tpu.memory_space<vmem>>, vector<1x8x8xbf16>
    %19 = vector.shape_cast %18 : vector<1x8x8xbf16> to vector<8x8xbf16>
    %20 = vector.extract_strided_slice %1 {offsets = [0, 18], sizes = [8, 288], strides = [1, 1]} : vector<8x384xbf16> to vector<8x288xbf16>
    %cst_14 = arith.constant dense<0.000000e+00> : vector<8x288xf32>
    %21 = tpu.matmul %19, %20, %cst_14 {dimension_numbers = #tpu.dot_dimension_numbers<[1], [0], [0], [1], [0, 0, 1, 1], [], []>} : vector<8x8xbf16>, vector<8x288xbf16>, vector<8x288xf32> -> vector<8x288xf32>
    %22 = arith.addf %17, %21 : vector<8x288xf32>
    %c4 = arith.constant 4 : index
    %c0_15 = arith.constant 0 : index
    %c0_16 = arith.constant 0 : index
    %23 = vector.load %arg2[%c4, %c0_15, %c0_16] : memref<9x8x8xbf16, #tpu.memory_space<vmem>>, vector<1x8x8xbf16>
    %24 = vector.shape_cast %23 : vector<1x8x8xbf16> to vector<8x8xbf16>
    %25 = vector.extract_strided_slice %1 {offsets = [0, 19], sizes = [8, 288], strides = [1, 1]} : vector<8x384xbf16> to vector<8x288xbf16>
    %cst_17 = arith.constant dense<0.000000e+00> : vector<8x288xf32>
    %26 = tpu.matmul %24, %25, %cst_17 {dimension_numbers = #tpu.dot_dimension_numbers<[1], [0], [0], [1], [0, 0, 1, 1], [], []>} : vector<8x8xbf16>, vector<8x288xbf16>, vector<8x288xf32> -> vector<8x288xf32>
    %27 = arith.addf %22, %26 : vector<8x288xf32>
    %c5 = arith.constant 5 : index
    %c0_18 = arith.constant 0 : index
    %c0_19 = arith.constant 0 : index
    %28 = vector.load %arg2[%c5, %c0_18, %c0_19] : memref<9x8x8xbf16, #tpu.memory_space<vmem>>, vector<1x8x8xbf16>
    %29 = vector.shape_cast %28 : vector<1x8x8xbf16> to vector<8x8xbf16>
    %30 = vector.extract_strided_slice %1 {offsets = [0, 20], sizes = [8, 288], strides = [1, 1]} : vector<8x384xbf16> to vector<8x288xbf16>
    %cst_20 = arith.constant dense<0.000000e+00> : vector<8x288xf32>
    %31 = tpu.matmul %29, %30, %cst_20 {dimension_numbers = #tpu.dot_dimension_numbers<[1], [0], [0], [1], [0, 0, 1, 1], [], []>} : vector<8x8xbf16>, vector<8x288xbf16>, vector<8x288xf32> -> vector<8x288xf32>
    %32 = arith.addf %27, %31 : vector<8x288xf32>
    %c6 = arith.constant 6 : index
    %c0_21 = arith.constant 0 : index
    %c0_22 = arith.constant 0 : index
    %33 = vector.load %arg2[%c6, %c0_21, %c0_22] : memref<9x8x8xbf16, #tpu.memory_space<vmem>>, vector<1x8x8xbf16>
    %34 = vector.shape_cast %33 : vector<1x8x8xbf16> to vector<8x8xbf16>
    %35 = vector.extract_strided_slice %1 {offsets = [0, 36], sizes = [8, 288], strides = [1, 1]} : vector<8x384xbf16> to vector<8x288xbf16>
    %cst_23 = arith.constant dense<0.000000e+00> : vector<8x288xf32>
    %36 = tpu.matmul %34, %35, %cst_23 {dimension_numbers = #tpu.dot_dimension_numbers<[1], [0], [0], [1], [0, 0, 1, 1], [], []>} : vector<8x8xbf16>, vector<8x288xbf16>, vector<8x288xf32> -> vector<8x288xf32>
    %37 = arith.addf %32, %36 : vector<8x288xf32>
    %c7 = arith.constant 7 : index
    %c0_24 = arith.constant 0 : index
    %c0_25 = arith.constant 0 : index
    %38 = vector.load %arg2[%c7, %c0_24, %c0_25] : memref<9x8x8xbf16, #tpu.memory_space<vmem>>, vector<1x8x8xbf16>
    %39 = vector.shape_cast %38 : vector<1x8x8xbf16> to vector<8x8xbf16>
    %40 = vector.extract_strided_slice %1 {offsets = [0, 37], sizes = [8, 288], strides = [1, 1]} : vector<8x384xbf16> to vector<8x288xbf16>
    %cst_26 = arith.constant dense<0.000000e+00> : vector<8x288xf32>
    %41 = tpu.matmul %39, %40, %cst_26 {dimension_numbers = #tpu.dot_dimension_numbers<[1], [0], [0], [1], [0, 0, 1, 1], [], []>} : vector<8x8xbf16>, vector<8x288xbf16>, vector<8x288xf32> -> vector<8x288xf32>
    %42 = arith.addf %37, %41 : vector<8x288xf32>
    %c8 = arith.constant 8 : index
    %c0_27 = arith.constant 0 : index
    %c0_28 = arith.constant 0 : index
    %43 = vector.load %arg2[%c8, %c0_27, %c0_28] : memref<9x8x8xbf16, #tpu.memory_space<vmem>>, vector<1x8x8xbf16>
    %44 = vector.shape_cast %43 : vector<1x8x8xbf16> to vector<8x8xbf16>
    %45 = vector.extract_strided_slice %1 {offsets = [0, 38], sizes = [8, 288], strides = [1, 1]} : vector<8x384xbf16> to vector<8x288xbf16>
    %cst_29 = arith.constant dense<0.000000e+00> : vector<8x288xf32>
    %46 = tpu.matmul %44, %45, %cst_29 {dimension_numbers = #tpu.dot_dimension_numbers<[1], [0], [0], [1], [0, 0, 1, 1], [], []>} : vector<8x8xbf16>, vector<8x288xbf16>, vector<8x288xf32> -> vector<8x288xf32>
    %47 = arith.addf %42, %46 : vector<8x288xf32>
    %c0_30 = arith.constant 0 : index
    %c0_31 = arith.constant 0 : index
    %48 = vector.load %arg3[%c0_30, %c0_31] : memref<8x1xf32, #tpu.memory_space<vmem>>, vector<8x1xf32>
    %49 = vector.broadcast %48 : vector<8x1xf32> to vector<8x288xf32>
    %50 = arith.addf %47, %49 : vector<8x288xf32>
    %cst_32 = arith.constant 0.000000e+00 : f32
    %51 = vector.broadcast %cst_32 : f32 to vector<8x288xf32>
    %52 = arith.maximumf %50, %51 : vector<8x288xf32>
    %53 = arith.truncf %52 : vector<8x288xf32> to vector<8x288xbf16>
    %c0_33 = arith.constant 0 : index
    %c0_34 = arith.constant 0 : index
    %54 = vector.load %arg6[%c0_33, %c0_34] : memref<288x384xbf16, #tpu.memory_space<vmem>>, vector<288x384xbf16>
    %cst_35 = arith.constant dense<0.000000e+00> : vector<8x384xf32>
    %55 = tpu.matmul %53, %54, %cst_35 {dimension_numbers = #tpu.dot_dimension_numbers<[1], [0], [0], [1], [0, 0, 1, 1], [], []>} : vector<8x288xbf16>, vector<288x384xbf16>, vector<8x384xf32> -> vector<8x384xf32>
    %56 = arith.truncf %55 : vector<8x384xf32> to vector<8x384xbf16>
    %cst_36 = arith.constant 0.000000e+00 : f32
    %57 = vector.broadcast %cst_36 : f32 to vector<8x288xf32>
    %c0_37 = arith.constant 0 : index
    %c0_38 = arith.constant 0 : index
    %c0_39 = arith.constant 0 : index
    %58 = vector.load %arg4[%c0_37, %c0_38, %c0_39] : memref<9x8x8xbf16, #tpu.memory_space<vmem>>, vector<1x8x8xbf16>
    %59 = vector.shape_cast %58 : vector<1x8x8xbf16> to vector<8x8xbf16>
    %60 = vector.extract_strided_slice %56 {offsets = [0, 0], sizes = [8, 288], strides = [1, 1]} : vector<8x384xbf16> to vector<8x288xbf16>
    %cst_40 = arith.constant dense<0.000000e+00> : vector<8x288xf32>
    %61 = tpu.matmul %59, %60, %cst_40 {dimension_numbers = #tpu.dot_dimension_numbers<[1], [0], [0], [1], [0, 0, 1, 1], [], []>} : vector<8x8xbf16>, vector<8x288xbf16>, vector<8x288xf32> -> vector<8x288xf32>
    %62 = arith.addf %57, %61 : vector<8x288xf32>
    %c1_41 = arith.constant 1 : index
    %c0_42 = arith.constant 0 : index
    %c0_43 = arith.constant 0 : index
    %63 = vector.load %arg4[%c1_41, %c0_42, %c0_43] : memref<9x8x8xbf16, #tpu.memory_space<vmem>>, vector<1x8x8xbf16>
    %64 = vector.shape_cast %63 : vector<1x8x8xbf16> to vector<8x8xbf16>
    %65 = vector.extract_strided_slice %56 {offsets = [0, 1], sizes = [8, 288], strides = [1, 1]} : vector<8x384xbf16> to vector<8x288xbf16>
    %cst_44 = arith.constant dense<0.000000e+00> : vector<8x288xf32>
    %66 = tpu.matmul %64, %65, %cst_44 {dimension_numbers = #tpu.dot_dimension_numbers<[1], [0], [0], [1], [0, 0, 1, 1], [], []>} : vector<8x8xbf16>, vector<8x288xbf16>, vector<8x288xf32> -> vector<8x288xf32>
    %67 = arith.addf %62, %66 : vector<8x288xf32>
    %c2_45 = arith.constant 2 : index
    %c0_46 = arith.constant 0 : index
    %c0_47 = arith.constant 0 : index
    %68 = vector.load %arg4[%c2_45, %c0_46, %c0_47] : memref<9x8x8xbf16, #tpu.memory_space<vmem>>, vector<1x8x8xbf16>
    %69 = vector.shape_cast %68 : vector<1x8x8xbf16> to vector<8x8xbf16>
    %70 = vector.extract_strided_slice %56 {offsets = [0, 2], sizes = [8, 288], strides = [1, 1]} : vector<8x384xbf16> to vector<8x288xbf16>
    %cst_48 = arith.constant dense<0.000000e+00> : vector<8x288xf32>
    %71 = tpu.matmul %69, %70, %cst_48 {dimension_numbers = #tpu.dot_dimension_numbers<[1], [0], [0], [1], [0, 0, 1, 1], [], []>} : vector<8x8xbf16>, vector<8x288xbf16>, vector<8x288xf32> -> vector<8x288xf32>
    %72 = arith.addf %67, %71 : vector<8x288xf32>
    %c3_49 = arith.constant 3 : index
    %c0_50 = arith.constant 0 : index
    %c0_51 = arith.constant 0 : index
    %73 = vector.load %arg4[%c3_49, %c0_50, %c0_51] : memref<9x8x8xbf16, #tpu.memory_space<vmem>>, vector<1x8x8xbf16>
    %74 = vector.shape_cast %73 : vector<1x8x8xbf16> to vector<8x8xbf16>
    %75 = vector.extract_strided_slice %56 {offsets = [0, 18], sizes = [8, 288], strides = [1, 1]} : vector<8x384xbf16> to vector<8x288xbf16>
    %cst_52 = arith.constant dense<0.000000e+00> : vector<8x288xf32>
    %76 = tpu.matmul %74, %75, %cst_52 {dimension_numbers = #tpu.dot_dimension_numbers<[1], [0], [0], [1], [0, 0, 1, 1], [], []>} : vector<8x8xbf16>, vector<8x288xbf16>, vector<8x288xf32> -> vector<8x288xf32>
    %77 = arith.addf %72, %76 : vector<8x288xf32>
    %c4_53 = arith.constant 4 : index
    %c0_54 = arith.constant 0 : index
    %c0_55 = arith.constant 0 : index
    %78 = vector.load %arg4[%c4_53, %c0_54, %c0_55] : memref<9x8x8xbf16, #tpu.memory_space<vmem>>, vector<1x8x8xbf16>
    %79 = vector.shape_cast %78 : vector<1x8x8xbf16> to vector<8x8xbf16>
    %80 = vector.extract_strided_slice %56 {offsets = [0, 19], sizes = [8, 288], strides = [1, 1]} : vector<8x384xbf16> to vector<8x288xbf16>
    %cst_56 = arith.constant dense<0.000000e+00> : vector<8x288xf32>
    %81 = tpu.matmul %79, %80, %cst_56 {dimension_numbers = #tpu.dot_dimension_numbers<[1], [0], [0], [1], [0, 0, 1, 1], [], []>} : vector<8x8xbf16>, vector<8x288xbf16>, vector<8x288xf32> -> vector<8x288xf32>
    %82 = arith.addf %77, %81 : vector<8x288xf32>
    %c5_57 = arith.constant 5 : index
    %c0_58 = arith.constant 0 : index
    %c0_59 = arith.constant 0 : index
    %83 = vector.load %arg4[%c5_57, %c0_58, %c0_59] : memref<9x8x8xbf16, #tpu.memory_space<vmem>>, vector<1x8x8xbf16>
    %84 = vector.shape_cast %83 : vector<1x8x8xbf16> to vector<8x8xbf16>
    %85 = vector.extract_strided_slice %56 {offsets = [0, 20], sizes = [8, 288], strides = [1, 1]} : vector<8x384xbf16> to vector<8x288xbf16>
    %cst_60 = arith.constant dense<0.000000e+00> : vector<8x288xf32>
    %86 = tpu.matmul %84, %85, %cst_60 {dimension_numbers = #tpu.dot_dimension_numbers<[1], [0], [0], [1], [0, 0, 1, 1], [], []>} : vector<8x8xbf16>, vector<8x288xbf16>, vector<8x288xf32> -> vector<8x288xf32>
    %87 = arith.addf %82, %86 : vector<8x288xf32>
    %c6_61 = arith.constant 6 : index
    %c0_62 = arith.constant 0 : index
    %c0_63 = arith.constant 0 : index
    %88 = vector.load %arg4[%c6_61, %c0_62, %c0_63] : memref<9x8x8xbf16, #tpu.memory_space<vmem>>, vector<1x8x8xbf16>
    %89 = vector.shape_cast %88 : vector<1x8x8xbf16> to vector<8x8xbf16>
    %90 = vector.extract_strided_slice %56 {offsets = [0, 36], sizes = [8, 288], strides = [1, 1]} : vector<8x384xbf16> to vector<8x288xbf16>
    %cst_64 = arith.constant dense<0.000000e+00> : vector<8x288xf32>
    %91 = tpu.matmul %89, %90, %cst_64 {dimension_numbers = #tpu.dot_dimension_numbers<[1], [0], [0], [1], [0, 0, 1, 1], [], []>} : vector<8x8xbf16>, vector<8x288xbf16>, vector<8x288xf32> -> vector<8x288xf32>
    %92 = arith.addf %87, %91 : vector<8x288xf32>
    %c7_65 = arith.constant 7 : index
    %c0_66 = arith.constant 0 : index
    %c0_67 = arith.constant 0 : index
    %93 = vector.load %arg4[%c7_65, %c0_66, %c0_67] : memref<9x8x8xbf16, #tpu.memory_space<vmem>>, vector<1x8x8xbf16>
    %94 = vector.shape_cast %93 : vector<1x8x8xbf16> to vector<8x8xbf16>
    %95 = vector.extract_strided_slice %56 {offsets = [0, 37], sizes = [8, 288], strides = [1, 1]} : vector<8x384xbf16> to vector<8x288xbf16>
    %cst_68 = arith.constant dense<0.000000e+00> : vector<8x288xf32>
    %96 = tpu.matmul %94, %95, %cst_68 {dimension_numbers = #tpu.dot_dimension_numbers<[1], [0], [0], [1], [0, 0, 1, 1], [], []>} : vector<8x8xbf16>, vector<8x288xbf16>, vector<8x288xf32> -> vector<8x288xf32>
    %97 = arith.addf %92, %96 : vector<8x288xf32>
    %c8_69 = arith.constant 8 : index
    %c0_70 = arith.constant 0 : index
    %c0_71 = arith.constant 0 : index
    %98 = vector.load %arg4[%c8_69, %c0_70, %c0_71] : memref<9x8x8xbf16, #tpu.memory_space<vmem>>, vector<1x8x8xbf16>
    %99 = vector.shape_cast %98 : vector<1x8x8xbf16> to vector<8x8xbf16>
    %100 = vector.extract_strided_slice %56 {offsets = [0, 38], sizes = [8, 288], strides = [1, 1]} : vector<8x384xbf16> to vector<8x288xbf16>
    %cst_72 = arith.constant dense<0.000000e+00> : vector<8x288xf32>
    %101 = tpu.matmul %99, %100, %cst_72 {dimension_numbers = #tpu.dot_dimension_numbers<[1], [0], [0], [1], [0, 0, 1, 1], [], []>} : vector<8x8xbf16>, vector<8x288xbf16>, vector<8x288xf32> -> vector<8x288xf32>
    %102 = arith.addf %97, %101 : vector<8x288xf32>
    %c0_73 = arith.constant 0 : index
    %c0_74 = arith.constant 0 : index
    %103 = vector.load %arg5[%c0_73, %c0_74] : memref<8x1xf32, #tpu.memory_space<vmem>>, vector<8x1xf32>
    %104 = vector.broadcast %103 : vector<8x1xf32> to vector<8x288xf32>
    %105 = arith.addf %102, %104 : vector<8x288xf32>
    %106 = vector.extract_strided_slice %1 {offsets = [0, 19], sizes = [8, 288], strides = [1, 1]} : vector<8x384xbf16> to vector<8x288xbf16>
    %c0_75 = arith.constant 0 : index
    %c0_76 = arith.constant 0 : index
    %107 = vector.load %arg8[%c0_75, %c0_76] : memref<8x8xbf16, #tpu.memory_space<vmem>>, vector<8x8xbf16>
    %cst_77 = arith.constant dense<0.000000e+00> : vector<8x288xf32>
    %108 = tpu.matmul %107, %106, %cst_77 {dimension_numbers = #tpu.dot_dimension_numbers<[1], [0], [0], [1], [0, 0, 1, 1], [], []>} : vector<8x8xbf16>, vector<8x288xbf16>, vector<8x288xf32> -> vector<8x288xf32>
    %109 = arith.addf %105, %108 : vector<8x288xf32>
    %c0_78 = arith.constant 0 : index
    %c0_79 = arith.constant 0 : index
    %110 = vector.load %arg7[%c0_78, %c0_79] : memref<288x256xf32, #tpu.memory_space<vmem>>, vector<288x256xf32>
    %cst_80 = arith.constant dense<0.000000e+00> : vector<8x256xf32>
    %111 = tpu.matmul %109, %110, %cst_80 {dimension_numbers = #tpu.dot_dimension_numbers<[1], [0], [0], [1], [0, 0, 1, 1], [], []>} : vector<8x288xf32>, vector<288x256xf32>, vector<8x256xf32> -> vector<8x256xf32>
    %c0_81 = arith.constant 0 : index
    %c0_82 = arith.constant 0 : index
    %c0_83 = arith.constant 0 : index
    %112 = vector.load %arg9[%c0_81, %c0_82, %c0_83] : memref<1x8x256xf32, #tpu.memory_space<vmem>>, vector<1x8x256xf32>
    %113 = vector.shape_cast %112 : vector<1x8x256xf32> to vector<8x256xf32>
    %114 = vector.shape_cast %111 : vector<8x256xf32> to vector<1x8x256xf32>
    tpu.vector_store %arg9[%c0_81, %c0_82, %c0_83], %114 {strides = array<i32>} : memref<1x8x256xf32, #tpu.memory_space<vmem>>, vector<1x8x256xf32>,
    return
  }
  func.func @transform_0(%arg0: i32) -> (i32, i32, i32) {
    %c0_i32 = arith.constant 0 : i32
    %c0_i32_0 = arith.constant 0 : i32
    %c0_i32_1 = arith.constant 0 : i32
    return %arg0, %c0_i32, %c0_i32_0 : i32, i32, i32
  }
  func.func @transform_1(%arg0: i32) -> (i32, i32, i32) {
    %c0_i32 = arith.constant 0 : i32
    %c0_i32_0 = arith.constant 0 : i32
    %c0_i32_1 = arith.constant 0 : i32
    %c0_i32_2 = arith.constant 0 : i32
    return %c0_i32, %c0_i32_0, %c0_i32_1 : i32, i32, i32
  }
  func.func @transform_2(%arg0: i32) -> (i32, i32) {
    %c0_i32 = arith.constant 0 : i32
    %c0_i32_0 = arith.constant 0 : i32
    %c0_i32_1 = arith.constant 0 : i32
    return %c0_i32, %c0_i32_0 : i32, i32
  }
  func.func @transform_3(%arg0: i32) -> (i32, i32, i32) {
    %c0_i32 = arith.constant 0 : i32
    %c0_i32_0 = arith.constant 0 : i32
    %c0_i32_1 = arith.constant 0 : i32
    %c0_i32_2 = arith.constant 0 : i32
    return %c0_i32, %c0_i32_0, %c0_i32_1 : i32, i32, i32
  }
  func.func @transform_4(%arg0: i32) -> (i32, i32) {
    %c0_i32 = arith.constant 0 : i32
    %c0_i32_0 = arith.constant 0 : i32
    %c0_i32_1 = arith.constant 0 : i32
    return %c0_i32, %c0_i32_0 : i32, i32
  }
  func.func @transform_5(%arg0: i32) -> (i32, i32) {
    %c0_i32 = arith.constant 0 : i32
    %c0_i32_0 = arith.constant 0 : i32
    %c0_i32_1 = arith.constant 0 : i32
    return %c0_i32, %c0_i32_0 : i32, i32
  }
  func.func @transform_6(%arg0: i32) -> (i32, i32) {
    %c0_i32 = arith.constant 0 : i32
    %c0_i32_0 = arith.constant 0 : i32
    %c0_i32_1 = arith.constant 0 : i32
    return %c0_i32, %c0_i32_0 : i32, i32
  }
  func.func @transform_7(%arg0: i32) -> (i32, i32) {
    %c0_i32 = arith.constant 0 : i32
    %c0_i32_0 = arith.constant 0 : i32
    %c0_i32_1 = arith.constant 0 : i32
    return %c0_i32, %c0_i32_0 : i32, i32
  }
  func.func @transform_8(%arg0: i32) -> (i32, i32, i32) {
    %c0_i32 = arith.constant 0 : i32
    %c0_i32_0 = arith.constant 0 : i32
    %c0_i32_1 = arith.constant 0 : i32
    return %arg0, %c0_i32, %c0_i32_0 : i32, i32, i32
  }
}

</mosaic_0001>

<llo_original>
// kernel: basic_block_forward.1
$region0: #{basic_block_forward.1}
  #allocation0 [shape = 'u32[]', space=smem, size = 0x4, offset = 0x4, fixed_abs, tag = 'smem constant byte address 0x4 - core index']
  #allocation1 [shape = 'u32[144,128]{1,0:T(1,128)}', space=vmem, size = 0x12000, scoped, tag = 'internal scratch']
  %s0 = inlined_call_operand.vmem [shape: bf16[2,8,384], index: 0, kind: input, shape index: {}]
  %s1 = inlined_call_operand.vmem [shape: bf16[9,8,8], index: 1, kind: input, shape index: {}]
  %s2 = inlined_call_operand.vmem [shape: f32[8,1], index: 2, kind: input, shape index: {}]
  %s3 = inlined_call_operand.vmem [shape: bf16[9,8,8], index: 3, kind: input, shape index: {}]
  %s4 = inlined_call_operand.vmem [shape: f32[8,1], index: 4, kind: input, shape index: {}]
  %s5 = inlined_call_operand.vmem [shape: bf16[288,384], index: 5, kind: input, shape index: {}]
  %s6 = inlined_call_operand.vmem [shape: f32[288,256], index: 6, kind: input, shape index: {}]
  %s7 = inlined_call_operand.vmem [shape: bf16[8,8], index: 7, kind: input, shape index: {}]
  %s8 = inlined_call_operand.vmem [shape: f32[2,8,256], index: 8, kind: output, shape index: {}]
  %s9 = sld [smem:[#allocation0]]
  $region65: #{basic_block_forward.1} parent=0
    _
  %s11 = ssub.s32 1, %s9
  %s12 = scalar_select 0, %s11, %s9
  loop: start=0, step=1, limit=4
  $region2: #{basic_block_forward.1} parent=0 // loop_pre_header
    _
  $region3: #{basic_block_forward.1} parent=0 // loop_header
    %s14 = sphi 0, %s18
    %p15 = scmp.ge.s32.totalorder %s14, 4
    %s24 = sphi 0, %s26
    %s27 = sphi 0, %s24
    %s28 = sphi 0, %s27
    %s44 = sphi 0, %s28
    %s48 = sphi 0, %s48
    %s50 = sphi 0, %s48
    %s51 = sphi 0, %s50
    %s65 = sphi 0, %s51
    %s69 = sphi 0, %s69
    %s71 = sphi 0, %s69
    %s72 = sphi 0, %s71
    %s86 = sphi 0, %s72
    %s90 = sphi 0, %s90
    %s92 = sphi 0, %s90
    %s93 = sphi 0, %s92
    %s107 = sphi 0, %s93
    %s111 = sphi 0, %s111
    %s113 = sphi 0, %s111
    %s114 = sphi 0, %s113
    %s128 = sphi 0, %s114
    %s132 = sphi 0, %s132
    %s134 = sphi 0, %s132
    %s135 = sphi 0, %s134
    %s149 = sphi 0, %s135
    %s153 = sphi 0, %s153
    %s155 = sphi 0, %s153
    %s156 = sphi 0, %s155
    %s170 = sphi 0, %s156
    %s174 = sphi 0, %s174
    %s176 = sphi 0, %s174
    %s177 = sphi 0, %s176
    %s191 = sphi 0, %s177
    %s197 = sphi 0, %s199
    %s200 = sphi 0, %s197
    %s201 = sphi 0, %s200
    %s217 = sphi 0, %s201
  $region4: #{basic_block_forward.1} parent=0 // loop_header_branch
    %17 = sbr.rel (%p15) target = $region8
  $region5: #{basic_block_forward.1} parent=0 // loop_body
    %s19 = ssub.s32 %s14, 1
    %s20 = ssub.s32 %s14, 2
    %s21 = sadd.s32 %s14, 1
    %s22 = ssub.s32 %s14, %s21
    %p23 = scmp.eq.s32.totalorder %s22, 0
    %s25 = sadd.s32 %s24, 1
    %s26 = scalar_select %p23, %s24, %s25
    %p29 = pneg %p23
    %p30 = scmp.eq.s32.totalorder %s14, 1
    %p31 = por %p29, %p30
    %p32 = scmp.ne.s32.totalorder %s24, %s27
    %p33 = scmp.eq.s32.totalorder %s14, 0
    %p34 = por %p32, %p33
    %p35 = scmp.ne.s32.totalorder %s24, %s27
    %p36 = scmp.eq.s32.totalorder %s19, 1
    %p37 = por %p35, %p36
    %p38 = scmp.ne.s32.totalorder %s27, %s28
    %p39 = scmp.eq.s32.totalorder %s19, 0
    %p40 = por %p38, %p39
    %p41 = scmp.ne.s32.totalorder %s27, %s28
    %p42 = scmp.eq.s32.totalorder %s20, 1
    %p43 = por %p41, %p42
    %p45 = scmp.ne.s32.totalorder %s28, %s44
    %p46 = scmp.eq.s32.totalorder %s20, 0
    %p47 = por %p45, %p46
    %s49 = sadd.s32 %s48, 1
    %p52 = scmp.eq.s32.totalorder %s14, 1
    %p53 = scmp.ne.s32.totalorder %s48, %s50
    %p54 = scmp.eq.s32.totalorder %s14, 0
    %p55 = por %p53, %p54
    %p56 = scmp.ne.s32.totalorder %s48, %s50
    %p57 = scmp.eq.s32.totalorder %s19, 1
    %p58 = por %p56, %p57
    %p59 = scmp.ne.s32.totalorder %s50, %s51
    %p60 = scmp.eq.s32.totalorder %s19, 0
    %p61 = por %p59, %p60
    %p62 = scmp.ne.s32.totalorder %s50, %s51
    %p63 = scmp.eq.s32.totalorder %s20, 1
    %p64 = por %p62, %p63
    %p66 = scmp.ne.s32.totalorder %s51, %s65
    %p67 = scmp.eq.s32.totalorder %s20, 0
    %p68 = por %p66, %p67
    %s70 = sadd.s32 %s69, 1
    %p73 = scmp.eq.s32.totalorder %s14, 1
    %p74 = scmp.ne.s32.totalorder %s69, %s71
    %p75 = scmp.eq.s32.totalorder %s14, 0
    %p76 = por %p74, %p75
    %p77 = scmp.ne.s32.totalorder %s69, %s71
    %p78 = scmp.eq.s32.totalorder %s19, 1
    %p79 = por %p77, %p78
    %p80 = scmp.ne.s32.totalorder %s71, %s72
    %p81 = scmp.eq.s32.totalorder %s19, 0
    %p82 = por %p80, %p81
    %p83 = scmp.ne.s32.totalorder %s71, %s72
    %p84 = scmp.eq.s32.totalorder %s20, 1
    %p85 = por %p83, %p84
    %p87 = scmp.ne.s32.totalorder %s72, %s86
    %p88 = scmp.eq.s32.totalorder %s20, 0
    %p89 = por %p87, %p88
    %s91 = sadd.s32 %s90, 1
    %p94 = scmp.eq.s32.totalorder %s14, 1
    %p95 = scmp.ne.s32.totalorder %s90, %s92
    %p96 = scmp.eq.s32.totalorder %s14, 0
    %p97 = por %p95, %p96
    %p98 = scmp.ne.s32.totalorder %s90, %s92
    %p99 = scmp.eq.s32.totalorder %s19, 1
    %p100 = por %p98, %p99
    %p101 = scmp.ne.s32.totalorder %s92, %s93
    %p102 = scmp.eq.s32.totalorder %s19, 0
    %p103 = por %p101, %p102
    %p104 = scmp.ne.s32.totalorder %s92, %s93
    %p105 = scmp.eq.s32.totalorder %s20, 1
    %p106 = por %p104, %p105
    %p108 = scmp.ne.s32.totalorder %s93, %s107
    %p109 = scmp.eq.s32.totalorder %s20, 0
    %p110 = por %p108, %p109
    %s112 = sadd.s32 %s111, 1
    %p115 = scmp.eq.s32.totalorder %s14, 1
    %p116 = scmp.ne.s32.totalorder %s111, %s113
    %p117 = scmp.eq.s32.totalorder %s14, 0
    %p118 = por %p116, %p117
    %p119 = scmp.ne.s32.totalorder %s111, %s113
    %p120 = scmp.eq.s32.totalorder %s19, 1
    %p121 = por %p119, %p120
    %p122 = scmp.ne.s32.totalorder %s113, %s114
    %p123 = scmp.eq.s32.totalorder %s19, 0
    %p124 = por %p122, %p123
    %p125 = scmp.ne.s32.totalorder %s113, %s114
    %p126 = scmp.eq.s32.totalorder %s20, 1
    %p127 = por %p125, %p126
    %p129 = scmp.ne.s32.totalorder %s114, %s128
    %p130 = scmp.eq.s32.totalorder %s20, 0
    %p131 = por %p129, %p130
    %s133 = sadd.s32 %s132, 1
    %p136 = scmp.eq.s32.totalorder %s14, 1
    %p137 = scmp.ne.s32.totalorder %s132, %s134
    %p138 = scmp.eq.s32.totalorder %s14, 0
    %p139 = por %p137, %p138
    %p140 = scmp.ne.s32.totalorder %s132, %s134
    %p141 = scmp.eq.s32.totalorder %s19, 1
    %p142 = por %p140, %p141
    %p143 = scmp.ne.s32.totalorder %s134, %s135
    %p144 = scmp.eq.s32.totalorder %s19, 0
    %p145 = por %p143, %p144
    %p146 = scmp.ne.s32.totalorder %s134, %s135
    %p147 = scmp.eq.s32.totalorder %s20, 1
    %p148 = por %p146, %p147
    %p150 = scmp.ne.s32.totalorder %s135, %s149
    %p151 = scmp.eq.s32.totalorder %s20, 0
    %p152 = por %p150, %p151
    %s154 = sadd.s32 %s153, 1
    %p157 = scmp.eq.s32.totalorder %s14, 1
    %p158 = scmp.ne.s32.totalorder %s153, %s155
    %p159 = scmp.eq.s32.totalorder %s14, 0
    %p160 = por %p158, %p159
    %p161 = scmp.ne.s32.totalorder %s153, %s155
    %p162 = scmp.eq.s32.totalorder %s19, 1
    %p163 = por %p161, %p162
    %p164 = scmp.ne.s32.totalorder %s155, %s156
    %p165 = scmp.eq.s32.totalorder %s19, 0
    %p166 = por %p164, %p165
    %p167 = scmp.ne.s32.totalorder %s155, %s156
    %p168 = scmp.eq.s32.totalorder %s20, 1
    %p169 = por %p167, %p168
    %p171 = scmp.ne.s32.totalorder %s156, %s170
    %p172 = scmp.eq.s32.totalorder %s20, 0
    %p173 = por %p171, %p172
    %s175 = sadd.s32 %s174, 1
    %p178 = scmp.eq.s32.totalorder %s14, 1
    %p179 = scmp.ne.s32.totalorder %s174, %s176
    %p180 = scmp.eq.s32.totalorder %s14, 0
    %p181 = por %p179, %p180
    %p182 = scmp.ne.s32.totalorder %s174, %s176
    %p183 = scmp.eq.s32.totalorder %s19, 1
    %p184 = por %p182, %p183
    %p185 = scmp.ne.s32.totalorder %s176, %s177
    %p186 = scmp.eq.s32.totalorder %s19, 0
    %p187 = por %p185, %p186
    %p188 = scmp.ne.s32.totalorder %s176, %s177
    %p189 = scmp.eq.s32.totalorder %s20, 1
    %p190 = por %p188, %p189
    %p192 = scmp.ne.s32.totalorder %s177, %s191
    %p193 = scmp.eq.s32.totalorder %s20, 0
    %p194 = por %p192, %p193
    %s195 = ssub.s32 %s14, %s21
    %p196 = scmp.eq.s32.totalorder %s195, 0
    %s198 = sadd.s32 %s197, 1
    %s199 = scalar_select %p196, %s197, %s198
    %p202 = pneg %p196
    %p203 = scmp.eq.s32.totalorder %s14, 1
    %p204 = por %p202, %p203
    %p205 = scmp.ne.s32.totalorder %s197, %s200
    %p206 = scmp.eq.s32.totalorder %s14, 0
    %p207 = por %p205, %p206
    %p208 = scmp.ne.s32.totalorder %s197, %s200
    %p209 = scmp.eq.s32.totalorder %s19, 1
    %p210 = por %p208, %p209
    %p211 = scmp.ne.s32.totalorder %s200, %s201
    %p212 = scmp.eq.s32.totalorder %s19, 0
    %p213 = por %p211, %p212
    %p214 = scmp.ne.s32.totalorder %s200, %s201
    %p215 = scmp.eq.s32.totalorder %s20, 1
    %p216 = por %p214, %p215
    %p218 = scmp.ne.s32.totalorder %s201, %s217
    %p219 = scmp.eq.s32.totalorder %s20, 0
    %p220 = por %p218, %p219
    %p221 = scmp.le.s32.totalorder 1, %s14
    %p222 = scmp.lt.s32.totalorder %s14, 3
    %p223 = pnand %p221, %p222
    %p224 = pneg %p223
    // Predicated region
    $region9: #{basic_block_forward.1} parent=5 // pred_check
      _
    $region10: #{basic_block_forward.1} parent=5 // pred_check_branch
      %226 = sbr.rel (%p223) target = $region12
    $region11: #{basic_block_forward.1} parent=5 // pred_region
      %s227 = ssub.s32 %s14, 1
      // Predicated region
      $region13: #{basic_block_forward.1} parent=11 // pred_check
        %p228 = pneg %p61
      $region14: #{basic_block_forward.1} parent=11 // pred_check_branch
        %230 = sbr.rel (%p228) target = $region16
      $region15: #{basic_block_forward.1} parent=11 // pred_region
        _
      $region16: #{basic_block_forward.1} parent=11 // pred_fallthru
        _
      // Predicated region
      $region17: #{basic_block_forward.1} parent=11 // pred_check
        %p231 = pneg %p82
      $region18: #{basic_block_forward.1} parent=11 // pred_check_branch
        %233 = sbr.rel (%p231) target = $region20
      $region19: #{basic_block_forward.1} parent=11 // pred_region
        _
      $region20: #{basic_block_forward.1} parent=11 // pred_fallthru
        _
      // Predicated region
      $region21: #{basic_block_forward.1} parent=11 // pred_check
        %p234 = pneg %p103
      $region22: #{basic_block_forward.1} parent=11 // pred_check_branch
        %236 = sbr.rel (%p234) target = $region24
      $region23: #{basic_block_forward.1} parent=11 // pred_region
        _
      $region24: #{basic_block_forward.1} parent=11 // pred_fallthru
        _
      // Predicated region
      $region25: #{basic_block_forward.1} parent=11 // pred_check
        %p237 = pneg %p124
      $region26: #{basic_block_forward.1} parent=11 // pred_check_branch
        %239 = sbr.rel (%p237) target = $region28
      $region27: #{basic_block_forward.1} parent=11 // pred_region
        _
      $region28: #{basic_block_forward.1} parent=11 // pred_fallthru
        _
      // Predicated region
      $region29: #{basic_block_forward.1} parent=11 // pred_check
        %p240 = pneg %p145
      $region30: #{basic_block_forward.1} parent=11 // pred_check_branch
        %242 = sbr.rel (%p240) target = $region32
      $region31: #{basic_block_forward.1} parent=11 // pred_region
        _
      $region32: #{basic_block_forward.1} parent=11 // pred_fallthru
        _
      // Predicated region
      $region33: #{basic_block_forward.1} parent=11 // pred_check
        %p243 = pneg %p166
      $region34: #{basic_block_forward.1} parent=11 // pred_check_branch
        %245 = sbr.rel (%p243) target = $region36
      $region35: #{basic_block_forward.1} parent=11 // pred_region
        _
      $region36: #{basic_block_forward.1} parent=11 // pred_fallthru
        _
      // Predicated region
      $region37: #{basic_block_forward.1} parent=11 // pred_check
        %p246 = pneg %p187
      $region38: #{basic_block_forward.1} parent=11 // pred_check_branch
        %248 = sbr.rel (%p246) target = $region40
      $region39: #{basic_block_forward.1} parent=11 // pred_region
        _
      $region40: #{basic_block_forward.1} parent=11 // pred_fallthru
        _
    $region12: #{basic_block_forward.1} parent=5 // pred_fallthru
      _
    %p249 = scmp.lt.s32.totalorder %s14, 2
    // Predicated region
    $region41: #{basic_block_forward.1} parent=5 // pred_check
      %p250 = pneg %p249
    $region42: #{basic_block_forward.1} parent=5 // pred_check_branch
      %252 = sbr.rel (%p250) target = $region44
    $region43: #{basic_block_forward.1} parent=5 // pred_region
      // Predicated region
      $region45: #{basic_block_forward.1} parent=43 // pred_check
        %p253 = pneg %p34
      $region46: #{basic_block_forward.1} parent=43 // pred_check_branch
        %255 = sbr.rel (%p253) target = $region48
      $region47: #{basic_block_forward.1} parent=43 // pred_region
        %p256 = scmp.lt.s32.totalorder %s14, 1
        %s257 = scalar_select %p256, %s14, 1
        %s258 = smul.addr %s257, 3
        %s259 = smul.addr %s258, 4
        %s260 = scalar_lea.vmem %s0, %s259
      $region48: #{basic_block_forward.1} parent=43 // pred_fallthru
        _
    $region44: #{basic_block_forward.1} parent=5 // pred_fallthru
      _
    %p261 = scmp.le.s32.totalorder 1, %s14
    %p262 = scmp.lt.s32.totalorder %s14, 3
    %p263 = pnand %p261, %p262
    %p264 = pneg %p263
    // Predicated region
    $region49: #{basic_block_forward.1} parent=5 // pred_check
      _
    $region50: #{basic_block_forward.1} parent=5 // pred_check_branch
      %266 = sbr.rel (%p263) target = $region52
    $region51: #{basic_block_forward.1} parent=5 // pred_region
      %s267 = ssub.s32 %s14, 1
      %p268 = scmp.lt.s32.totalorder %s19, 1
      %s269 = scalar_select %p268, %s19, 1
      %s270 = smul.addr %s269, 3
      %s271 = smul.addr %s270, 4
      %s272 = scalar_lea.vmem %s0, %s271
      %p273 = pneg %p40
      %p274 = pneg %p37
      %p275 = pneg %p61
      %p276 = pneg %p58
      %p277 = pneg %p82
      %p278 = pneg %p79
      %p279 = pneg %p103
      %p280 = pneg %p100
      %p281 = pneg %p124
      %p282 = pneg %p121
      %p283 = pneg %p145
      %p284 = pneg %p142
      %p285 = pneg %p166
      %p286 = pneg %p163
      %p287 = pneg %p187
      %p288 = pneg %p184
      %p289 = pneg %p213
      %p290 = pneg %p210
      %p291 = scmp.lt.s32.totalorder %s19, 1
      %s292 = scalar_select %p291, %s19, 1
      %s293 = smul.addr %s292, 2
      %s294 = smul.addr %s293, 8
      %s295 = scalar_lea.vmem %s8, %s294
      %p296 = scmp.lt.s32.totalorder %s19, 1
      %s297 = scalar_select %p296, %s19, 1
      %s298 = smul.addr %s297, 3
      %s299 = smul.addr %s298, 4
      %s300 = scalar_lea.vmem %s0, %s299
      %p301 = scmp.lt.s32.totalorder %s19, 1
      %s302 = scalar_select %p301, %s19, 1
      %s303 = smul.addr %s302, 2
      %s304 = smul.addr %s303, 8
      %s305 = scalar_lea.vmem %s8, %s304
      %v307 = vld [vmem:[%s300] sm:$0xff]
      %v308 = vld [vmem:[%s300 + $0x8] sm:$0xf]
      %v309 = vld [vmem:[%s1] sm:$0xf]
      %s310 = scalar_lea.vmem %s1, 4
      %v311 = vld [vmem:[%s310] sm:$0xf]
      %v314 = vunpack.c.l.b16 %v307
      %v315 = vunpack.c.h.b16 %v307
      %v316 = vunpack.c.l.b16 %v308
      %v317 = vpack.c.b16 %v314, %v314
      %v318 = vpack.c.b16 %v315, %v315
      %v319 = vpack.c.b16 %v316, %v316
      %320 = vrot.lane.b32.xlu0 %v317, 127
      %v321 = vpop.permute.xlu0 %320
      %322 = vrot.lane.b32.xlu0 %v318, 127
      %v323 = vpop.permute.xlu0 %322
      %324 = vrot.lane.b32.xlu0 %v319, 127
      %v325 = vpop.permute.xlu0 %324
      %vm326 = vcmask 1039360
      %v327 = vsel %vm326, %v321, %v323
      %v328 = vsel %vm326, %v323, %v325
      %vm329 = vcmask 64512
      %v331 = vsel %vm329, %v311, 0
      %vm333 = vcmask 1043456
      %v335 = vsel %vm333, %v327, 0
      %v338 = vsel %vm333, %v328, 0
      %v341 = vsel %vm333, %v325, 0
      %343 = vmatprep.subr.bf16.mxu0 0
      %344 = vmatpush1.bf16.msra.mxu0 0
      %345 = vmatprep.subr.bf16.mxu0 0
      %346 = vmatpush1.bf16.msra.mxu0 0
      %347 = vmatprep.subr.bf16.mxu0 0
      %348 = vmatpush1.bf16.msra.mxu0 0
      %349 = vmatprep.subr.bf16.mxu0 0
      %350 = vmatpush1.bf16.msra.mxu0 0
      %351 = vmatprep.subr.bf16.mxu0 0
      %352 = vmatpush1.bf16.msra.mxu0 0
      %353 = vmatprep.subr.bf16.mxu0 0
      %354 = vmatpush1.bf16.msra.mxu0 0
      %355 = vmatprep.subr.bf16.mxu0 0
      %356 = vmatpush1.bf16.msra.mxu0 0
      %357 = vmatprep.subr.bf16.mxu0 %v338
      %358 = vmatpush1.bf16.msra.mxu0 %v335
      %359 = vmatprep.subr.bf16.mxu0 0
      %360 = vmatpush2.bf16.msra.mxu0 0
      %361 = vmatprep.subr.bf16.mxu0 0
      %362 = vmatpush2.bf16.msra.mxu0 0
      %363 = vmatprep.subr.bf16.mxu0 0
      %364 = vmatpush2.bf16.msra.mxu0 0
      %365 = vmatprep.subr.bf16.mxu0 0
      %366 = vmatpush2.bf16.msra.mxu0 0
      %367 = vmatprep.subr.bf16.mxu0 0
      %368 = vmatpush2.bf16.msra.mxu0 0
      %369 = vmatprep.subr.bf16.mxu0 0
      %370 = vmatpush2.bf16.msra.mxu0 0
      %371 = vmatprep.subr.bf16.mxu0 0
      %372 = vmatpush2.bf16.msra.mxu0 0
      %373 = vmatprep.subr.bf16.mxu0 0
      %374 = vmatpush2.bf16.msra.mxu0 0
      %375 = vmatprep.mubr.bf16.mxu0 0
      %376 = vmatmul.mubr.bf16.gmra.mxu0 %v331
      %v377 = vpop.f32.mrf.mxu0
      %v378 = vadd.f32 0.0, %v377
      %v379 = vpop.f32.mrf.mxu0
      %v380 = vadd.f32 0.0, %v379
      %v381 = vpop.f32.mrf.mxu0
      %v382 = vpop.f32.mrf.mxu0
      %383 = vdwg.mxu0
      %384 = vmatprep.subr.bf16.mxu0 0
      %385 = vmatpush1.bf16.msra.mxu0 0
      %386 = vmatprep.subr.bf16.mxu0 0
      %387 = vmatpush1.bf16.msra.mxu0 0
      %388 = vmatprep.subr.bf16.mxu0 0
      %389 = vmatpush1.bf16.msra.mxu0 0
      %390 = vmatprep.subr.bf16.mxu0 0
      %391 = vmatpush1.bf16.msra.mxu0 0
      %392 = vmatprep.subr.bf16.mxu0 0
      %393 = vmatpush1.bf16.msra.mxu0 0
      %394 = vmatprep.subr.bf16.mxu0 0
      %395 = vmatpush1.bf16.msra.mxu0 0
      %396 = vmatprep.subr.bf16.mxu0 0
      %397 = vmatpush1.bf16.msra.mxu0 0
      %398 = vmatprep.subr.bf16.mxu0 0
      %399 = vmatpush1.bf16.msra.mxu0 %v341
      %400 = vmatprep.subr.bf16.mxu0 0
      %401 = vmatpush2.bf16.msra.mxu0 0
      %402 = vmatprep.subr.bf16.mxu0 0
      %403 = vmatpush2.bf16.msra.mxu0 0
      %404 = vmatprep.subr.bf16.mxu0 0
      %405 = vmatpush2.bf16.msra.mxu0 0
      %406 = vmatprep.subr.bf16.mxu0 0
      %407 = vmatpush2.bf16.msra.mxu0 0
      %408 = vmatprep.subr.bf16.mxu0 0
      %409 = vmatpush2.bf16.msra.mxu0 0
      %410 = vmatprep.subr.bf16.mxu0 0
      %411 = vmatpush2.bf16.msra.mxu0 0
      %412 = vmatprep.subr.bf16.mxu0 0
      %413 = vmatpush2.bf16.msra.mxu0 0
      %414 = vmatprep.subr.bf16.mxu0 0
      %415 = vmatpush2.bf16.msra.mxu0 0
      %416 = vmatprep.mubr.bf16.mxu0 0
      %417 = vmatmul.mubr.bf16.gmra.mxu0 %v331
      %v418 = vpop.f32.mrf.mxu0
      %v419 = vadd.f32 0.0, %v418
      %v420 = vpop.f32.mrf.mxu0
      %v421 = vpop.f32.mrf.mxu0
      %v422 = vpop.f32.mrf.mxu0
      %423 = vdwg.mxu0
      %v425 = vsel %vm329, %v309, 0
      %v428 = vsel %vm333, %v317, 0
      %v431 = vsel %vm333, %v318, 0
      %v434 = vsel %vm333, %v319, 0
      %436 = vmatprep.subr.bf16.mxu0 0
      %437 = vmatpush1.bf16.msra.mxu0 0
      %438 = vmatprep.subr.bf16.mxu0 0
      %439 = vmatpush1.bf16.msra.mxu0 0
      %440 = vmatprep.subr.bf16.mxu0 0
      %441 = vmatpush1.bf16.msra.mxu0 0
      %442 = vmatprep.subr.bf16.mxu0 0
      %443 = vmatpush1.bf16.msra.mxu0 0
      %444 = vmatprep.subr.bf16.mxu0 0
      %445 = vmatpush1.bf16.msra.mxu0 0
      %446 = vmatprep.subr.bf16.mxu0 0
      %447 = vmatpush1.bf16.msra.mxu0 0
      %448 = vmatprep.subr.bf16.mxu0 0
      %449 = vmatpush1.bf16.msra.mxu0 0
      %450 = vmatprep.subr.bf16.mxu0 %v431
      %451 = vmatpush1.bf16.msra.mxu0 %v428
      %452 = vmatprep.subr.bf16.mxu0 0
      %453 = vmatpush2.bf16.msra.mxu0 0
      %454 = vmatprep.subr.bf16.mxu0 0
      %455 = vmatpush2.bf16.msra.mxu0 0
      %456 = vmatprep.subr.bf16.mxu0 0
      %457 = vmatpush2.bf16.msra.mxu0 0
      %458 = vmatprep.subr.bf16.mxu0 0
      %459 = vmatpush2.bf16.msra.mxu0 0
      %460 = vmatprep.subr.bf16.mxu0 0
      %461 = vmatpush2.bf16.msra.mxu0 0
      %462 = vmatprep.subr.bf16.mxu0 0
      %463 = vmatpush2.bf16.msra.mxu0 0
      %464 = vmatprep.subr.bf16.mxu0 0
      %465 = vmatpush2.bf16.msra.mxu0 0
      %466 = vmatprep.subr.bf16.mxu0 0
      %467 = vmatpush2.bf16.msra.mxu0 0
      %468 = vmatprep.mubr.bf16.mxu0 0
      %469 = vmatmul.mubr.bf16.gmra.mxu0 %v425
      %v470 = vpop.f32.mrf.mxu0
      %v471 = vadd.f32 %v378, %v470
      %v472 = vpop.f32.mrf.mxu0
      %v473 = vadd.f32 %v380, %v472
      %v474 = vpop.f32.mrf.mxu0
      %v475 = vpop.f32.mrf.mxu0
      %476 = vdwg.mxu0
      %477 = vmatprep.subr.bf16.mxu0 0
      %478 = vmatpush1.bf16.msra.mxu0 0
      %479 = vmatprep.subr.bf16.mxu0 0
      %480 = vmatpush1.bf16.msra.mxu0 0
      %481 = vmatprep.subr.bf16.mxu0 0
      %482 = vmatpush1.bf16.msra.mxu0 0
      %483 = vmatprep.subr.bf16.mxu0 0
      %484 = vmatpush1.bf16.msra.mxu0 0
      %485 = vmatprep.subr.bf16.mxu0 0
      %486 = vmatpush1.bf16.msra.mxu0 0
      %487 = vmatprep.subr.bf16.mxu0 0
      %488 = vmatpush1.bf16.msra.mxu0 0
      %489 = vmatprep.subr.bf16.mxu0 0
      %490 = vmatpush1.bf16.msra.mxu0 0
      %491 = vmatprep.subr.bf16.mxu0 0
      %492 = vmatpush1.bf16.msra.mxu0 %v434
      %493 = vmatprep.subr.bf16.mxu0 0
      %494 = vmatpush2.bf16.msra.mxu0 0
      %495 = vmatprep.subr.bf16.mxu0 0
      %496 = vmatpush2.bf16.msra.mxu0 0
      %497 = vmatprep.subr.bf16.mxu0 0
      %498 = vmatpush2.bf16.msra.mxu0 0
      %499 = vmatprep.subr.bf16.mxu0 0
      %500 = vmatpush2.bf16.msra.mxu0 0
      %501 = vmatprep.subr.bf16.mxu0 0
      %502 = vmatpush2.bf16.msra.mxu0 0
      %503 = vmatprep.subr.bf16.mxu0 0
      %504 = vmatpush2.bf16.msra.mxu0 0
      %505 = vmatprep.subr.bf16.mxu0 0
      %506 = vmatpush2.bf16.msra.mxu0 0
      %507 = vmatprep.subr.bf16.mxu0 0
      %508 = vmatpush2.bf16.msra.mxu0 0
      %509 = vmatprep.mubr.bf16.mxu0 0
      %510 = vmatmul.mubr.bf16.gmra.mxu0 %v425
      %v511 = vpop.f32.mrf.mxu0
      %v512 = vadd.f32 %v419, %v511
      %v513 = vpop.f32.mrf.mxu0
      %v514 = vpop.f32.mrf.mxu0
      %v515 = vpop.f32.mrf.mxu0
      %516 = vdwg.mxu0
      %s517 = scalar_lea.vmem %s1, 8
      %v518 = vld [vmem:[%s517] sm:$0xf]
      %519 = vrot.lane.b32.xlu0 %v317, 126
      %v520 = vpop.permute.xlu0 %519
      %521 = vrot.lane.b32.xlu0 %v318, 126
      %v522 = vpop.permute.xlu0 %521
      %523 = vrot.lane.b32.xlu0 %v319, 126
      %v524 = vpop.permute.xlu0 %523
      %vm525 = vcmask 1031168
      %v526 = vsel %vm525, %v520, %v522
      %v527 = vsel %vm525, %v522, %v524
      %v529 = vsel %vm329, %v518, 0
      %v532 = vsel %vm333, %v526, 0
      %v535 = vsel %vm333, %v527, 0
      %v538 = vsel %vm333, %v524, 0
      %540 = vmatprep.subr.bf16.mxu0 0
      %541 = vmatpush1.bf16.msra.mxu0 0
      %542 = vmatprep.subr.bf16.mxu0 0
      %543 = vmatpush1.bf16.msra.mxu0 0
      %544 = vmatprep.subr.bf16.mxu0 0
      %545 = vmatpush1.bf16.msra.mxu0 0
      %546 = vmatprep.subr.bf16.mxu0 0
      %547 = vmatpush1.bf16.msra.mxu0 0
      %548 = vmatprep.subr.bf16.mxu0 0
      %549 = vmatpush1.bf16.msra.mxu0 0
      %550 = vmatprep.subr.bf16.mxu0 0
      %551 = vmatpush1.bf16.msra.mxu0 0
      %552 = vmatprep.subr.bf16.mxu0 0
      %553 = vmatpush1.bf16.msra.mxu0 0
      %554 = vmatprep.subr.bf16.mxu0 %v535
      %555 = vmatpush1.bf16.msra.mxu0 %v532
      %556 = vmatprep.subr.bf16.mxu0 0
      %557 = vmatpush2.bf16.msra.mxu0 0
      %558 = vmatprep.subr.bf16.mxu0 0
      %559 = vmatpush2.bf16.msra.mxu0 0
      %560 = vmatprep.subr.bf16.mxu0 0
      %561 = vmatpush2.bf16.msra.mxu0 0
      %562 = vmatprep.subr.bf16.mxu0 0
      %563 = vmatpush2.bf16.msra.mxu0 0
      %564 = vmatprep.subr.bf16.mxu0 0
      %565 = vmatpush2.bf16.msra.mxu0 0
      %566 = vmatprep.subr.bf16.mxu0 0
      %567 = vmatpush2.bf16.msra.mxu0 0
      %568 = vmatprep.subr.bf16.mxu0 0
      %569 = vmatpush2.bf16.msra.mxu0 0
      %570 = vmatprep.subr.bf16.mxu0 0
      %571 = vmatpush2.bf16.msra.mxu0 0
      %572 = vmatprep.mubr.bf16.mxu0 0
      %573 = vmatmul.mubr.bf16.gmra.mxu0 %v529
      %v574 = vpop.f32.mrf.mxu0
      %v575 = vadd.f32 0.0, %v574
      %v576 = vpop.f32.mrf.mxu0
      %v577 = vadd.f32 0.0, %v576
      %v578 = vpop.f32.mrf.mxu0
      %v579 = vpop.f32.mrf.mxu0
      %580 = vdwg.mxu0
      %581 = vmatprep.subr.bf16.mxu0 0
      %582 = vmatpush1.bf16.msra.mxu0 0
      %583 = vmatprep.subr.bf16.mxu0 0
      %584 = vmatpush1.bf16.msra.mxu0 0
      %585 = vmatprep.subr.bf16.mxu0 0
      %586 = vmatpush1.bf16.msra.mxu0 0
      %587 = vmatprep.subr.bf16.mxu0 0
      %588 = vmatpush1.bf16.msra.mxu0 0
      %589 = vmatprep.subr.bf16.mxu0 0
      %590 = vmatpush1.bf16.msra.mxu0 0
      %591 = vmatprep.subr.bf16.mxu0 0
      %592 = vmatpush1.bf16.msra.mxu0 0
      %593 = vmatprep.subr.bf16.mxu0 0
      %594 = vmatpush1.bf16.msra.mxu0 0
      %595 = vmatprep.subr.bf16.mxu0 0
      %596 = vmatpush1.bf16.msra.mxu0 %v538
      %597 = vmatprep.subr.bf16.mxu0 0
      %598 = vmatpush2.bf16.msra.mxu0 0
      %599 = vmatprep.subr.bf16.mxu0 0
      %600 = vmatpush2.bf16.msra.mxu0 0
      %601 = vmatprep.subr.bf16.mxu0 0
      %602 = vmatpush2.bf16.msra.mxu0 0
      %603 = vmatprep.subr.bf16.mxu0 0
      %604 = vmatpush2.bf16.msra.mxu0 0
      %605 = vmatprep.subr.bf16.mxu0 0
      %606 = vmatpush2.bf16.msra.mxu0 0
      %607 = vmatprep.subr.bf16.mxu0 0
      %608 = vmatpush2.bf16.msra.mxu0 0
      %609 = vmatprep.subr.bf16.mxu0 0
      %610 = vmatpush2.bf16.msra.mxu0 0
      %611 = vmatprep.subr.bf16.mxu0 0
      %612 = vmatpush2.bf16.msra.mxu0 0
      %613 = vmatprep.mubr.bf16.mxu0 0
      %614 = vmatmul.mubr.bf16.gmra.mxu0 %v529
      %v615 = vpop.f32.mrf.mxu0
      %v616 = vadd.f32 0.0, %v615
      %v617 = vpop.f32.mrf.mxu0
      %v618 = vpop.f32.mrf.mxu0
      %v619 = vpop.f32.mrf.mxu0
      %620 = vdwg.mxu0
      %v621 = vadd.f32 %v471, %v575
      %v622 = vadd.f32 %v473, %v577
      %v623 = vadd.f32 %v512, %v616
      %s624 = scalar_lea.vmem %s1, 12
      %v625 = vld [vmem:[%s624] sm:$0xf]
      %626 = vrot.lane.b32.xlu0 %v317, 110
      %v627 = vpop.permute.xlu0 %626
      %628 = vrot.lane.b32.xlu0 %v318, 110
      %v629 = vpop.permute.xlu0 %628
      %630 = vrot.lane.b32.xlu0 %v319, 110
      %v631 = vpop.permute.xlu0 %630
      %vm632 = vcmask 900096
      %v633 = vsel %vm632, %v627, %v629
      %v634 = vsel %vm632, %v629, %v631
      %v636 = vsel %vm329, %v625, 0
      %v639 = vsel %vm333, %v633, 0
      %v642 = vsel %vm333, %v634, 0
      %v645 = vsel %vm333, %v631, 0
      %647 = vmatprep.subr.bf16.mxu0 0
      %648 = vmatpush1.bf16.msra.mxu0 0
      %649 = vmatprep.subr.bf16.mxu0 0
      %650 = vmatpush1.bf16.msra.mxu0 0
      %651 = vmatprep.subr.bf16.mxu0 0
      %652 = vmatpush1.bf16.msra.mxu0 0
      %653 = vmatprep.subr.bf16.mxu0 0
      %654 = vmatpush1.bf16.msra.mxu0 0
      %655 = vmatprep.subr.bf16.mxu0 0
      %656 = vmatpush1.bf16.msra.mxu0 0
      %657 = vmatprep.subr.bf16.mxu0 0
      %658 = vmatpush1.bf16.msra.mxu0 0
      %659 = vmatprep.subr.bf16.mxu0 0
      %660 = vmatpush1.bf16.msra.mxu0 0
      %661 = vmatprep.subr.bf16.mxu0 %v642
      %662 = vmatpush1.bf16.msra.mxu0 %v639
      %663 = vmatprep.subr.bf16.mxu0 0
      %664 = vmatpush2.bf16.msra.mxu0 0
      %665 = vmatprep.subr.bf16.mxu0 0
      %666 = vmatpush2.bf16.msra.mxu0 0
      %667 = vmatprep.subr.bf16.mxu0 0
      %668 = vmatpush2.bf16.msra.mxu0 0
      %669 = vmatprep.subr.bf16.mxu0 0
      %670 = vmatpush2.bf16.msra.mxu0 0
      %671 = vmatprep.subr.bf16.mxu0 0
      %672 = vmatpush2.bf16.msra.mxu0 0
      %673 = vmatprep.subr.bf16.mxu0 0
      %674 = vmatpush2.bf16.msra.mxu0 0
      %675 = vmatprep.subr.bf16.mxu0 0
      %676 = vmatpush2.bf16.msra.mxu0 0
      %677 = vmatprep.subr.bf16.mxu0 0
      %678 = vmatpush2.bf16.msra.mxu0 0
      %679 = vmatprep.mubr.bf16.mxu0 0
      %680 = vmatmul.mubr.bf16.gmra.mxu0 %v636
      %v681 = vpop.f32.mrf.mxu0
      %v682 = vadd.f32 0.0, %v681
      %v683 = vpop.f32.mrf.mxu0
      %v684 = vadd.f32 0.0, %v683
      %v685 = vpop.f32.mrf.mxu0
      %v686 = vpop.f32.mrf.mxu0
      %687 = vdwg.mxu0
      %688 = vmatprep.subr.bf16.mxu0 0
      %689 = vmatpush1.bf16.msra.mxu0 0
      %690 = vmatprep.subr.bf16.mxu0 0
      %691 = vmatpush1.bf16.msra.mxu0 0
      %692 = vmatprep.subr.bf16.mxu0 0
      %693 = vmatpush1.bf16.msra.mxu0 0
      %694 = vmatprep.subr.bf16.mxu0 0
      %695 = vmatpush1.bf16.msra.mxu0 0
      %696 = vmatprep.subr.bf16.mxu0 0
      %697 = vmatpush1.bf16.msra.mxu0 0
      %698 = vmatprep.subr.bf16.mxu0 0
      %699 = vmatpush1.bf16.msra.mxu0 0
      %700 = vmatprep.subr.bf16.mxu0 0
      %701 = vmatpush1.bf16.msra.mxu0 0
      %702 = vmatprep.subr.bf16.mxu0 0
      %703 = vmatpush1.bf16.msra.mxu0 %v645
      %704 = vmatprep.subr.bf16.mxu0 0
      %705 = vmatpush2.bf16.msra.mxu0 0
      %706 = vmatprep.subr.bf16.mxu0 0
      %707 = vmatpush2.bf16.msra.mxu0 0
      %708 = vmatprep.subr.bf16.mxu0 0
      %709 = vmatpush2.bf16.msra.mxu0 0
      %710 = vmatprep.subr.bf16.mxu0 0
      %711 = vmatpush2.bf16.msra.mxu0 0
      %712 = vmatprep.subr.bf16.mxu0 0
      %713 = vmatpush2.bf16.msra.mxu0 0
      %714 = vmatprep.subr.bf16.mxu0 0
      %715 = vmatpush2.bf16.msra.mxu0 0
      %716 = vmatprep.subr.bf16.mxu0 0
      %717 = vmatpush2.bf16.msra.mxu0 0
      %718 = vmatprep.subr.bf16.mxu0 0
      %719 = vmatpush2.bf16.msra.mxu0 0
      %720 = vmatprep.mubr.bf16.mxu0 0
      %721 = vmatmul.mubr.bf16.gmra.mxu0 %v636
      %v722 = vpop.f32.mrf.mxu0
      %v723 = vadd.f32 0.0, %v722
      %v724 = vpop.f32.mrf.mxu0
      %v725 = vpop.f32.mrf.mxu0
      %v726 = vpop.f32.mrf.mxu0
      %727 = vdwg.mxu0
      %v728 = vadd.f32 %v621, %v682
      %v729 = vadd.f32 %v622, %v684
      %v730 = vadd.f32 %v623, %v723
      %s731 = scalar_lea.vmem %s1, 16
      %v732 = vld [vmem:[%s731] sm:$0xf]
      %733 = vrot.lane.b32.xlu0 %v317, 109
      %v734 = vpop.permute.xlu0 %733
      %735 = vrot.lane.b32.xlu0 %v318, 109
      %v736 = vpop.permute.xlu0 %735
      %737 = vrot.lane.b32.xlu0 %v319, 109
      %v738 = vpop.permute.xlu0 %737
      %vm739 = vcmask 891904
      %v740 = vsel %vm739, %v734, %v736
      %v741 = vsel %vm739, %v736, %v738
      %v743 = vsel %vm329, %v732, 0
      %v746 = vsel %vm333, %v740, 0
      %v749 = vsel %vm333, %v741, 0
      %v752 = vsel %vm333, %v738, 0
      %754 = vmatprep.subr.bf16.mxu0 0
      %755 = vmatpush1.bf16.msra.mxu0 0
      %756 = vmatprep.subr.bf16.mxu0 0
      %757 = vmatpush1.bf16.msra.mxu0 0
      %758 = vmatprep.subr.bf16.mxu0 0
      %759 = vmatpush1.bf16.msra.mxu0 0
      %760 = vmatprep.subr.bf16.mxu0 0
      %761 = vmatpush1.bf16.msra.mxu0 0
      %762 = vmatprep.subr.bf16.mxu0 0
      %763 = vmatpush1.bf16.msra.mxu0 0
      %764 = vmatprep.subr.bf16.mxu0 0
      %765 = vmatpush1.bf16.msra.mxu0 0
      %766 = vmatprep.subr.bf16.mxu0 0
      %767 = vmatpush1.bf16.msra.mxu0 0
      %768 = vmatprep.subr.bf16.mxu0 %v749
      %769 = vmatpush1.bf16.msra.mxu0 %v746
      %770 = vmatprep.subr.bf16.mxu0 0
      %771 = vmatpush2.bf16.msra.mxu0 0
      %772 = vmatprep.subr.bf16.mxu0 0
      %773 = vmatpush2.bf16.msra.mxu0 0
      %774 = vmatprep.subr.bf16.mxu0 0
      %775 = vmatpush2.bf16.msra.mxu0 0
      %776 = vmatprep.subr.bf16.mxu0 0
      %777 = vmatpush2.bf16.msra.mxu0 0
      %778 = vmatprep.subr.bf16.mxu0 0
      %779 = vmatpush2.bf16.msra.mxu0 0
      %780 = vmatprep.subr.bf16.mxu0 0
      %781 = vmatpush2.bf16.msra.mxu0 0
      %782 = vmatprep.subr.bf16.mxu0 0
      %783 = vmatpush2.bf16.msra.mxu0 0
      %784 = vmatprep.subr.bf16.mxu0 0
      %785 = vmatpush2.bf16.msra.mxu0 0
      %786 = vmatprep.mubr.bf16.mxu0 0
      %787 = vmatmul.mubr.bf16.gmra.mxu0 %v743
      %v788 = vpop.f32.mrf.mxu0
      %v789 = vadd.f32 0.0, %v788
      %v790 = vpop.f32.mrf.mxu0
      %v791 = vadd.f32 0.0, %v790
      %v792 = vpop.f32.mrf.mxu0
      %v793 = vpop.f32.mrf.mxu0
      %794 = vdwg.mxu0
      %795 = vmatprep.subr.bf16.mxu0 0
      %796 = vmatpush1.bf16.msra.mxu0 0
      %797 = vmatprep.subr.bf16.mxu0 0
      %798 = vmatpush1.bf16.msra.mxu0 0
      %799 = vmatprep.subr.bf16.mxu0 0
      %800 = vmatpush1.bf16.msra.mxu0 0
      %801 = vmatprep.subr.bf16.mxu0 0
      %802 = vmatpush1.bf16.msra.mxu0 0
      %803 = vmatprep.subr.bf16.mxu0 0
      %804 = vmatpush1.bf16.msra.mxu0 0
      %805 = vmatprep.subr.bf16.mxu0 0
      %806 = vmatpush1.bf16.msra.mxu0 0
      %807 = vmatprep.subr.bf16.mxu0 0
      %808 = vmatpush1.bf16.msra.mxu0 0
      %809 = vmatprep.subr.bf16.mxu0 0
      %810 = vmatpush1.bf16.msra.mxu0 %v752
      %811 = vmatprep.subr.bf16.mxu0 0
      %812 = vmatpush2.bf16.msra.mxu0 0
      %813 = vmatprep.subr.bf16.mxu0 0
      %814 = vmatpush2.bf16.msra.mxu0 0
      %815 = vmatprep.subr.bf16.mxu0 0
      %816 = vmatpush2.bf16.msra.mxu0 0
      %817 = vmatprep.subr.bf16.mxu0 0
      %818 = vmatpush2.bf16.msra.mxu0 0
      %819 = vmatprep.subr.bf16.mxu0 0
      %820 = vmatpush2.bf16.msra.mxu0 0
      %821 = vmatprep.subr.bf16.mxu0 0
      %822 = vmatpush2.bf16.msra.mxu0 0
      %823 = vmatprep.subr.bf16.mxu0 0
      %824 = vmatpush2.bf16.msra.mxu0 0
      %825 = vmatprep.subr.bf16.mxu0 0
      %826 = vmatpush2.bf16.msra.mxu0 0
      %827 = vmatprep.mubr.bf16.mxu0 0
      %828 = vmatmul.mubr.bf16.gmra.mxu0 %v743
      %v829 = vpop.f32.mrf.mxu0
      %v830 = vadd.f32 0.0, %v829
      %v831 = vpop.f32.mrf.mxu0
      %v832 = vpop.f32.mrf.mxu0
      %v833 = vpop.f32.mrf.mxu0
      %834 = vdwg.mxu0
      %v835 = vadd.f32 %v728, %v789
      %v836 = vadd.f32 %v729, %v791
      %v837 = vadd.f32 %v730, %v830
      %s838 = scalar_lea.vmem %s1, 20
      %v839 = vld [vmem:[%s838] sm:$0xf]
      %840 = vrot.lane.b32.xlu0 %v317, 108
      %v841 = vpop.permute.xlu0 %840
      %842 = vrot.lane.b32.xlu0 %v318, 108
      %v843 = vpop.permute.xlu0 %842
      %844 = vrot.lane.b32.xlu0 %v319, 108
      %v845 = vpop.permute.xlu0 %844
      %vm846 = vcmask 883712
      %v847 = vsel %vm846, %v841, %v843
      %v848 = vsel %vm846, %v843, %v845
      %v850 = vsel %vm329, %v839, 0
      %v853 = vsel %vm333, %v847, 0
      %v856 = vsel %vm333, %v848, 0
      %v859 = vsel %vm333, %v845, 0
      %861 = vmatprep.subr.bf16.mxu0 0
      %862 = vmatpush1.bf16.msra.mxu0 0
      %863 = vmatprep.subr.bf16.mxu0 0
      %864 = vmatpush1.bf16.msra.mxu0 0
      %865 = vmatprep.subr.bf16.mxu0 0
      %866 = vmatpush1.bf16.msra.mxu0 0
      %867 = vmatprep.subr.bf16.mxu0 0
      %868 = vmatpush1.bf16.msra.mxu0 0
      %869 = vmatprep.subr.bf16.mxu0 0
      %870 = vmatpush1.bf16.msra.mxu0 0
      %871 = vmatprep.subr.bf16.mxu0 0
      %872 = vmatpush1.bf16.msra.mxu0 0
      %873 = vmatprep.subr.bf16.mxu0 0
      %874 = vmatpush1.bf16.msra.mxu0 0
      %875 = vmatprep.subr.bf16.mxu0 %v856
      %876 = vmatpush1.bf16.msra.mxu0 %v853
      %877 = vmatprep.subr.bf16.mxu0 0
      %878 = vmatpush2.bf16.msra.mxu0 0
      %879 = vmatprep.subr.bf16.mxu0 0
      %880 = vmatpush2.bf16.msra.mxu0 0
      %881 = vmatprep.subr.bf16.mxu0 0
      %882 = vmatpush2.bf16.msra.mxu0 0
      %883 = vmatprep.subr.bf16.mxu0 0
      %884 = vmatpush2.bf16.msra.mxu0 0
      %885 = vmatprep.subr.bf16.mxu0 0
      %886 = vmatpush2.bf16.msra.mxu0 0
      %887 = vmatprep.subr.bf16.mxu0 0
      %888 = vmatpush2.bf16.msra.mxu0 0
      %889 = vmatprep.subr.bf16.mxu0 0
      %890 = vmatpush2.bf16.msra.mxu0 0
      %891 = vmatprep.subr.bf16.mxu0 0
      %892 = vmatpush2.bf16.msra.mxu0 0
      %893 = vmatprep.mubr.bf16.mxu0 0
      %894 = vmatmul.mubr.bf16.gmra.mxu0 %v850
      %v895 = vpop.f32.mrf.mxu0
      %v896 = vadd.f32 0.0, %v895
      %v897 = vpop.f32.mrf.mxu0
      %v898 = vadd.f32 0.0, %v897
      %v899 = vpop.f32.mrf.mxu0
      %v900 = vpop.f32.mrf.mxu0
      %901 = vdwg.mxu0
      %902 = vmatprep.subr.bf16.mxu0 0
      %903 = vmatpush1.bf16.msra.mxu0 0
      %904 = vmatprep.subr.bf16.mxu0 0
      %905 = vmatpush1.bf16.msra.mxu0 0
      %906 = vmatprep.subr.bf16.mxu0 0
      %907 = vmatpush1.bf16.msra.mxu0 0
      %908 = vmatprep.subr.bf16.mxu0 0
      %909 = vmatpush1.bf16.msra.mxu0 0
      %910 = vmatprep.subr.bf16.mxu0 0
      %911 = vmatpush1.bf16.msra.mxu0 0
      %912 = vmatprep.subr.bf16.mxu0 0
      %913 = vmatpush1.bf16.msra.mxu0 0
      %914 = vmatprep.subr.bf16.mxu0 0
      %915 = vmatpush1.bf16.msra.mxu0 0
      %916 = vmatprep.subr.bf16.mxu0 0
      %917 = vmatpush1.bf16.msra.mxu0 %v859
      %918 = vmatprep.subr.bf16.mxu0 0
      %919 = vmatpush2.bf16.msra.mxu0 0
      %920 = vmatprep.subr.bf16.mxu0 0
      %921 = vmatpush2.bf16.msra.mxu0 0
      %922 = vmatprep.subr.bf16.mxu0 0
      %923 = vmatpush2.bf16.msra.mxu0 0
      %924 = vmatprep.subr.bf16.mxu0 0
      %925 = vmatpush2.bf16.msra.mxu0 0
      %926 = vmatprep.subr.bf16.mxu0 0
      %927 = vmatpush2.bf16.msra.mxu0 0
      %928 = vmatprep.subr.bf16.mxu0 0
      %929 = vmatpush2.bf16.msra.mxu0 0
      %930 = vmatprep.subr.bf16.mxu0 0
      %931 = vmatpush2.bf16.msra.mxu0 0
      %932 = vmatprep.subr.bf16.mxu0 0
      %933 = vmatpush2.bf16.msra.mxu0 0
      %934 = vmatprep.mubr.bf16.mxu0 0
      %935 = vmatmul.mubr.bf16.gmra.mxu0 %v850
      %v936 = vpop.f32.mrf.mxu0
      %v937 = vadd.f32 0.0, %v936
      %v938 = vpop.f32.mrf.mxu0
      %v939 = vpop.f32.mrf.mxu0
      %v940 = vpop.f32.mrf.mxu0
      %941 = vdwg.mxu0
      %v942 = vadd.f32 %v835, %v896
      %v943 = vadd.f32 %v836, %v898
      %v944 = vadd.f32 %v837, %v937
      %s945 = scalar_lea.vmem %s1, 24
      %v946 = vld [vmem:[%s945] sm:$0xf]
      %947 = vrot.lane.b32.xlu0 %v317, 92
      %v948 = vpop.permute.xlu0 %947
      %949 = vrot.lane.b32.xlu0 %v318, 92
      %v950 = vpop.permute.xlu0 %949
      %951 = vrot.lane.b32.xlu0 %v319, 92
      %v952 = vpop.permute.xlu0 %951
      %vm953 = vcmask 752640
      %v954 = vsel %vm953, %v948, %v950
      %v955 = vsel %vm953, %v950, %v952
      %v957 = vsel %vm329, %v946, 0
      %v960 = vsel %vm333, %v954, 0
      %v963 = vsel %vm333, %v955, 0
      %v966 = vsel %vm333, %v952, 0
      %968 = vmatprep.subr.bf16.mxu0 0
      %969 = vmatpush1.bf16.msra.mxu0 0
      %970 = vmatprep.subr.bf16.mxu0 0
      %971 = vmatpush1.bf16.msra.mxu0 0
      %972 = vmatprep.subr.bf16.mxu0 0
      %973 = vmatpush1.bf16.msra.mxu0 0
      %974 = vmatprep.subr.bf16.mxu0 0
      %975 = vmatpush1.bf16.msra.mxu0 0
      %976 = vmatprep.subr.bf16.mxu0 0
      %977 = vmatpush1.bf16.msra.mxu0 0
      %978 = vmatprep.subr.bf16.mxu0 0
      %979 = vmatpush1.bf16.msra.mxu0 0
      %980 = vmatprep.subr.bf16.mxu0 0
      %981 = vmatpush1.bf16.msra.mxu0 0
      %982 = vmatprep.subr.bf16.mxu0 %v963
      %983 = vmatpush1.bf16.msra.mxu0 %v960
      %984 = vmatprep.subr.bf16.mxu0 0
      %985 = vmatpush2.bf16.msra.mxu0 0
      %986 = vmatprep.subr.bf16.mxu0 0
      %987 = vmatpush2.bf16.msra.mxu0 0
      %988 = vmatprep.subr.bf16.mxu0 0
      %989 = vmatpush2.bf16.msra.mxu0 0
      %990 = vmatprep.subr.bf16.mxu0 0
      %991 = vmatpush2.bf16.msra.mxu0 0
      %992 = vmatprep.subr.bf16.mxu0 0
      %993 = vmatpush2.bf16.msra.mxu0 0
      %994 = vmatprep.subr.bf16.mxu0 0
      %995 = vmatpush2.bf16.msra.mxu0 0
      %996 = vmatprep.subr.bf16.mxu0 0
      %997 = vmatpush2.bf16.msra.mxu0 0
      %998 = vmatprep.subr.bf16.mxu0 0
      %999 = vmatpush2.bf16.msra.mxu0 0
      %1000 = vmatprep.mubr.bf16.mxu0 0
      %1001 = vmatmul.mubr.bf16.gmra.mxu0 %v957
      %v1002 = vpop.f32.mrf.mxu0
      %v1003 = vadd.f32 0.0, %v1002
      %v1004 = vpop.f32.mrf.mxu0
      %v1005 = vadd.f32 0.0, %v1004
      %v1006 = vpop.f32.mrf.mxu0
      %v1007 = vpop.f32.mrf.mxu0
      %1008 = vdwg.mxu0
      %1009 = vmatprep.subr.bf16.mxu0 0
      %1010 = vmatpush1.bf16.msra.mxu0 0
      %1011 = vmatprep.subr.bf16.mxu0 0
      %1012 = vmatpush1.bf16.msra.mxu0 0
      %1013 = vmatprep.subr.bf16.mxu0 0
      %1014 = vmatpush1.bf16.msra.mxu0 0
      %1015 = vmatprep.subr.bf16.mxu0 0
      %1016 = vmatpush1.bf16.msra.mxu0 0
      %1017 = vmatprep.subr.bf16.mxu0 0
      %1018 = vmatpush1.bf16.msra.mxu0 0
      %1019 = vmatprep.subr.bf16.mxu0 0
      %1020 = vmatpush1.bf16.msra.mxu0 0
      %1021 = vmatprep.subr.bf16.mxu0 0
      %1022 = vmatpush1.bf16.msra.mxu0 0
      %1023 = vmatprep.subr.bf16.mxu0 0
      %1024 = vmatpush1.bf16.msra.mxu0 %v966
      %1025 = vmatprep.subr.bf16.mxu0 0
      %1026 = vmatpush2.bf16.msra.mxu0 0
      %1027 = vmatprep.subr.bf16.mxu0 0
      %1028 = vmatpush2.bf16.msra.mxu0 0
      %1029 = vmatprep.subr.bf16.mxu0 0
      %1030 = vmatpush2.bf16.msra.mxu0 0
      %1031 = vmatprep.subr.bf16.mxu0 0
      %1032 = vmatpush2.bf16.msra.mxu0 0
      %1033 = vmatprep.subr.bf16.mxu0 0
      %1034 = vmatpush2.bf16.msra.mxu0 0
      %1035 = vmatprep.subr.bf16.mxu0 0
      %1036 = vmatpush2.bf16.msra.mxu0 0
      %1037 = vmatprep.subr.bf16.mxu0 0
      %1038 = vmatpush2.bf16.msra.mxu0 0
      %1039 = vmatprep.subr.bf16.mxu0 0
      %1040 = vmatpush2.bf16.msra.mxu0 0
      %1041 = vmatprep.mubr.bf16.mxu0 0
      %1042 = vmatmul.mubr.bf16.gmra.mxu0 %v957
      %v1043 = vpop.f32.mrf.mxu0
      %v1044 = vadd.f32 0.0, %v1043
      %v1045 = vpop.f32.mrf.mxu0
      %v1046 = vpop.f32.mrf.mxu0
      %v1047 = vpop.f32.mrf.mxu0
      %1048 = vdwg.mxu0
      %v1049 = vadd.f32 %v942, %v1003
      %v1050 = vadd.f32 %v943, %v1005
      %v1051 = vadd.f32 %v944, %v1044
      %s1052 = scalar_lea.vmem %s1, 28
      %v1053 = vld [vmem:[%s1052] sm:$0xf]
      %1054 = vrot.lane.b32.xlu0 %v317, 91
      %v1055 = vpop.permute.xlu0 %1054
      %1056 = vrot.lane.b32.xlu0 %v318, 91
      %v1057 = vpop.permute.xlu0 %1056
      %1058 = vrot.lane.b32.xlu0 %v319, 91
      %v1059 = vpop.permute.xlu0 %1058
      %vm1060 = vcmask 744448
      %v1061 = vsel %vm1060, %v1055, %v1057
      %v1062 = vsel %vm1060, %v1057, %v1059
      %v1064 = vsel %vm329, %v1053, 0
      %v1067 = vsel %vm333, %v1061, 0
      %v1070 = vsel %vm333, %v1062, 0
      %v1073 = vsel %vm333, %v1059, 0
      %1075 = vmatprep.subr.bf16.mxu0 0
      %1076 = vmatpush1.bf16.msra.mxu0 0
      %1077 = vmatprep.subr.bf16.mxu0 0
      %1078 = vmatpush1.bf16.msra.mxu0 0
      %1079 = vmatprep.subr.bf16.mxu0 0
      %1080 = vmatpush1.bf16.msra.mxu0 0
      %1081 = vmatprep.subr.bf16.mxu0 0
      %1082 = vmatpush1.bf16.msra.mxu0 0
      %1083 = vmatprep.subr.bf16.mxu0 0
      %1084 = vmatpush1.bf16.msra.mxu0 0
      %1085 = vmatprep.subr.bf16.mxu0 0
      %1086 = vmatpush1.bf16.msra.mxu0 0
      %1087 = vmatprep.subr.bf16.mxu0 0
      %1088 = vmatpush1.bf16.msra.mxu0 0
      %1089 = vmatprep.subr.bf16.mxu0 %v1070
      %1090 = vmatpush1.bf16.msra.mxu0 %v1067
      %1091 = vmatprep.subr.bf16.mxu0 0
      %1092 = vmatpush2.bf16.msra.mxu0 0
      %1093 = vmatprep.subr.bf16.mxu0 0
      %1094 = vmatpush2.bf16.msra.mxu0 0
      %1095 = vmatprep.subr.bf16.mxu0 0
      %1096 = vmatpush2.bf16.msra.mxu0 0
      %1097 = vmatprep.subr.bf16.mxu0 0
      %1098 = vmatpush2.bf16.msra.mxu0 0
      %1099 = vmatprep.subr.bf16.mxu0 0
      %1100 = vmatpush2.bf16.msra.mxu0 0
      %1101 = vmatprep.subr.bf16.mxu0 0
      %1102 = vmatpush2.bf16.msra.mxu0 0
      %1103 = vmatprep.subr.bf16.mxu0 0
      %1104 = vmatpush2.bf16.msra.mxu0 0
      %1105 = vmatprep.subr.bf16.mxu0 0
      %1106 = vmatpush2.bf16.msra.mxu0 0
      %1107 = vmatprep.mubr.bf16.mxu0 0
      %1108 = vmatmul.mubr.bf16.gmra.mxu0 %v1064
      %v1109 = vpop.f32.mrf.mxu0
      %v1110 = vadd.f32 0.0, %v1109
      %v1111 = vpop.f32.mrf.mxu0
      %v1112 = vadd.f32 0.0, %v1111
      %v1113 = vpop.f32.mrf.mxu0
      %v1114 = vpop.f32.mrf.mxu0
      %1115 = vdwg.mxu0
      %1116 = vmatprep.subr.bf16.mxu0 0
      %1117 = vmatpush1.bf16.msra.mxu0 0
      %1118 = vmatprep.subr.bf16.mxu0 0
      %1119 = vmatpush1.bf16.msra.mxu0 0
      %1120 = vmatprep.subr.bf16.mxu0 0
      %1121 = vmatpush1.bf16.msra.mxu0 0
      %1122 = vmatprep.subr.bf16.mxu0 0
      %1123 = vmatpush1.bf16.msra.mxu0 0
      %1124 = vmatprep.subr.bf16.mxu0 0
      %1125 = vmatpush1.bf16.msra.mxu0 0
      %1126 = vmatprep.subr.bf16.mxu0 0
      %1127 = vmatpush1.bf16.msra.mxu0 0
      %1128 = vmatprep.subr.bf16.mxu0 0
      %1129 = vmatpush1.bf16.msra.mxu0 0
      %1130 = vmatprep.subr.bf16.mxu0 0
      %1131 = vmatpush1.bf16.msra.mxu0 %v1073
      %1132 = vmatprep.subr.bf16.mxu0 0
      %1133 = vmatpush2.bf16.msra.mxu0 0
      %1134 = vmatprep.subr.bf16.mxu0 0
      %1135 = vmatpush2.bf16.msra.mxu0 0
      %1136 = vmatprep.subr.bf16.mxu0 0
      %1137 = vmatpush2.bf16.msra.mxu0 0
      %1138 = vmatprep.subr.bf16.mxu0 0
      %1139 = vmatpush2.bf16.msra.mxu0 0
      %1140 = vmatprep.subr.bf16.mxu0 0
      %1141 = vmatpush2.bf16.msra.mxu0 0
      %1142 = vmatprep.subr.bf16.mxu0 0
      %1143 = vmatpush2.bf16.msra.mxu0 0
      %1144 = vmatprep.subr.bf16.mxu0 0
      %1145 = vmatpush2.bf16.msra.mxu0 0
      %1146 = vmatprep.subr.bf16.mxu0 0
      %1147 = vmatpush2.bf16.msra.mxu0 0
      %1148 = vmatprep.mubr.bf16.mxu0 0
      %1149 = vmatmul.mubr.bf16.gmra.mxu0 %v1064
      %v1150 = vpop.f32.mrf.mxu0
      %v1151 = vadd.f32 0.0, %v1150
      %v1152 = vpop.f32.mrf.mxu0
      %v1153 = vpop.f32.mrf.mxu0
      %v1154 = vpop.f32.mrf.mxu0
      %1155 = vdwg.mxu0
      %v1156 = vadd.f32 %v1049, %v1110
      %v1157 = vadd.f32 %v1050, %v1112
      %v1158 = vadd.f32 %v1051, %v1151
      %s1159 = scalar_lea.vmem %s1, 32
      %v1160 = vld [vmem:[%s1159] sm:$0xf]
      %1161 = vrot.lane.b32.xlu0 %v317, 90
      %v1162 = vpop.permute.xlu0 %1161
      %1163 = vrot.lane.b32.xlu0 %v318, 90
      %v1164 = vpop.permute.xlu0 %1163
      %1165 = vrot.lane.b32.xlu0 %v319, 90
      %v1166 = vpop.permute.xlu0 %1165
      %vm1167 = vcmask 736256
      %v1168 = vsel %vm1167, %v1162, %v1164
      %v1169 = vsel %vm1167, %v1164, %v1166
      %v1171 = vsel %vm329, %v1160, 0
      %v1174 = vsel %vm333, %v1168, 0
      %v1177 = vsel %vm333, %v1169, 0
      %v1180 = vsel %vm333, %v1166, 0
      %1182 = vmatprep.subr.bf16.mxu0 0
      %1183 = vmatpush1.bf16.msra.mxu0 0
      %1184 = vmatprep.subr.bf16.mxu0 0
      %1185 = vmatpush1.bf16.msra.mxu0 0
      %1186 = vmatprep.subr.bf16.mxu0 0
      %1187 = vmatpush1.bf16.msra.mxu0 0
      %1188 = vmatprep.subr.bf16.mxu0 0
      %1189 = vmatpush1.bf16.msra.mxu0 0
      %1190 = vmatprep.subr.bf16.mxu0 0
      %1191 = vmatpush1.bf16.msra.mxu0 0
      %1192 = vmatprep.subr.bf16.mxu0 0
      %1193 = vmatpush1.bf16.msra.mxu0 0
      %1194 = vmatprep.subr.bf16.mxu0 0
      %1195 = vmatpush1.bf16.msra.mxu0 0
      %1196 = vmatprep.subr.bf16.mxu0 %v1177
      %1197 = vmatpush1.bf16.msra.mxu0 %v1174
      %1198 = vmatprep.subr.bf16.mxu0 0
      %1199 = vmatpush2.bf16.msra.mxu0 0
      %1200 = vmatprep.subr.bf16.mxu0 0
      %1201 = vmatpush2.bf16.msra.mxu0 0
      %1202 = vmatprep.subr.bf16.mxu0 0
      %1203 = vmatpush2.bf16.msra.mxu0 0
      %1204 = vmatprep.subr.bf16.mxu0 0
      %1205 = vmatpush2.bf16.msra.mxu0 0
      %1206 = vmatprep.subr.bf16.mxu0 0
      %1207 = vmatpush2.bf16.msra.mxu0 0
      %1208 = vmatprep.subr.bf16.mxu0 0
      %1209 = vmatpush2.bf16.msra.mxu0 0
      %1210 = vmatprep.subr.bf16.mxu0 0
      %1211 = vmatpush2.bf16.msra.mxu0 0
      %1212 = vmatprep.subr.bf16.mxu0 0
      %1213 = vmatpush2.bf16.msra.mxu0 0
      %1214 = vmatprep.mubr.bf16.mxu0 0
      %1215 = vmatmul.mubr.bf16.gmra.mxu0 %v1171
      %v1216 = vpop.f32.mrf.mxu0
      %v1217 = vadd.f32 0.0, %v1216
      %v1218 = vpop.f32.mrf.mxu0
      %v1219 = vadd.f32 0.0, %v1218
      %v1220 = vpop.f32.mrf.mxu0
      %v1221 = vpop.f32.mrf.mxu0
      %1222 = vdwg.mxu0
      %1223 = vmatprep.subr.bf16.mxu0 0
      %1224 = vmatpush1.bf16.msra.mxu0 0
      %1225 = vmatprep.subr.bf16.mxu0 0
      %1226 = vmatpush1.bf16.msra.mxu0 0
      %1227 = vmatprep.subr.bf16.mxu0 0
      %1228 = vmatpush1.bf16.msra.mxu0 0
      %1229 = vmatprep.subr.bf16.mxu0 0
      %1230 = vmatpush1.bf16.msra.mxu0 0
      %1231 = vmatprep.subr.bf16.mxu0 0
      %1232 = vmatpush1.bf16.msra.mxu0 0
      %1233 = vmatprep.subr.bf16.mxu0 0
      %1234 = vmatpush1.bf16.msra.mxu0 0
      %1235 = vmatprep.subr.bf16.mxu0 0
      %1236 = vmatpush1.bf16.msra.mxu0 0
      %1237 = vmatprep.subr.bf16.mxu0 0
      %1238 = vmatpush1.bf16.msra.mxu0 %v1180
      %1239 = vmatprep.subr.bf16.mxu0 0
      %1240 = vmatpush2.bf16.msra.mxu0 0
      %1241 = vmatprep.subr.bf16.mxu0 0
      %1242 = vmatpush2.bf16.msra.mxu0 0
      %1243 = vmatprep.subr.bf16.mxu0 0
      %1244 = vmatpush2.bf16.msra.mxu0 0
      %1245 = vmatprep.subr.bf16.mxu0 0
      %1246 = vmatpush2.bf16.msra.mxu0 0
      %1247 = vmatprep.subr.bf16.mxu0 0
      %1248 = vmatpush2.bf16.msra.mxu0 0
      %1249 = vmatprep.subr.bf16.mxu0 0
      %1250 = vmatpush2.bf16.msra.mxu0 0
      %1251 = vmatprep.subr.bf16.mxu0 0
      %1252 = vmatpush2.bf16.msra.mxu0 0
      %1253 = vmatprep.subr.bf16.mxu0 0
      %1254 = vmatpush2.bf16.msra.mxu0 0
      %1255 = vmatprep.mubr.bf16.mxu0 0
      %1256 = vmatmul.mubr.bf16.gmra.mxu0 %v1171
      %v1257 = vpop.f32.mrf.mxu0
      %v1258 = vadd.f32 0.0, %v1257
      %v1259 = vpop.f32.mrf.mxu0
      %v1260 = vpop.f32.mrf.mxu0
      %v1261 = vpop.f32.mrf.mxu0
      %1262 = vdwg.mxu0
      %v1263 = vadd.f32 %v1156, %v1217
      %v1264 = vadd.f32 %v1157, %v1219
      %v1265 = vadd.f32 %v1158, %v1258
      %v1266 = vld [vmem:[%s2] sm:$0xff]
      %1268 = vset.pattern.permute.xlu0 0
      %1269 = vperm.xlu0 %1268, %v1266
      %v1270 = vpop.permute.xlu0 %1269
      %v1272 = vadd.f32 %v1263, %v1270
      %v1273 = vadd.f32 %v1264, %v1270
      %v1274 = vadd.f32 %v1265, %v1270
      %v1275 = vmax.f32 %v1272, 0.0
      %v1276 = vmax.f32 %v1273, 0.0
      %v1277 = vmax.f32 %v1274, 0.0
      %v1278 = vpack.c.bf16 %v1275, %v1275
      %v1279 = vpack.c.bf16 %v1276, %v1276
      %v1280 = vpack.c.bf16 %v1277, %v1277
      %v1281 = vld [vmem:[%s5] sm:$0xff]
      %v1282 = vld [vmem:[%s5 + $0x8] sm:$0xf]
      %v1283 = vld [vmem:[%s5 + $0xc] sm:$0xff]
      %v1284 = vld [vmem:[%s5 + $0x14] sm:$0xf]
      %v1285 = vld [vmem:[%s5 + $0x18] sm:$0xff]
      %v1286 = vld [vmem:[%s5 + $0x20] sm:$0xf]
      %v1287 = vld [vmem:[%s5 + $0x24] sm:$0xff]
      %v1288 = vld [vmem:[%s5 + $0x2c] sm:$0xf]
      %v1289 = vld [vmem:[%s5 + $0x30] sm:$0xff]
      %v1290 = vld [vmem:[%s5 + $0x38] sm:$0xf]
      %v1291 = vld [vmem:[%s5 + $0x3c] sm:$0xff]
      %v1292 = vld [vmem:[%s5 + $0x44] sm:$0xf]
      %v1293 = vld [vmem:[%s5 + $0x48] sm:$0xff]
      %v1294 = vld [vmem:[%s5 + $0x50] sm:$0xf]
      %v1295 = vld [vmem:[%s5 + $0x54] sm:$0xff]
      %v1296 = vld [vmem:[%s5 + $0x5c] sm:$0xf]
      %v1297 = vld [vmem:[%s5 + $0x60] sm:$0xff]
      %v1298 = vld [vmem:[%s5 + $0x68] sm:$0xf]
      %v1299 = vld [vmem:[%s5 + $0x6c] sm:$0xff]
      %v1300 = vld [vmem:[%s5 + $0x74] sm:$0xf]
      %v1301 = vld [vmem:[%s5 + $0x78] sm:$0xff]
      %v1302 = vld [vmem:[%s5 + $0x80] sm:$0xf]
      %v1303 = vld [vmem:[%s5 + $0x84] sm:$0xff]
      %v1304 = vld [vmem:[%s5 + $0x8c] sm:$0xf]
      %v1305 = vld [vmem:[%s5 + $0x90] sm:$0xff]
      %v1306 = vld [vmem:[%s5 + $0x98] sm:$0xf]
      %v1307 = vld [vmem:[%s5 + $0x9c] sm:$0xff]
      %v1308 = vld [vmem:[%s5 + $0xa4] sm:$0xf]
      %v1309 = vld [vmem:[%s5 + $0xa8] sm:$0xff]
      %v1310 = vld [vmem:[%s5 + $0xb0] sm:$0xf]
      %v1311 = vld [vmem:[%s5 + $0xb4] sm:$0xff]
      %v1312 = vld [vmem:[%s5 + $0xbc] sm:$0xf]
      %v1313 = vld [vmem:[%s5 + $0xc0] sm:$0xff]
      %v1314 = vld [vmem:[%s5 + $0xc8] sm:$0xf]
      %v1315 = vld [vmem:[%s5 + $0xcc] sm:$0xff]
      %v1316 = vld [vmem:[%s5 + $0xd4] sm:$0xf]
      %v1317 = vld [vmem:[%s5 + $0xd8] sm:$0xff]
      %v1318 = vld [vmem:[%s5 + $0xe0] sm:$0xf]
      %v1319 = vld [vmem:[%s5 + $0xe4] sm:$0xff]
      %v1320 = vld [vmem:[%s5 + $0xec] sm:$0xf]
      %v1321 = vld [vmem:[%s5 + $0xf0] sm:$0xff]
      %v1322 = vld [vmem:[%s5 + $0xf8] sm:$0xf]
      %v1323 = vld [vmem:[%s5 + $0xfc] sm:$0xff]
      %v1324 = vld [vmem:[%s5 + $0x104] sm:$0xf]
      %v1325 = vld [vmem:[%s5 + $0x108] sm:$0xff]
      %v1326 = vld [vmem:[%s5 + $0x110] sm:$0xf]
      %v1327 = vld [vmem:[%s5 + $0x114] sm:$0xff]
      %v1328 = vld [vmem:[%s5 + $0x11c] sm:$0xf]
      %v1329 = vld [vmem:[%s5 + $0x120] sm:$0xff]
      %v1330 = vld [vmem:[%s5 + $0x128] sm:$0xf]
      %v1331 = vld [vmem:[%s5 + $0x12c] sm:$0xff]
      %v1332 = vld [vmem:[%s5 + $0x134] sm:$0xf]
      %v1333 = vld [vmem:[%s5 + $0x138] sm:$0xff]
      %v1334 = vld [vmem:[%s5 + $0x140] sm:$0xf]
      %v1335 = vld [vmem:[%s5 + $0x144] sm:$0xff]
      %v1336 = vld [vmem:[%s5 + $0x14c] sm:$0xf]
      %v1337 = vld [vmem:[%s5 + $0x150] sm:$0xff]
      %v1338 = vld [vmem:[%s5 + $0x158] sm:$0xf]
      %v1339 = vld [vmem:[%s5 + $0x15c] sm:$0xff]
      %v1340 = vld [vmem:[%s5 + $0x164] sm:$0xf]
      %v1341 = vld [vmem:[%s5 + $0x168] sm:$0xff]
      %v1342 = vld [vmem:[%s5 + $0x170] sm:$0xf]
      %v1343 = vld [vmem:[%s5 + $0x174] sm:$0xff]
      %v1344 = vld [vmem:[%s5 + $0x17c] sm:$0xf]
      %v1345 = vld [vmem:[%s5 + $0x180] sm:$0xff]
      %v1346 = vld [vmem:[%s5 + $0x188] sm:$0xf]
      %v1347 = vld [vmem:[%s5 + $0x18c] sm:$0xff]
      %v1348 = vld [vmem:[%s5 + $0x194] sm:$0xf]
      %v1349 = vld [vmem:[%s5 + $0x198] sm:$0xff]
      %v1350 = vld [vmem:[%s5 + $0x1a0] sm:$0xf]
      %v1351 = vld [vmem:[%s5 + $0x1a4] sm:$0xff]
      %v1352 = vld [vmem:[%s5 + $0x1ac] sm:$0xf]
      %v1425 = vunpack.c.l.b16 %v1281
      %v1426 = vunpack.c.h.b16 %v1281
      %v1427 = vunpack.c.l.b16 %v1282
      %v1428 = vunpack.c.l.b16 %v1283
      %v1429 = vunpack.c.h.b16 %v1283
      %v1430 = vunpack.c.l.b16 %v1284
      %v1431 = vunpack.c.l.b16 %v1285
      %v1432 = vunpack.c.h.b16 %v1285
      %v1433 = vunpack.c.l.b16 %v1286
      %v1434 = vunpack.c.l.b16 %v1287
      %v1435 = vunpack.c.h.b16 %v1287
      %v1436 = vunpack.c.l.b16 %v1288
      %v1437 = vunpack.c.l.b16 %v1289
      %v1438 = vunpack.c.h.b16 %v1289
      %v1439 = vunpack.c.l.b16 %v1290
      %v1440 = vunpack.c.l.b16 %v1291
      %v1441 = vunpack.c.h.b16 %v1291
      %v1442 = vunpack.c.l.b16 %v1292
      %v1443 = vunpack.c.l.b16 %v1293
      %v1444 = vunpack.c.h.b16 %v1293
      %v1445 = vunpack.c.l.b16 %v1294
      %v1446 = vunpack.c.l.b16 %v1295
      %v1447 = vunpack.c.h.b16 %v1295
      %v1448 = vunpack.c.l.b16 %v1296
      %v1449 = vunpack.c.l.b16 %v1297
      %v1450 = vunpack.c.h.b16 %v1297
      %v1451 = vunpack.c.l.b16 %v1298
      %v1452 = vunpack.c.l.b16 %v1299
      %v1453 = vunpack.c.h.b16 %v1299
      %v1454 = vunpack.c.l.b16 %v1300
      %v1455 = vunpack.c.l.b16 %v1301
      %v1456 = vunpack.c.h.b16 %v1301
      %v1457 = vunpack.c.l.b16 %v1302
      %v1458 = vunpack.c.l.b16 %v1303
      %v1459 = vunpack.c.h.b16 %v1303
      %v1460 = vunpack.c.l.b16 %v1304
      %v1461 = vunpack.c.l.b16 %v1305
      %v1462 = vunpack.c.h.b16 %v1305
      %v1463 = vunpack.c.l.b16 %v1306
      %v1464 = vunpack.c.l.b16 %v1307
      %v1465 = vunpack.c.h.b16 %v1307
      %v1466 = vunpack.c.l.b16 %v1308
      %v1467 = vunpack.c.l.b16 %v1309
      %v1468 = vunpack.c.h.b16 %v1309
      %v1469 = vunpack.c.l.b16 %v1310
      %v1470 = vunpack.c.l.b16 %v1311
      %v1471 = vunpack.c.h.b16 %v1311
      %v1472 = vunpack.c.l.b16 %v1312
      %v1473 = vunpack.c.l.b16 %v1313
      %v1474 = vunpack.c.h.b16 %v1313
      %v1475 = vunpack.c.l.b16 %v1314
      %v1476 = vunpack.c.l.b16 %v1315
      %v1477 = vunpack.c.h.b16 %v1315
      %v1478 = vunpack.c.l.b16 %v1316
      %v1479 = vunpack.c.l.b16 %v1317
      %v1480 = vunpack.c.h.b16 %v1317
      %v1481 = vunpack.c.l.b16 %v1318
      %v1482 = vunpack.c.l.b16 %v1319
      %v1483 = vunpack.c.h.b16 %v1319
      %v1484 = vunpack.c.l.b16 %v1320
      %v1485 = vunpack.c.l.b16 %v1321
      %v1486 = vunpack.c.h.b16 %v1321
      %v1487 = vunpack.c.l.b16 %v1322
      %v1488 = vunpack.c.l.b16 %v1323
      %v1489 = vunpack.c.h.b16 %v1323
      %v1490 = vunpack.c.l.b16 %v1324
      %v1491 = vunpack.c.l.b16 %v1325
      %v1492 = vunpack.c.h.b16 %v1325
      %v1493 = vunpack.c.l.b16 %v1326
      %v1494 = vunpack.c.l.b16 %v1327
      %v1495 = vunpack.c.h.b16 %v1327
      %v1496 = vunpack.c.l.b16 %v1328
      %v1497 = vunpack.c.l.b16 %v1329
      %v1498 = vunpack.c.h.b16 %v1329
      %v1499 = vunpack.c.l.b16 %v1330
      %v1500 = vunpack.c.l.b16 %v1331
      %v1501 = vunpack.c.h.b16 %v1331
      %v1502 = vunpack.c.l.b16 %v1332
      %v1503 = vunpack.c.l.b16 %v1333
      %v1504 = vunpack.c.h.b16 %v1333
      %v1505 = vunpack.c.l.b16 %v1334
      %v1506 = vunpack.c.l.b16 %v1335
      %v1507 = vunpack.c.h.b16 %v1335
      %v1508 = vunpack.c.l.b16 %v1336
      %v1509 = vunpack.c.l.b16 %v1337
      %v1510 = vunpack.c.h.b16 %v1337
      %v1511 = vunpack.c.l.b16 %v1338
      %v1512 = vunpack.c.l.b16 %v1339
      %v1513 = vunpack.c.h.b16 %v1339
      %v1514 = vunpack.c.l.b16 %v1340
      %v1515 = vunpack.c.l.b16 %v1341
      %v1516 = vunpack.c.h.b16 %v1341
      %v1517 = vunpack.c.l.b16 %v1342
      %v1518 = vunpack.c.l.b16 %v1343
      %v1519 = vunpack.c.h.b16 %v1343
      %v1520 = vunpack.c.l.b16 %v1344
      %v1521 = vunpack.c.l.b16 %v1345
      %v1522 = vunpack.c.h.b16 %v1345
      %v1523 = vunpack.c.l.b16 %v1346
      %v1524 = vunpack.c.l.b16 %v1347
      %v1525 = vunpack.c.h.b16 %v1347
      %v1526 = vunpack.c.l.b16 %v1348
      %v1527 = vunpack.c.l.b16 %v1349
      %v1528 = vunpack.c.h.b16 %v1349
      %v1529 = vunpack.c.l.b16 %v1350
      %v1530 = vunpack.c.l.b16 %v1351
      %v1531 = vunpack.c.h.b16 %v1351
      %v1532 = vunpack.c.l.b16 %v1352
      %v1533 = vpack.c.b16 %v1428, %v1425
      %v1534 = vpack.c.b16 %v1429, %v1426
      %v1535 = vpack.c.b16 %v1430, %v1427
      %v1536 = vpack.c.b16 %v1434, %v1431
      %v1537 = vpack.c.b16 %v1435, %v1432
      %v1538 = vpack.c.b16 %v1436, %v1433
      %v1539 = vpack.c.b16 %v1440, %v1437
      %v1540 = vpack.c.b16 %v1441, %v1438
      %v1541 = vpack.c.b16 %v1442, %v1439
      %v1542 = vpack.c.b16 %v1446, %v1443
      %v1543 = vpack.c.b16 %v1447, %v1444
      %v1544 = vpack.c.b16 %v1448, %v1445
      %v1545 = vpack.c.b16 %v1452, %v1449
      %v1546 = vpack.c.b16 %v1453, %v1450
      %v1547 = vpack.c.b16 %v1454, %v1451
      %v1548 = vpack.c.b16 %v1458, %v1455
      %v1549 = vpack.c.b16 %v1459, %v1456
      %v1550 = vpack.c.b16 %v1460, %v1457
      %v1551 = vpack.c.b16 %v1464, %v1461
      %v1552 = vpack.c.b16 %v1465, %v1462
      %v1553 = vpack.c.b16 %v1466, %v1463
      %v1554 = vpack.c.b16 %v1470, %v1467
      %v1555 = vpack.c.b16 %v1471, %v1468
      %v1556 = vpack.c.b16 %v1472, %v1469
      %v1557 = vpack.c.b16 %v1476, %v1473
      %v1558 = vpack.c.b16 %v1477, %v1474
      %v1559 = vpack.c.b16 %v1478, %v1475
      %v1560 = vpack.c.b16 %v1482, %v1479
      %v1561 = vpack.c.b16 %v1483, %v1480
      %v1562 = vpack.c.b16 %v1484, %v1481
      %v1563 = vpack.c.b16 %v1488, %v1485
      %v1564 = vpack.c.b16 %v1489, %v1486
      %v1565 = vpack.c.b16 %v1490, %v1487
      %v1566 = vpack.c.b16 %v1494, %v1491
      %v1567 = vpack.c.b16 %v1495, %v1492
      %v1568 = vpack.c.b16 %v1496, %v1493
      %v1569 = vpack.c.b16 %v1500, %v1497
      %v1570 = vpack.c.b16 %v1501, %v1498
      %v1571 = vpack.c.b16 %v1502, %v1499
      %v1572 = vpack.c.b16 %v1506, %v1503
      %v1573 = vpack.c.b16 %v1507, %v1504
      %v1574 = vpack.c.b16 %v1508, %v1505
      %v1575 = vpack.c.b16 %v1512, %v1509
      %v1576 = vpack.c.b16 %v1513, %v1510
      %v1577 = vpack.c.b16 %v1514, %v1511
      %v1578 = vpack.c.b16 %v1518, %v1515
      %v1579 = vpack.c.b16 %v1519, %v1516
      %v1580 = vpack.c.b16 %v1520, %v1517
      %v1581 = vpack.c.b16 %v1524, %v1521
      %v1582 = vpack.c.b16 %v1525, %v1522
      %v1583 = vpack.c.b16 %v1526, %v1523
      %v1584 = vpack.c.b16 %v1530, %v1527
      %v1585 = vpack.c.b16 %v1531, %v1528
      %v1586 = vpack.c.b16 %v1532, %v1529
      %vm1641 = vcmask 261120
      %v1643 = vsel %vm1641, %v1280, 0
      %1645 = vmatprep.subr.bf16.mxu0 %v1555
      %1646 = vmatpush1.bf16.msra.mxu0 %v1554
      %1647 = vmatprep.subr.bf16.mxu0 %v1552
      %1648 = vmatpush1.bf16.msra.mxu0 %v1551
      %1649 = vmatprep.subr.bf16.mxu0 %v1549
      %1650 = vmatpush1.bf16.msra.mxu0 %v1548
      %1651 = vmatprep.subr.bf16.mxu0 %v1546
      %1652 = vmatpush1.bf16.msra.mxu0 %v1545
      %1653 = vmatprep.subr.bf16.mxu0 %v1543
      %1654 = vmatpush1.bf16.msra.mxu0 %v1542
      %1655 = vmatprep.subr.bf16.mxu0 %v1540
      %1656 = vmatpush1.bf16.msra.mxu0 %v1539
      %1657 = vmatprep.subr.bf16.mxu0 %v1537
      %1658 = vmatpush1.bf16.msra.mxu0 %v1536
      %1659 = vmatprep.subr.bf16.mxu0 %v1534
      %1660 = vmatpush1.bf16.msra.mxu0 %v1533
      %1661 = vmatprep.subr.bf16.mxu0 %v1579
      %1662 = vmatpush2.bf16.msra.mxu0 %v1578
      %1663 = vmatprep.subr.bf16.mxu0 %v1576
      %1664 = vmatpush2.bf16.msra.mxu0 %v1575
      %1665 = vmatprep.subr.bf16.mxu0 %v1573
      %1666 = vmatpush2.bf16.msra.mxu0 %v1572
      %1667 = vmatprep.subr.bf16.mxu0 %v1570
      %1668 = vmatpush2.bf16.msra.mxu0 %v1569
      %1669 = vmatprep.subr.bf16.mxu0 %v1567
      %1670 = vmatpush2.bf16.msra.mxu0 %v1566
      %1671 = vmatprep.subr.bf16.mxu0 %v1564
      %1672 = vmatpush2.bf16.msra.mxu0 %v1563
      %1673 = vmatprep.subr.bf16.mxu0 %v1561
      %1674 = vmatpush2.bf16.msra.mxu0 %v1560
      %1675 = vmatprep.subr.bf16.mxu0 %v1558
      %1676 = vmatpush2.bf16.msra.mxu0 %v1557
      %1677 = vmatprep.mubr.bf16.mxu0 %v1279
      %1678 = vmatmul.mubr.bf16.gmra.mxu0 %v1278
      %v1679 = vpop.f32.mrf.mxu0
      %v1680 = vadd.f32 0.0, %v1679
      %v1681 = vpop.f32.mrf.mxu0
      %v1682 = vadd.f32 0.0, %v1681
      %v1683 = vpop.f32.mrf.mxu0
      %v1684 = vpop.f32.mrf.mxu0
      %1685 = vdwg.mxu0
      %1686 = vmatprep.subr.bf16.mxu0 0
      %1687 = vmatpush1.bf16.msra.mxu0 0
      %1688 = vmatprep.subr.bf16.mxu0 0
      %1689 = vmatpush1.bf16.msra.mxu0 0
      %1690 = vmatprep.subr.bf16.mxu0 0
      %1691 = vmatpush1.bf16.msra.mxu0 0
      %1692 = vmatprep.subr.bf16.mxu0 0
      %1693 = vmatpush1.bf16.msra.mxu0 0
      %1694 = vmatprep.subr.bf16.mxu0 0
      %1695 = vmatpush1.bf16.msra.mxu0 0
      %1696 = vmatprep.subr.bf16.mxu0 0
      %1697 = vmatpush1.bf16.msra.mxu0 0
      %1698 = vmatprep.subr.bf16.mxu0 %v1585
      %1699 = vmatpush1.bf16.msra.mxu0 %v1584
      %1700 = vmatprep.subr.bf16.mxu0 %v1582
      %1701 = vmatpush1.bf16.msra.mxu0 %v1581
      %1702 = vmatprep.subr.bf16.mxu0 0
      %1703 = vmatpush2.bf16.msra.mxu0 0
      %1704 = vmatprep.subr.bf16.mxu0 0
      %1705 = vmatpush2.bf16.msra.mxu0 0
      %1706 = vmatprep.subr.bf16.mxu0 0
      %1707 = vmatpush2.bf16.msra.mxu0 0
      %1708 = vmatprep.subr.bf16.mxu0 0
      %1709 = vmatpush2.bf16.msra.mxu0 0
      %1710 = vmatprep.subr.bf16.mxu0 0
      %1711 = vmatpush2.bf16.msra.mxu0 0
      %1712 = vmatprep.subr.bf16.mxu0 0
      %1713 = vmatpush2.bf16.msra.mxu0 0
      %1714 = vmatprep.subr.bf16.mxu0 0
      %1715 = vmatpush2.bf16.msra.mxu0 0
      %1716 = vmatprep.subr.bf16.mxu0 0
      %1717 = vmatpush2.bf16.msra.mxu0 0
      %1718 = vmatprep.mubr.bf16.mxu0 0
      %1719 = vmatmul.mubr.bf16.gmra.mxu0 %v1643
      %v1720 = vpop.f32.mrf.mxu0
      %v1721 = vadd.f32 %v1680, %v1720
      %v1722 = vpop.f32.mrf.mxu0
      %v1723 = vadd.f32 %v1682, %v1722
      %v1724 = vpop.f32.mrf.mxu0
      %v1725 = vpop.f32.mrf.mxu0
      %1726 = vdwg.mxu0
      %1727 = vmatprep.subr.bf16.mxu0 0
      %1728 = vmatpush1.bf16.msra.mxu0 %v1556
      %1729 = vmatprep.subr.bf16.mxu0 0
      %1730 = vmatpush1.bf16.msra.mxu0 %v1553
      %1731 = vmatprep.subr.bf16.mxu0 0
      %1732 = vmatpush1.bf16.msra.mxu0 %v1550
      %1733 = vmatprep.subr.bf16.mxu0 0
      %1734 = vmatpush1.bf16.msra.mxu0 %v1547
      %1735 = vmatprep.subr.bf16.mxu0 0
      %1736 = vmatpush1.bf16.msra.mxu0 %v1544
      %1737 = vmatprep.subr.bf16.mxu0 0
      %1738 = vmatpush1.bf16.msra.mxu0 %v1541
      %1739 = vmatprep.subr.bf16.mxu0 0
      %1740 = vmatpush1.bf16.msra.mxu0 %v1538
      %1741 = vmatprep.subr.bf16.mxu0 0
      %1742 = vmatpush1.bf16.msra.mxu0 %v1535
      %1743 = vmatprep.subr.bf16.mxu0 0
      %1744 = vmatpush2.bf16.msra.mxu0 %v1580
      %1745 = vmatprep.subr.bf16.mxu0 0
      %1746 = vmatpush2.bf16.msra.mxu0 %v1577
      %1747 = vmatprep.subr.bf16.mxu0 0
      %1748 = vmatpush2.bf16.msra.mxu0 %v1574
      %1749 = vmatprep.subr.bf16.mxu0 0
      %1750 = vmatpush2.bf16.msra.mxu0 %v1571
      %1751 = vmatprep.subr.bf16.mxu0 0
      %1752 = vmatpush2.bf16.msra.mxu0 %v1568
      %1753 = vmatprep.subr.bf16.mxu0 0
      %1754 = vmatpush2.bf16.msra.mxu0 %v1565
      %1755 = vmatprep.subr.bf16.mxu0 0
      %1756 = vmatpush2.bf16.msra.mxu0 %v1562
      %1757 = vmatprep.subr.bf16.mxu0 0
      %1758 = vmatpush2.bf16.msra.mxu0 %v1559
      %1759 = vmatprep.mubr.bf16.mxu0 %v1279
      %1760 = vmatmul.mubr.bf16.gmra.mxu0 %v1278
      %v1761 = vpop.f32.mrf.mxu0
      %v1762 = vadd.f32 0.0, %v1761
      %v1763 = vpop.f32.mrf.mxu0
      %v1764 = vpop.f32.mrf.mxu0
      %v1765 = vpop.f32.mrf.mxu0
      %1766 = vdwg.mxu0
      %1767 = vmatprep.subr.bf16.mxu0 0
      %1768 = vmatpush1.bf16.msra.mxu0 0
      %1769 = vmatprep.subr.bf16.mxu0 0
      %1770 = vmatpush1.bf16.msra.mxu0 0
      %1771 = vmatprep.subr.bf16.mxu0 0
      %1772 = vmatpush1.bf16.msra.mxu0 0
      %1773 = vmatprep.subr.bf16.mxu0 0
      %1774 = vmatpush1.bf16.msra.mxu0 0
      %1775 = vmatprep.subr.bf16.mxu0 0
      %1776 = vmatpush1.bf16.msra.mxu0 0
      %1777 = vmatprep.subr.bf16.mxu0 0
      %1778 = vmatpush1.bf16.msra.mxu0 0
      %1779 = vmatprep.subr.bf16.mxu0 0
      %1780 = vmatpush1.bf16.msra.mxu0 %v1586
      %1781 = vmatprep.subr.bf16.mxu0 0
      %1782 = vmatpush1.bf16.msra.mxu0 %v1583
      %1783 = vmatprep.subr.bf16.mxu0 0
      %1784 = vmatpush2.bf16.msra.mxu0 0
      %1785 = vmatprep.subr.bf16.mxu0 0
      %1786 = vmatpush2.bf16.msra.mxu0 0
      %1787 = vmatprep.subr.bf16.mxu0 0
      %1788 = vmatpush2.bf16.msra.mxu0 0
      %1789 = vmatprep.subr.bf16.mxu0 0
      %1790 = vmatpush2.bf16.msra.mxu0 0
      %1791 = vmatprep.subr.bf16.mxu0 0
      %1792 = vmatpush2.bf16.msra.mxu0 0
      %1793 = vmatprep.subr.bf16.mxu0 0
      %1794 = vmatpush2.bf16.msra.mxu0 0
      %1795 = vmatprep.subr.bf16.mxu0 0
      %1796 = vmatpush2.bf16.msra.mxu0 0
      %1797 = vmatprep.subr.bf16.mxu0 0
      %1798 = vmatpush2.bf16.msra.mxu0 0
      %1799 = vmatprep.mubr.bf16.mxu0 0
      %1800 = vmatmul.mubr.bf16.gmra.mxu0 %v1643
      %v1801 = vpop.f32.mrf.mxu0
      %v1802 = vadd.f32 %v1762, %v1801
      %v1803 = vpop.f32.mrf.mxu0
      %v1804 = vpop.f32.mrf.mxu0
      %v1805 = vpop.f32.mrf.mxu0
      %1806 = vdwg.mxu0
      %v1807 = vpack.c.bf16 %v1721, %v1721
      %v1808 = vpack.c.bf16 %v1723, %v1723
      %v1809 = vpack.c.bf16 %v1802, %v1802
      %v1810 = vld [vmem:[%s3] sm:$0xf]
      %s1811 = scalar_lea.vmem %s3, 4
      %v1812 = vld [vmem:[%s1811] sm:$0xf]
      %1816 = vrot.lane.b32.xlu0 %v1807, 127
      %v1817 = vpop.permute.xlu0 %1816
      %1818 = vrot.lane.b32.xlu0 %v1808, 127
      %v1819 = vpop.permute.xlu0 %1818
      %1820 = vrot.lane.b32.xlu0 %v1809, 127
      %v1821 = vpop.permute.xlu0 %1820
      %v1822 = vsel %vm326, %v1817, %v1819
      %v1823 = vsel %vm326, %v1819, %v1821
      %v1825 = vsel %vm329, %v1812, 0
      %v1828 = vsel %vm333, %v1822, 0
      %v1831 = vsel %vm333, %v1823, 0
      %v1834 = vsel %vm333, %v1821, 0
      %1836 = vmatprep.subr.bf16.mxu0 0
      %1837 = vmatpush1.bf16.msra.mxu0 0
      %1838 = vmatprep.subr.bf16.mxu0 0
      %1839 = vmatpush1.bf16.msra.mxu0 0
      %1840 = vmatprep.subr.bf16.mxu0 0
      %1841 = vmatpush1.bf16.msra.mxu0 0
      %1842 = vmatprep.subr.bf16.mxu0 0
      %1843 = vmatpush1.bf16.msra.mxu0 0
      %1844 = vmatprep.subr.bf16.mxu0 0
      %1845 = vmatpush1.bf16.msra.mxu0 0
      %1846 = vmatprep.subr.bf16.mxu0 0
      %1847 = vmatpush1.bf16.msra.mxu0 0
      %1848 = vmatprep.subr.bf16.mxu0 0
      %1849 = vmatpush1.bf16.msra.mxu0 0
      %1850 = vmatprep.subr.bf16.mxu0 %v1831
      %1851 = vmatpush1.bf16.msra.mxu0 %v1828
      %1852 = vmatprep.subr.bf16.mxu0 0
      %1853 = vmatpush2.bf16.msra.mxu0 0
      %1854 = vmatprep.subr.bf16.mxu0 0
      %1855 = vmatpush2.bf16.msra.mxu0 0
      %1856 = vmatprep.subr.bf16.mxu0 0
      %1857 = vmatpush2.bf16.msra.mxu0 0
      %1858 = vmatprep.subr.bf16.mxu0 0
      %1859 = vmatpush2.bf16.msra.mxu0 0
      %1860 = vmatprep.subr.bf16.mxu0 0
      %1861 = vmatpush2.bf16.msra.mxu0 0
      %1862 = vmatprep.subr.bf16.mxu0 0
      %1863 = vmatpush2.bf16.msra.mxu0 0
      %1864 = vmatprep.subr.bf16.mxu0 0
      %1865 = vmatpush2.bf16.msra.mxu0 0
      %1866 = vmatprep.subr.bf16.mxu0 0
      %1867 = vmatpush2.bf16.msra.mxu0 0
      %1868 = vmatprep.mubr.bf16.mxu0 0
      %1869 = vmatmul.mubr.bf16.gmra.mxu0 %v1825
      %v1870 = vpop.f32.mrf.mxu0
      %v1871 = vadd.f32 0.0, %v1870
      %v1872 = vpop.f32.mrf.mxu0
      %v1873 = vadd.f32 0.0, %v1872
      %v1874 = vpop.f32.mrf.mxu0
      %v1875 = vpop.f32.mrf.mxu0
      %1876 = vdwg.mxu0
      %1877 = vmatprep.subr.bf16.mxu0 0
      %1878 = vmatpush1.bf16.msra.mxu0 0
      %1879 = vmatprep.subr.bf16.mxu0 0
      %1880 = vmatpush1.bf16.msra.mxu0 0
      %1881 = vmatprep.subr.bf16.mxu0 0
      %1882 = vmatpush1.bf16.msra.mxu0 0
      %1883 = vmatprep.subr.bf16.mxu0 0
      %1884 = vmatpush1.bf16.msra.mxu0 0
      %1885 = vmatprep.subr.bf16.mxu0 0
      %1886 = vmatpush1.bf16.msra.mxu0 0
      %1887 = vmatprep.subr.bf16.mxu0 0
      %1888 = vmatpush1.bf16.msra.mxu0 0
      %1889 = vmatprep.subr.bf16.mxu0 0
      %1890 = vmatpush1.bf16.msra.mxu0 0
      %1891 = vmatprep.subr.bf16.mxu0 0
      %1892 = vmatpush1.bf16.msra.mxu0 %v1834
      %1893 = vmatprep.subr.bf16.mxu0 0
      %1894 = vmatpush2.bf16.msra.mxu0 0
      %1895 = vmatprep.subr.bf16.mxu0 0
      %1896 = vmatpush2.bf16.msra.mxu0 0
      %1897 = vmatprep.subr.bf16.mxu0 0
      %1898 = vmatpush2.bf16.msra.mxu0 0
      %1899 = vmatprep.subr.bf16.mxu0 0
      %1900 = vmatpush2.bf16.msra.mxu0 0
      %1901 = vmatprep.subr.bf16.mxu0 0
      %1902 = vmatpush2.bf16.msra.mxu0 0
      %1903 = vmatprep.subr.bf16.mxu0 0
      %1904 = vmatpush2.bf16.msra.mxu0 0
      %1905 = vmatprep.subr.bf16.mxu0 0
      %1906 = vmatpush2.bf16.msra.mxu0 0
      %1907 = vmatprep.subr.bf16.mxu0 0
      %1908 = vmatpush2.bf16.msra.mxu0 0
      %1909 = vmatprep.mubr.bf16.mxu0 0
      %1910 = vmatmul.mubr.bf16.gmra.mxu0 %v1825
      %v1911 = vpop.f32.mrf.mxu0
      %v1912 = vadd.f32 0.0, %v1911
      %v1913 = vpop.f32.mrf.mxu0
      %v1914 = vpop.f32.mrf.mxu0
      %v1915 = vpop.f32.mrf.mxu0
      %1916 = vdwg.mxu0
      %v1918 = vsel %vm329, %v1810, 0
      %v1921 = vsel %vm333, %v1807, 0
      %v1924 = vsel %vm333, %v1808, 0
      %v1927 = vsel %vm333, %v1809, 0
      %1929 = vmatprep.subr.bf16.mxu0 0
      %1930 = vmatpush1.bf16.msra.mxu0 0
      %1931 = vmatprep.subr.bf16.mxu0 0
      %1932 = vmatpush1.bf16.msra.mxu0 0
      %1933 = vmatprep.subr.bf16.mxu0 0
      %1934 = vmatpush1.bf16.msra.mxu0 0
      %1935 = vmatprep.subr.bf16.mxu0 0
      %1936 = vmatpush1.bf16.msra.mxu0 0
      %1937 = vmatprep.subr.bf16.mxu0 0
      %1938 = vmatpush1.bf16.msra.mxu0 0
      %1939 = vmatprep.subr.bf16.mxu0 0
      %1940 = vmatpush1.bf16.msra.mxu0 0
      %1941 = vmatprep.subr.bf16.mxu0 0
      %1942 = vmatpush1.bf16.msra.mxu0 0
      %1943 = vmatprep.subr.bf16.mxu0 %v1924
      %1944 = vmatpush1.bf16.msra.mxu0 %v1921
      %1945 = vmatprep.subr.bf16.mxu0 0
      %1946 = vmatpush2.bf16.msra.mxu0 0
      %1947 = vmatprep.subr.bf16.mxu0 0
      %1948 = vmatpush2.bf16.msra.mxu0 0
      %1949 = vmatprep.subr.bf16.mxu0 0
      %1950 = vmatpush2.bf16.msra.mxu0 0
      %1951 = vmatprep.subr.bf16.mxu0 0
      %1952 = vmatpush2.bf16.msra.mxu0 0
      %1953 = vmatprep.subr.bf16.mxu0 0
      %1954 = vmatpush2.bf16.msra.mxu0 0
      %1955 = vmatprep.subr.bf16.mxu0 0
      %1956 = vmatpush2.bf16.msra.mxu0 0
      %1957 = vmatprep.subr.bf16.mxu0 0
      %1958 = vmatpush2.bf16.msra.mxu0 0
      %1959 = vmatprep.subr.bf16.mxu0 0
      %1960 = vmatpush2.bf16.msra.mxu0 0
      %1961 = vmatprep.mubr.bf16.mxu0 0
      %1962 = vmatmul.mubr.bf16.gmra.mxu0 %v1918
      %v1963 = vpop.f32.mrf.mxu0
      %v1964 = vadd.f32 %v1871, %v1963
      %v1965 = vpop.f32.mrf.mxu0
      %v1966 = vadd.f32 %v1873, %v1965
      %v1967 = vpop.f32.mrf.mxu0
      %v1968 = vpop.f32.mrf.mxu0
      %1969 = vdwg.mxu0
      %1970 = vmatprep.subr.bf16.mxu0 0
      %1971 = vmatpush1.bf16.msra.mxu0 0
      %1972 = vmatprep.subr.bf16.mxu0 0
      %1973 = vmatpush1.bf16.msra.mxu0 0
      %1974 = vmatprep.subr.bf16.mxu0 0
      %1975 = vmatpush1.bf16.msra.mxu0 0
      %1976 = vmatprep.subr.bf16.mxu0 0
      %1977 = vmatpush1.bf16.msra.mxu0 0
      %1978 = vmatprep.subr.bf16.mxu0 0
      %1979 = vmatpush1.bf16.msra.mxu0 0
      %1980 = vmatprep.subr.bf16.mxu0 0
      %1981 = vmatpush1.bf16.msra.mxu0 0
      %1982 = vmatprep.subr.bf16.mxu0 0
      %1983 = vmatpush1.bf16.msra.mxu0 0
      %1984 = vmatprep.subr.bf16.mxu0 0
      %1985 = vmatpush1.bf16.msra.mxu0 %v1927
      %1986 = vmatprep.subr.bf16.mxu0 0
      %1987 = vmatpush2.bf16.msra.mxu0 0
      %1988 = vmatprep.subr.bf16.mxu0 0
      %1989 = vmatpush2.bf16.msra.mxu0 0
      %1990 = vmatprep.subr.bf16.mxu0 0
      %1991 = vmatpush2.bf16.msra.mxu0 0
      %1992 = vmatprep.subr.bf16.mxu0 0
      %1993 = vmatpush2.bf16.msra.mxu0 0
      %1994 = vmatprep.subr.bf16.mxu0 0
      %1995 = vmatpush2.bf16.msra.mxu0 0
      %1996 = vmatprep.subr.bf16.mxu0 0
      %1997 = vmatpush2.bf16.msra.mxu0 0
      %1998 = vmatprep.subr.bf16.mxu0 0
      %1999 = vmatpush2.bf16.msra.mxu0 0
      %2000 = vmatprep.subr.bf16.mxu0 0
      %2001 = vmatpush2.bf16.msra.mxu0 0
      %2002 = vmatprep.mubr.bf16.mxu0 0
      %2003 = vmatmul.mubr.bf16.gmra.mxu0 %v1918
      %v2004 = vpop.f32.mrf.mxu0
      %v2005 = vadd.f32 %v1912, %v2004
      %v2006 = vpop.f32.mrf.mxu0
      %v2007 = vpop.f32.mrf.mxu0
      %v2008 = vpop.f32.mrf.mxu0
      %2009 = vdwg.mxu0
      %s2010 = scalar_lea.vmem %s3, 8
      %v2011 = vld [vmem:[%s2010] sm:$0xf]
      %2012 = vrot.lane.b32.xlu0 %v1807, 126
      %v2013 = vpop.permute.xlu0 %2012
      %2014 = vrot.lane.b32.xlu0 %v1808, 126
      %v2015 = vpop.permute.xlu0 %2014
      %2016 = vrot.lane.b32.xlu0 %v1809, 126
      %v2017 = vpop.permute.xlu0 %2016
      %v2018 = vsel %vm525, %v2013, %v2015
      %v2019 = vsel %vm525, %v2015, %v2017
      %v2021 = vsel %vm329, %v2011, 0
      %v2024 = vsel %vm333, %v2018, 0
      %v2027 = vsel %vm333, %v2019, 0
      %v2030 = vsel %vm333, %v2017, 0
      %2032 = vmatprep.subr.bf16.mxu0 0
      %2033 = vmatpush1.bf16.msra.mxu0 0
      %2034 = vmatprep.subr.bf16.mxu0 0
      %2035 = vmatpush1.bf16.msra.mxu0 0
      %2036 = vmatprep.subr.bf16.mxu0 0
      %2037 = vmatpush1.bf16.msra.mxu0 0
      %2038 = vmatprep.subr.bf16.mxu0 0
      %2039 = vmatpush1.bf16.msra.mxu0 0
      %2040 = vmatprep.subr.bf16.mxu0 0
      %2041 = vmatpush1.bf16.msra.mxu0 0
      %2042 = vmatprep.subr.bf16.mxu0 0
      %2043 = vmatpush1.bf16.msra.mxu0 0
      %2044 = vmatprep.subr.bf16.mxu0 0
      %2045 = vmatpush1.bf16.msra.mxu0 0
      %2046 = vmatprep.subr.bf16.mxu0 %v2027
      %2047 = vmatpush1.bf16.msra.mxu0 %v2024
      %2048 = vmatprep.subr.bf16.mxu0 0
      %2049 = vmatpush2.bf16.msra.mxu0 0
      %2050 = vmatprep.subr.bf16.mxu0 0
      %2051 = vmatpush2.bf16.msra.mxu0 0
      %2052 = vmatprep.subr.bf16.mxu0 0
      %2053 = vmatpush2.bf16.msra.mxu0 0
      %2054 = vmatprep.subr.bf16.mxu0 0
      %2055 = vmatpush2.bf16.msra.mxu0 0
      %2056 = vmatprep.subr.bf16.mxu0 0
      %2057 = vmatpush2.bf16.msra.mxu0 0
      %2058 = vmatprep.subr.bf16.mxu0 0
      %2059 = vmatpush2.bf16.msra.mxu0 0
      %2060 = vmatprep.subr.bf16.mxu0 0
      %2061 = vmatpush2.bf16.msra.mxu0 0
      %2062 = vmatprep.subr.bf16.mxu0 0
      %2063 = vmatpush2.bf16.msra.mxu0 0
      %2064 = vmatprep.mubr.bf16.mxu0 0
      %2065 = vmatmul.mubr.bf16.gmra.mxu0 %v2021
      %v2066 = vpop.f32.mrf.mxu0
      %v2067 = vadd.f32 0.0, %v2066
      %v2068 = vpop.f32.mrf.mxu0
      %v2069 = vadd.f32 0.0, %v2068
      %v2070 = vpop.f32.mrf.mxu0
      %v2071 = vpop.f32.mrf.mxu0
      %2072 = vdwg.mxu0
      %2073 = vmatprep.subr.bf16.mxu0 0
      %2074 = vmatpush1.bf16.msra.mxu0 0
      %2075 = vmatprep.subr.bf16.mxu0 0
      %2076 = vmatpush1.bf16.msra.mxu0 0
      %2077 = vmatprep.subr.bf16.mxu0 0
      %2078 = vmatpush1.bf16.msra.mxu0 0
      %2079 = vmatprep.subr.bf16.mxu0 0
      %2080 = vmatpush1.bf16.msra.mxu0 0
      %2081 = vmatprep.subr.bf16.mxu0 0
      %2082 = vmatpush1.bf16.msra.mxu0 0
      %2083 = vmatprep.subr.bf16.mxu0 0
      %2084 = vmatpush1.bf16.msra.mxu0 0
      %2085 = vmatprep.subr.bf16.mxu0 0
      %2086 = vmatpush1.bf16.msra.mxu0 0
      %2087 = vmatprep.subr.bf16.mxu0 0
      %2088 = vmatpush1.bf16.msra.mxu0 %v2030
      %2089 = vmatprep.subr.bf16.mxu0 0
      %2090 = vmatpush2.bf16.msra.mxu0 0
      %2091 = vmatprep.subr.bf16.mxu0 0
      %2092 = vmatpush2.bf16.msra.mxu0 0
      %2093 = vmatprep.subr.bf16.mxu0 0
      %2094 = vmatpush2.bf16.msra.mxu0 0
      %2095 = vmatprep.subr.bf16.mxu0 0
      %2096 = vmatpush2.bf16.msra.mxu0 0
      %2097 = vmatprep.subr.bf16.mxu0 0
      %2098 = vmatpush2.bf16.msra.mxu0 0
      %2099 = vmatprep.subr.bf16.mxu0 0
      %2100 = vmatpush2.bf16.msra.mxu0 0
      %2101 = vmatprep.subr.bf16.mxu0 0
      %2102 = vmatpush2.bf16.msra.mxu0 0
      %2103 = vmatprep.subr.bf16.mxu0 0
      %2104 = vmatpush2.bf16.msra.mxu0 0
      %2105 = vmatprep.mubr.bf16.mxu0 0
      %2106 = vmatmul.mubr.bf16.gmra.mxu0 %v2021
      %v2107 = vpop.f32.mrf.mxu0
      %v2108 = vadd.f32 0.0, %v2107
      %v2109 = vpop.f32.mrf.mxu0
      %v2110 = vpop.f32.mrf.mxu0
      %v2111 = vpop.f32.mrf.mxu0
      %2112 = vdwg.mxu0
      %v2113 = vadd.f32 %v1964, %v2067
      %v2114 = vadd.f32 %v1966, %v2069
      %v2115 = vadd.f32 %v2005, %v2108
      %s2116 = scalar_lea.vmem %s3, 12
      %v2117 = vld [vmem:[%s2116] sm:$0xf]
      %2118 = vrot.lane.b32.xlu0 %v1807, 110
      %v2119 = vpop.permute.xlu0 %2118
      %2120 = vrot.lane.b32.xlu0 %v1808, 110
      %v2121 = vpop.permute.xlu0 %2120
      %2122 = vrot.lane.b32.xlu0 %v1809, 110
      %v2123 = vpop.permute.xlu0 %2122
      %v2124 = vsel %vm632, %v2119, %v2121
      %v2125 = vsel %vm632, %v2121, %v2123
      %v2127 = vsel %vm329, %v2117, 0
      %v2130 = vsel %vm333, %v2124, 0
      %v2133 = vsel %vm333, %v2125, 0
      %v2136 = vsel %vm333, %v2123, 0
      %2138 = vmatprep.subr.bf16.mxu0 0
      %2139 = vmatpush1.bf16.msra.mxu0 0
      %2140 = vmatprep.subr.bf16.mxu0 0
      %2141 = vmatpush1.bf16.msra.mxu0 0
      %2142 = vmatprep.subr.bf16.mxu0 0
      %2143 = vmatpush1.bf16.msra.mxu0 0
      %2144 = vmatprep.subr.bf16.mxu0 0
      %2145 = vmatpush1.bf16.msra.mxu0 0
      %2146 = vmatprep.subr.bf16.mxu0 0
      %2147 = vmatpush1.bf16.msra.mxu0 0
      %2148 = vmatprep.subr.bf16.mxu0 0
      %2149 = vmatpush1.bf16.msra.mxu0 0
      %2150 = vmatprep.subr.bf16.mxu0 0
      %2151 = vmatpush1.bf16.msra.mxu0 0
      %2152 = vmatprep.subr.bf16.mxu0 %v2133
      %2153 = vmatpush1.bf16.msra.mxu0 %v2130
      %2154 = vmatprep.subr.bf16.mxu0 0
      %2155 = vmatpush2.bf16.msra.mxu0 0
      %2156 = vmatprep.subr.bf16.mxu0 0
      %2157 = vmatpush2.bf16.msra.mxu0 0
      %2158 = vmatprep.subr.bf16.mxu0 0
      %2159 = vmatpush2.bf16.msra.mxu0 0
      %2160 = vmatprep.subr.bf16.mxu0 0
      %2161 = vmatpush2.bf16.msra.mxu0 0
      %2162 = vmatprep.subr.bf16.mxu0 0
      %2163 = vmatpush2.bf16.msra.mxu0 0
      %2164 = vmatprep.subr.bf16.mxu0 0
      %2165 = vmatpush2.bf16.msra.mxu0 0
      %2166 = vmatprep.subr.bf16.mxu0 0
      %2167 = vmatpush2.bf16.msra.mxu0 0
      %2168 = vmatprep.subr.bf16.mxu0 0
      %2169 = vmatpush2.bf16.msra.mxu0 0
      %2170 = vmatprep.mubr.bf16.mxu0 0
      %2171 = vmatmul.mubr.bf16.gmra.mxu0 %v2127
      %v2172 = vpop.f32.mrf.mxu0
      %v2173 = vadd.f32 0.0, %v2172
      %v2174 = vpop.f32.mrf.mxu0
      %v2175 = vadd.f32 0.0, %v2174
      %v2176 = vpop.f32.mrf.mxu0
      %v2177 = vpop.f32.mrf.mxu0
      %2178 = vdwg.mxu0
      %2179 = vmatprep.subr.bf16.mxu0 0
      %2180 = vmatpush1.bf16.msra.mxu0 0
      %2181 = vmatprep.subr.bf16.mxu0 0
      %2182 = vmatpush1.bf16.msra.mxu0 0
      %2183 = vmatprep.subr.bf16.mxu0 0
      %2184 = vmatpush1.bf16.msra.mxu0 0
      %2185 = vmatprep.subr.bf16.mxu0 0
      %2186 = vmatpush1.bf16.msra.mxu0 0
      %2187 = vmatprep.subr.bf16.mxu0 0
      %2188 = vmatpush1.bf16.msra.mxu0 0
      %2189 = vmatprep.subr.bf16.mxu0 0
      %2190 = vmatpush1.bf16.msra.mxu0 0
      %2191 = vmatprep.subr.bf16.mxu0 0
      %2192 = vmatpush1.bf16.msra.mxu0 0
      %2193 = vmatprep.subr.bf16.mxu0 0
      %2194 = vmatpush1.bf16.msra.mxu0 %v2136
      %2195 = vmatprep.subr.bf16.mxu0 0
      %2196 = vmatpush2.bf16.msra.mxu0 0
      %2197 = vmatprep.subr.bf16.mxu0 0
      %2198 = vmatpush2.bf16.msra.mxu0 0
      %2199 = vmatprep.subr.bf16.mxu0 0
      %2200 = vmatpush2.bf16.msra.mxu0 0
      %2201 = vmatprep.subr.bf16.mxu0 0
      %2202 = vmatpush2.bf16.msra.mxu0 0
      %2203 = vmatprep.subr.bf16.mxu0 0
      %2204 = vmatpush2.bf16.msra.mxu0 0
      %2205 = vmatprep.subr.bf16.mxu0 0
      %2206 = vmatpush2.bf16.msra.mxu0 0
      %2207 = vmatprep.subr.bf16.mxu0 0
      %2208 = vmatpush2.bf16.msra.mxu0 0
      %2209 = vmatprep.subr.bf16.mxu0 0
      %2210 = vmatpush2.bf16.msra.mxu0 0
      %2211 = vmatprep.mubr.bf16.mxu0 0
      %2212 = vmatmul.mubr.bf16.gmra.mxu0 %v2127
      %v2213 = vpop.f32.mrf.mxu0
      %v2214 = vadd.f32 0.0, %v2213
      %v2215 = vpop.f32.mrf.mxu0
      %v2216 = vpop.f32.mrf.mxu0
      %v2217 = vpop.f32.mrf.mxu0
      %2218 = vdwg.mxu0
      %v2219 = vadd.f32 %v2113, %v2173
      %v2220 = vadd.f32 %v2114, %v2175
      %v2221 = vadd.f32 %v2115, %v2214
      %s2222 = scalar_lea.vmem %s3, 16
      %v2223 = vld [vmem:[%s2222] sm:$0xf]
      %2224 = vrot.lane.b32.xlu0 %v1807, 109
      %v2225 = vpop.permute.xlu0 %2224
      %2226 = vrot.lane.b32.xlu0 %v1808, 109
      %v2227 = vpop.permute.xlu0 %2226
      %2228 = vrot.lane.b32.xlu0 %v1809, 109
      %v2229 = vpop.permute.xlu0 %2228
      %v2230 = vsel %vm739, %v2225, %v2227
      %v2231 = vsel %vm739, %v2227, %v2229
      %v2233 = vsel %vm329, %v2223, 0
      %v2236 = vsel %vm333, %v2230, 0
      %v2239 = vsel %vm333, %v2231, 0
      %v2242 = vsel %vm333, %v2229, 0
      %2244 = vmatprep.subr.bf16.mxu0 0
      %2245 = vmatpush1.bf16.msra.mxu0 0
      %2246 = vmatprep.subr.bf16.mxu0 0
      %2247 = vmatpush1.bf16.msra.mxu0 0
      %2248 = vmatprep.subr.bf16.mxu0 0
      %2249 = vmatpush1.bf16.msra.mxu0 0
      %2250 = vmatprep.subr.bf16.mxu0 0
      %2251 = vmatpush1.bf16.msra.mxu0 0
      %2252 = vmatprep.subr.bf16.mxu0 0
      %2253 = vmatpush1.bf16.msra.mxu0 0
      %2254 = vmatprep.subr.bf16.mxu0 0
      %2255 = vmatpush1.bf16.msra.mxu0 0
      %2256 = vmatprep.subr.bf16.mxu0 0
      %2257 = vmatpush1.bf16.msra.mxu0 0
      %2258 = vmatprep.subr.bf16.mxu0 %v2239
      %2259 = vmatpush1.bf16.msra.mxu0 %v2236
      %2260 = vmatprep.subr.bf16.mxu0 0
      %2261 = vmatpush2.bf16.msra.mxu0 0
      %2262 = vmatprep.subr.bf16.mxu0 0
      %2263 = vmatpush2.bf16.msra.mxu0 0
      %2264 = vmatprep.subr.bf16.mxu0 0
      %2265 = vmatpush2.bf16.msra.mxu0 0
      %2266 = vmatprep.subr.bf16.mxu0 0
      %2267 = vmatpush2.bf16.msra.mxu0 0
      %2268 = vmatprep.subr.bf16.mxu0 0
      %2269 = vmatpush2.bf16.msra.mxu0 0
      %2270 = vmatprep.subr.bf16.mxu0 0
      %2271 = vmatpush2.bf16.msra.mxu0 0
      %2272 = vmatprep.subr.bf16.mxu0 0
      %2273 = vmatpush2.bf16.msra.mxu0 0
      %2274 = vmatprep.subr.bf16.mxu0 0
      %2275 = vmatpush2.bf16.msra.mxu0 0
      %2276 = vmatprep.mubr.bf16.mxu0 0
      %2277 = vmatmul.mubr.bf16.gmra.mxu0 %v2233
      %v2278 = vpop.f32.mrf.mxu0
      %v2279 = vadd.f32 0.0, %v2278
      %v2280 = vpop.f32.mrf.mxu0
      %v2281 = vadd.f32 0.0, %v2280
      %v2282 = vpop.f32.mrf.mxu0
      %v2283 = vpop.f32.mrf.mxu0
      %2284 = vdwg.mxu0
      %2285 = vmatprep.subr.bf16.mxu0 0
      %2286 = vmatpush1.bf16.msra.mxu0 0
      %2287 = vmatprep.subr.bf16.mxu0 0
      %2288 = vmatpush1.bf16.msra.mxu0 0
      %2289 = vmatprep.subr.bf16.mxu0 0
      %2290 = vmatpush1.bf16.msra.mxu0 0
      %2291 = vmatprep.subr.bf16.mxu0 0
      %2292 = vmatpush1.bf16.msra.mxu0 0
      %2293 = vmatprep.subr.bf16.mxu0 0
      %2294 = vmatpush1.bf16.msra.mxu0 0
      %2295 = vmatprep.subr.bf16.mxu0 0
      %2296 = vmatpush1.bf16.msra.mxu0 0
      %2297 = vmatprep.subr.bf16.mxu0 0
      %2298 = vmatpush1.bf16.msra.mxu0 0
      %2299 = vmatprep.subr.bf16.mxu0 0
      %2300 = vmatpush1.bf16.msra.mxu0 %v2242
      %2301 = vmatprep.subr.bf16.mxu0 0
      %2302 = vmatpush2.bf16.msra.mxu0 0
      %2303 = vmatprep.subr.bf16.mxu0 0
      %2304 = vmatpush2.bf16.msra.mxu0 0
      %2305 = vmatprep.subr.bf16.mxu0 0
      %2306 = vmatpush2.bf16.msra.mxu0 0
      %2307 = vmatprep.subr.bf16.mxu0 0
      %2308 = vmatpush2.bf16.msra.mxu0 0
      %2309 = vmatprep.subr.bf16.mxu0 0
      %2310 = vmatpush2.bf16.msra.mxu0 0
      %2311 = vmatprep.subr.bf16.mxu0 0
      %2312 = vmatpush2.bf16.msra.mxu0 0
      %2313 = vmatprep.subr.bf16.mxu0 0
      %2314 = vmatpush2.bf16.msra.mxu0 0
      %2315 = vmatprep.subr.bf16.mxu0 0
      %2316 = vmatpush2.bf16.msra.mxu0 0
      %2317 = vmatprep.mubr.bf16.mxu0 0
      %2318 = vmatmul.mubr.bf16.gmra.mxu0 %v2233
      %v2319 = vpop.f32.mrf.mxu0
      %v2320 = vadd.f32 0.0, %v2319
      %v2321 = vpop.f32.mrf.mxu0
      %v2322 = vpop.f32.mrf.mxu0
      %v2323 = vpop.f32.mrf.mxu0
      %2324 = vdwg.mxu0
      %v2325 = vadd.f32 %v2219, %v2279
      %v2326 = vadd.f32 %v2220, %v2281
      %v2327 = vadd.f32 %v2221, %v2320
      %s2328 = scalar_lea.vmem %s3, 20
      %v2329 = vld [vmem:[%s2328] sm:$0xf]
      %2330 = vrot.lane.b32.xlu0 %v1807, 108
      %v2331 = vpop.permute.xlu0 %2330
      %2332 = vrot.lane.b32.xlu0 %v1808, 108
      %v2333 = vpop.permute.xlu0 %2332
      %2334 = vrot.lane.b32.xlu0 %v1809, 108
      %v2335 = vpop.permute.xlu0 %2334
      %v2336 = vsel %vm846, %v2331, %v2333
      %v2337 = vsel %vm846, %v2333, %v2335
      %v2339 = vsel %vm329, %v2329, 0
      %v2342 = vsel %vm333, %v2336, 0
      %v2345 = vsel %vm333, %v2337, 0
      %v2348 = vsel %vm333, %v2335, 0
      %2350 = vmatprep.subr.bf16.mxu0 0
      %2351 = vmatpush1.bf16.msra.mxu0 0
      %2352 = vmatprep.subr.bf16.mxu0 0
      %2353 = vmatpush1.bf16.msra.mxu0 0
      %2354 = vmatprep.subr.bf16.mxu0 0
      %2355 = vmatpush1.bf16.msra.mxu0 0
      %2356 = vmatprep.subr.bf16.mxu0 0
      %2357 = vmatpush1.bf16.msra.mxu0 0
      %2358 = vmatprep.subr.bf16.mxu0 0
      %2359 = vmatpush1.bf16.msra.mxu0 0
      %2360 = vmatprep.subr.bf16.mxu0 0
      %2361 = vmatpush1.bf16.msra.mxu0 0
      %2362 = vmatprep.subr.bf16.mxu0 0
      %2363 = vmatpush1.bf16.msra.mxu0 0
      %2364 = vmatprep.subr.bf16.mxu0 %v2345
      %2365 = vmatpush1.bf16.msra.mxu0 %v2342
      %2366 = vmatprep.subr.bf16.mxu0 0
      %2367 = vmatpush2.bf16.msra.mxu0 0
      %2368 = vmatprep.subr.bf16.mxu0 0
      %2369 = vmatpush2.bf16.msra.mxu0 0
      %2370 = vmatprep.subr.bf16.mxu0 0
      %2371 = vmatpush2.bf16.msra.mxu0 0
      %2372 = vmatprep.subr.bf16.mxu0 0
      %2373 = vmatpush2.bf16.msra.mxu0 0
      %2374 = vmatprep.subr.bf16.mxu0 0
      %2375 = vmatpush2.bf16.msra.mxu0 0
      %2376 = vmatprep.subr.bf16.mxu0 0
      %2377 = vmatpush2.bf16.msra.mxu0 0
      %2378 = vmatprep.subr.bf16.mxu0 0
      %2379 = vmatpush2.bf16.msra.mxu0 0
      %2380 = vmatprep.subr.bf16.mxu0 0
      %2381 = vmatpush2.bf16.msra.mxu0 0
      %2382 = vmatprep.mubr.bf16.mxu0 0
      %2383 = vmatmul.mubr.bf16.gmra.mxu0 %v2339
      %v2384 = vpop.f32.mrf.mxu0
      %v2385 = vadd.f32 0.0, %v2384
      %v2386 = vpop.f32.mrf.mxu0
      %v2387 = vadd.f32 0.0, %v2386
      %v2388 = vpop.f32.mrf.mxu0
      %v2389 = vpop.f32.mrf.mxu0
      %2390 = vdwg.mxu0
      %2391 = vmatprep.subr.bf16.mxu0 0
      %2392 = vmatpush1.bf16.msra.mxu0 0
      %2393 = vmatprep.subr.bf16.mxu0 0
      %2394 = vmatpush1.bf16.msra.mxu0 0
      %2395 = vmatprep.subr.bf16.mxu0 0
      %2396 = vmatpush1.bf16.msra.mxu0 0
      %2397 = vmatprep.subr.bf16.mxu0 0
      %2398 = vmatpush1.bf16.msra.mxu0 0
      %2399 = vmatprep.subr.bf16.mxu0 0
      %2400 = vmatpush1.bf16.msra.mxu0 0
      %2401 = vmatprep.subr.bf16.mxu0 0
      %2402 = vmatpush1.bf16.msra.mxu0 0
      %2403 = vmatprep.subr.bf16.mxu0 0
      %2404 = vmatpush1.bf16.msra.mxu0 0
      %2405 = vmatprep.subr.bf16.mxu0 0
      %2406 = vmatpush1.bf16.msra.mxu0 %v2348
      %2407 = vmatprep.subr.bf16.mxu0 0
      %2408 = vmatpush2.bf16.msra.mxu0 0
      %2409 = vmatprep.subr.bf16.mxu0 0
      %2410 = vmatpush2.bf16.msra.mxu0 0
      %2411 = vmatprep.subr.bf16.mxu0 0
      %2412 = vmatpush2.bf16.msra.mxu0 0
      %2413 = vmatprep.subr.bf16.mxu0 0
      %2414 = vmatpush2.bf16.msra.mxu0 0
      %2415 = vmatprep.subr.bf16.mxu0 0
      %2416 = vmatpush2.bf16.msra.mxu0 0
      %2417 = vmatprep.subr.bf16.mxu0 0
      %2418 = vmatpush2.bf16.msra.mxu0 0
      %2419 = vmatprep.subr.bf16.mxu0 0
      %2420 = vmatpush2.bf16.msra.mxu0 0
      %2421 = vmatprep.subr.bf16.mxu0 0
      %2422 = vmatpush2.bf16.msra.mxu0 0
      %2423 = vmatprep.mubr.bf16.mxu0 0
      %2424 = vmatmul.mubr.bf16.gmra.mxu0 %v2339
      %v2425 = vpop.f32.mrf.mxu0
      %v2426 = vadd.f32 0.0, %v2425
      %v2427 = vpop.f32.mrf.mxu0
      %v2428 = vpop.f32.mrf.mxu0
      %v2429 = vpop.f32.mrf.mxu0
      %2430 = vdwg.mxu0
      %v2431 = vadd.f32 %v2325, %v2385
      %v2432 = vadd.f32 %v2326, %v2387
      %v2433 = vadd.f32 %v2327, %v2426
      %s2434 = scalar_lea.vmem %s3, 24
      %v2435 = vld [vmem:[%s2434] sm:$0xf]
      %2436 = vrot.lane.b32.xlu0 %v1807, 92
      %v2437 = vpop.permute.xlu0 %2436
      %2438 = vrot.lane.b32.xlu0 %v1808, 92
      %v2439 = vpop.permute.xlu0 %2438
      %2440 = vrot.lane.b32.xlu0 %v1809, 92
      %v2441 = vpop.permute.xlu0 %2440
      %v2442 = vsel %vm953, %v2437, %v2439
      %v2443 = vsel %vm953, %v2439, %v2441
      %v2445 = vsel %vm329, %v2435, 0
      %v2448 = vsel %vm333, %v2442, 0
      %v2451 = vsel %vm333, %v2443, 0
      %v2454 = vsel %vm333, %v2441, 0
      %2456 = vmatprep.subr.bf16.mxu0 0
      %2457 = vmatpush1.bf16.msra.mxu0 0
      %2458 = vmatprep.subr.bf16.mxu0 0
      %2459 = vmatpush1.bf16.msra.mxu0 0
      %2460 = vmatprep.subr.bf16.mxu0 0
      %2461 = vmatpush1.bf16.msra.mxu0 0
      %2462 = vmatprep.subr.bf16.mxu0 0
      %2463 = vmatpush1.bf16.msra.mxu0 0
      %2464 = vmatprep.subr.bf16.mxu0 0
      %2465 = vmatpush1.bf16.msra.mxu0 0
      %2466 = vmatprep.subr.bf16.mxu0 0
      %2467 = vmatpush1.bf16.msra.mxu0 0
      %2468 = vmatprep.subr.bf16.mxu0 0
      %2469 = vmatpush1.bf16.msra.mxu0 0
      %2470 = vmatprep.subr.bf16.mxu0 %v2451
      %2471 = vmatpush1.bf16.msra.mxu0 %v2448
      %2472 = vmatprep.subr.bf16.mxu0 0
      %2473 = vmatpush2.bf16.msra.mxu0 0
      %2474 = vmatprep.subr.bf16.mxu0 0
      %2475 = vmatpush2.bf16.msra.mxu0 0
      %2476 = vmatprep.subr.bf16.mxu0 0
      %2477 = vmatpush2.bf16.msra.mxu0 0
      %2478 = vmatprep.subr.bf16.mxu0 0
      %2479 = vmatpush2.bf16.msra.mxu0 0
      %2480 = vmatprep.subr.bf16.mxu0 0
      %2481 = vmatpush2.bf16.msra.mxu0 0
      %2482 = vmatprep.subr.bf16.mxu0 0
      %2483 = vmatpush2.bf16.msra.mxu0 0
      %2484 = vmatprep.subr.bf16.mxu0 0
      %2485 = vmatpush2.bf16.msra.mxu0 0
      %2486 = vmatprep.subr.bf16.mxu0 0
      %2487 = vmatpush2.bf16.msra.mxu0 0
      %2488 = vmatprep.mubr.bf16.mxu0 0
      %2489 = vmatmul.mubr.bf16.gmra.mxu0 %v2445
      %v2490 = vpop.f32.mrf.mxu0
      %v2491 = vadd.f32 0.0, %v2490
      %v2492 = vpop.f32.mrf.mxu0
      %v2493 = vadd.f32 0.0, %v2492
      %v2494 = vpop.f32.mrf.mxu0
      %v2495 = vpop.f32.mrf.mxu0
      %2496 = vdwg.mxu0
      %2497 = vmatprep.subr.bf16.mxu0 0
      %2498 = vmatpush1.bf16.msra.mxu0 0
      %2499 = vmatprep.subr.bf16.mxu0 0
      %2500 = vmatpush1.bf16.msra.mxu0 0
      %2501 = vmatprep.subr.bf16.mxu0 0
      %2502 = vmatpush1.bf16.msra.mxu0 0
      %2503 = vmatprep.subr.bf16.mxu0 0
      %2504 = vmatpush1.bf16.msra.mxu0 0
      %2505 = vmatprep.subr.bf16.mxu0 0
      %2506 = vmatpush1.bf16.msra.mxu0 0
      %2507 = vmatprep.subr.bf16.mxu0 0
      %2508 = vmatpush1.bf16.msra.mxu0 0
      %2509 = vmatprep.subr.bf16.mxu0 0
      %2510 = vmatpush1.bf16.msra.mxu0 0
      %2511 = vmatprep.subr.bf16.mxu0 0
      %2512 = vmatpush1.bf16.msra.mxu0 %v2454
      %2513 = vmatprep.subr.bf16.mxu0 0
      %2514 = vmatpush2.bf16.msra.mxu0 0
      %2515 = vmatprep.subr.bf16.mxu0 0
      %2516 = vmatpush2.bf16.msra.mxu0 0
      %2517 = vmatprep.subr.bf16.mxu0 0
      %2518 = vmatpush2.bf16.msra.mxu0 0
      %2519 = vmatprep.subr.bf16.mxu0 0
      %2520 = vmatpush2.bf16.msra.mxu0 0
      %2521 = vmatprep.subr.bf16.mxu0 0
      %2522 = vmatpush2.bf16.msra.mxu0 0
      %2523 = vmatprep.subr.bf16.mxu0 0
      %2524 = vmatpush2.bf16.msra.mxu0 0
      %2525 = vmatprep.subr.bf16.mxu0 0
      %2526 = vmatpush2.bf16.msra.mxu0 0
      %2527 = vmatprep.subr.bf16.mxu0 0
      %2528 = vmatpush2.bf16.msra.mxu0 0
      %2529 = vmatprep.mubr.bf16.mxu0 0
      %2530 = vmatmul.mubr.bf16.gmra.mxu0 %v2445
      %v2531 = vpop.f32.mrf.mxu0
      %v2532 = vadd.f32 0.0, %v2531
      %v2533 = vpop.f32.mrf.mxu0
      %v2534 = vpop.f32.mrf.mxu0
      %v2535 = vpop.f32.mrf.mxu0
      %2536 = vdwg.mxu0
      %v2537 = vadd.f32 %v2431, %v2491
      %v2538 = vadd.f32 %v2432, %v2493
      %v2539 = vadd.f32 %v2433, %v2532
      %s2540 = scalar_lea.vmem %s3, 28
      %v2541 = vld [vmem:[%s2540] sm:$0xf]
      %2542 = vrot.lane.b32.xlu0 %v1807, 91
      %v2543 = vpop.permute.xlu0 %2542
      %2544 = vrot.lane.b32.xlu0 %v1808, 91
      %v2545 = vpop.permute.xlu0 %2544
      %2546 = vrot.lane.b32.xlu0 %v1809, 91
      %v2547 = vpop.permute.xlu0 %2546
      %v2548 = vsel %vm1060, %v2543, %v2545
      %v2549 = vsel %vm1060, %v2545, %v2547
      %v2551 = vsel %vm329, %v2541, 0
      %v2554 = vsel %vm333, %v2548, 0
      %v2557 = vsel %vm333, %v2549, 0
      %v2560 = vsel %vm333, %v2547, 0
      %2562 = vmatprep.subr.bf16.mxu0 0
      %2563 = vmatpush1.bf16.msra.mxu0 0
      %2564 = vmatprep.subr.bf16.mxu0 0
      %2565 = vmatpush1.bf16.msra.mxu0 0
      %2566 = vmatprep.subr.bf16.mxu0 0
      %2567 = vmatpush1.bf16.msra.mxu0 0
      %2568 = vmatprep.subr.bf16.mxu0 0
      %2569 = vmatpush1.bf16.msra.mxu0 0
      %2570 = vmatprep.subr.bf16.mxu0 0
      %2571 = vmatpush1.bf16.msra.mxu0 0
      %2572 = vmatprep.subr.bf16.mxu0 0
      %2573 = vmatpush1.bf16.msra.mxu0 0
      %2574 = vmatprep.subr.bf16.mxu0 0
      %2575 = vmatpush1.bf16.msra.mxu0 0
      %2576 = vmatprep.subr.bf16.mxu0 %v2557
      %2577 = vmatpush1.bf16.msra.mxu0 %v2554
      %2578 = vmatprep.subr.bf16.mxu0 0
      %2579 = vmatpush2.bf16.msra.mxu0 0
      %2580 = vmatprep.subr.bf16.mxu0 0
      %2581 = vmatpush2.bf16.msra.mxu0 0
      %2582 = vmatprep.subr.bf16.mxu0 0
      %2583 = vmatpush2.bf16.msra.mxu0 0
      %2584 = vmatprep.subr.bf16.mxu0 0
      %2585 = vmatpush2.bf16.msra.mxu0 0
      %2586 = vmatprep.subr.bf16.mxu0 0
      %2587 = vmatpush2.bf16.msra.mxu0 0
      %2588 = vmatprep.subr.bf16.mxu0 0
      %2589 = vmatpush2.bf16.msra.mxu0 0
      %2590 = vmatprep.subr.bf16.mxu0 0
      %2591 = vmatpush2.bf16.msra.mxu0 0
      %2592 = vmatprep.subr.bf16.mxu0 0
      %2593 = vmatpush2.bf16.msra.mxu0 0
      %2594 = vmatprep.mubr.bf16.mxu0 0
      %2595 = vmatmul.mubr.bf16.gmra.mxu0 %v2551
      %v2596 = vpop.f32.mrf.mxu0
      %v2597 = vadd.f32 0.0, %v2596
      %v2598 = vpop.f32.mrf.mxu0
      %v2599 = vadd.f32 0.0, %v2598
      %v2600 = vpop.f32.mrf.mxu0
      %v2601 = vpop.f32.mrf.mxu0
      %2602 = vdwg.mxu0
      %2603 = vmatprep.subr.bf16.mxu0 0
      %2604 = vmatpush1.bf16.msra.mxu0 0
      %2605 = vmatprep.subr.bf16.mxu0 0
      %2606 = vmatpush1.bf16.msra.mxu0 0
      %2607 = vmatprep.subr.bf16.mxu0 0
      %2608 = vmatpush1.bf16.msra.mxu0 0
      %2609 = vmatprep.subr.bf16.mxu0 0
      %2610 = vmatpush1.bf16.msra.mxu0 0
      %2611 = vmatprep.subr.bf16.mxu0 0
      %2612 = vmatpush1.bf16.msra.mxu0 0
      %2613 = vmatprep.subr.bf16.mxu0 0
      %2614 = vmatpush1.bf16.msra.mxu0 0
      %2615 = vmatprep.subr.bf16.mxu0 0
      %2616 = vmatpush1.bf16.msra.mxu0 0
      %2617 = vmatprep.subr.bf16.mxu0 0
      %2618 = vmatpush1.bf16.msra.mxu0 %v2560
      %2619 = vmatprep.subr.bf16.mxu0 0
      %2620 = vmatpush2.bf16.msra.mxu0 0
      %2621 = vmatprep.subr.bf16.mxu0 0
      %2622 = vmatpush2.bf16.msra.mxu0 0
      %2623 = vmatprep.subr.bf16.mxu0 0
      %2624 = vmatpush2.bf16.msra.mxu0 0
      %2625 = vmatprep.subr.bf16.mxu0 0
      %2626 = vmatpush2.bf16.msra.mxu0 0
      %2627 = vmatprep.subr.bf16.mxu0 0
      %2628 = vmatpush2.bf16.msra.mxu0 0
      %2629 = vmatprep.subr.bf16.mxu0 0
      %2630 = vmatpush2.bf16.msra.mxu0 0
      %2631 = vmatprep.subr.bf16.mxu0 0
      %2632 = vmatpush2.bf16.msra.mxu0 0
      %2633 = vmatprep.subr.bf16.mxu0 0
      %2634 = vmatpush2.bf16.msra.mxu0 0
      %2635 = vmatprep.mubr.bf16.mxu0 0
      %2636 = vmatmul.mubr.bf16.gmra.mxu0 %v2551
      %v2637 = vpop.f32.mrf.mxu0
      %v2638 = vadd.f32 0.0, %v2637
      %v2639 = vpop.f32.mrf.mxu0
      %v2640 = vpop.f32.mrf.mxu0
      %v2641 = vpop.f32.mrf.mxu0
      %2642 = vdwg.mxu0
      %v2643 = vadd.f32 %v2537, %v2597
      %v2644 = vadd.f32 %v2538, %v2599
      %v2645 = vadd.f32 %v2539, %v2638
      %s2646 = scalar_lea.vmem %s3, 32
      %v2647 = vld [vmem:[%s2646] sm:$0xf]
      %2648 = vrot.lane.b32.xlu0 %v1807, 90
      %v2649 = vpop.permute.xlu0 %2648
      %2650 = vrot.lane.b32.xlu0 %v1808, 90
      %v2651 = vpop.permute.xlu0 %2650
      %2652 = vrot.lane.b32.xlu0 %v1809, 90
      %v2653 = vpop.permute.xlu0 %2652
      %v2654 = vsel %vm1167, %v2649, %v2651
      %v2655 = vsel %vm1167, %v2651, %v2653
      %v2657 = vsel %vm329, %v2647, 0
      %v2660 = vsel %vm333, %v2654, 0
      %v2663 = vsel %vm333, %v2655, 0
      %v2666 = vsel %vm333, %v2653, 0
      %2668 = vmatprep.subr.bf16.mxu0 0
      %2669 = vmatpush1.bf16.msra.mxu0 0
      %2670 = vmatprep.subr.bf16.mxu0 0
      %2671 = vmatpush1.bf16.msra.mxu0 0
      %2672 = vmatprep.subr.bf16.mxu0 0
      %2673 = vmatpush1.bf16.msra.mxu0 0
      %2674 = vmatprep.subr.bf16.mxu0 0
      %2675 = vmatpush1.bf16.msra.mxu0 0
      %2676 = vmatprep.subr.bf16.mxu0 0
      %2677 = vmatpush1.bf16.msra.mxu0 0
      %2678 = vmatprep.subr.bf16.mxu0 0
      %2679 = vmatpush1.bf16.msra.mxu0 0
      %2680 = vmatprep.subr.bf16.mxu0 0
      %2681 = vmatpush1.bf16.msra.mxu0 0
      %2682 = vmatprep.subr.bf16.mxu0 %v2663
      %2683 = vmatpush1.bf16.msra.mxu0 %v2660
      %2684 = vmatprep.subr.bf16.mxu0 0
      %2685 = vmatpush2.bf16.msra.mxu0 0
      %2686 = vmatprep.subr.bf16.mxu0 0
      %2687 = vmatpush2.bf16.msra.mxu0 0
      %2688 = vmatprep.subr.bf16.mxu0 0
      %2689 = vmatpush2.bf16.msra.mxu0 0
      %2690 = vmatprep.subr.bf16.mxu0 0
      %2691 = vmatpush2.bf16.msra.mxu0 0
      %2692 = vmatprep.subr.bf16.mxu0 0
      %2693 = vmatpush2.bf16.msra.mxu0 0
      %2694 = vmatprep.subr.bf16.mxu0 0
      %2695 = vmatpush2.bf16.msra.mxu0 0
      %2696 = vmatprep.subr.bf16.mxu0 0
      %2697 = vmatpush2.bf16.msra.mxu0 0
      %2698 = vmatprep.subr.bf16.mxu0 0
      %2699 = vmatpush2.bf16.msra.mxu0 0
      %2700 = vmatprep.mubr.bf16.mxu0 0
      %2701 = vmatmul.mubr.bf16.gmra.mxu0 %v2657
      %v2702 = vpop.f32.mrf.mxu0
      %v2703 = vadd.f32 0.0, %v2702
      %v2704 = vpop.f32.mrf.mxu0
      %v2705 = vadd.f32 0.0, %v2704
      %v2706 = vpop.f32.mrf.mxu0
      %v2707 = vpop.f32.mrf.mxu0
      %2708 = vdwg.mxu0
      %2709 = vmatprep.subr.bf16.mxu0 0
      %2710 = vmatpush1.bf16.msra.mxu0 0
      %2711 = vmatprep.subr.bf16.mxu0 0
      %2712 = vmatpush1.bf16.msra.mxu0 0
      %2713 = vmatprep.subr.bf16.mxu0 0
      %2714 = vmatpush1.bf16.msra.mxu0 0
      %2715 = vmatprep.subr.bf16.mxu0 0
      %2716 = vmatpush1.bf16.msra.mxu0 0
      %2717 = vmatprep.subr.bf16.mxu0 0
      %2718 = vmatpush1.bf16.msra.mxu0 0
      %2719 = vmatprep.subr.bf16.mxu0 0
      %2720 = vmatpush1.bf16.msra.mxu0 0
      %2721 = vmatprep.subr.bf16.mxu0 0
      %2722 = vmatpush1.bf16.msra.mxu0 0
      %2723 = vmatprep.subr.bf16.mxu0 0
      %2724 = vmatpush1.bf16.msra.mxu0 %v2666
      %2725 = vmatprep.subr.bf16.mxu0 0
      %2726 = vmatpush2.bf16.msra.mxu0 0
      %2727 = vmatprep.subr.bf16.mxu0 0
      %2728 = vmatpush2.bf16.msra.mxu0 0
      %2729 = vmatprep.subr.bf16.mxu0 0
      %2730 = vmatpush2.bf16.msra.mxu0 0
      %2731 = vmatprep.subr.bf16.mxu0 0
      %2732 = vmatpush2.bf16.msra.mxu0 0
      %2733 = vmatprep.subr.bf16.mxu0 0
      %2734 = vmatpush2.bf16.msra.mxu0 0
      %2735 = vmatprep.subr.bf16.mxu0 0
      %2736 = vmatpush2.bf16.msra.mxu0 0
      %2737 = vmatprep.subr.bf16.mxu0 0
      %2738 = vmatpush2.bf16.msra.mxu0 0
      %2739 = vmatprep.subr.bf16.mxu0 0
      %2740 = vmatpush2.bf16.msra.mxu0 0
      %2741 = vmatprep.mubr.bf16.mxu0 0
      %2742 = vmatmul.mubr.bf16.gmra.mxu0 %v2657
      %v2743 = vpop.f32.mrf.mxu0
      %v2744 = vadd.f32 0.0, %v2743
      %v2745 = vpop.f32.mrf.mxu0
      %v2746 = vpop.f32.mrf.mxu0
      %v2747 = vpop.f32.mrf.mxu0
      %2748 = vdwg.mxu0
      %v2749 = vadd.f32 %v2643, %v2703
      %v2750 = vadd.f32 %v2644, %v2705
      %v2751 = vadd.f32 %v2645, %v2744
      %v2752 = vld [vmem:[%s4] sm:$0xff]
      %2754 = vset.pattern.permute.xlu0 0
      %2755 = vperm.xlu0 %2754, %v2752
      %v2756 = vpop.permute.xlu0 %2755
      %v2758 = vadd.f32 %v2749, %v2756
      %v2759 = vadd.f32 %v2750, %v2756
      %v2760 = vadd.f32 %v2751, %v2756
      %v2761 = vld [vmem:[%s7] sm:$0xf]
      %v2763 = vsel %vm329, %v2761, 0
      %2765 = vmatprep.subr.bf16.mxu0 0
      %2766 = vmatpush1.bf16.msra.mxu0 0
      %2767 = vmatprep.subr.bf16.mxu0 0
      %2768 = vmatpush1.bf16.msra.mxu0 0
      %2769 = vmatprep.subr.bf16.mxu0 0
      %2770 = vmatpush1.bf16.msra.mxu0 0
      %2771 = vmatprep.subr.bf16.mxu0 0
      %2772 = vmatpush1.bf16.msra.mxu0 0
      %2773 = vmatprep.subr.bf16.mxu0 0
      %2774 = vmatpush1.bf16.msra.mxu0 0
      %2775 = vmatprep.subr.bf16.mxu0 0
      %2776 = vmatpush1.bf16.msra.mxu0 0
      %2777 = vmatprep.subr.bf16.mxu0 0
      %2778 = vmatpush1.bf16.msra.mxu0 0
      %2779 = vmatprep.subr.bf16.mxu0 %v749
      %2780 = vmatpush1.bf16.msra.mxu0 %v746
      %2781 = vmatprep.subr.bf16.mxu0 0
      %2782 = vmatpush2.bf16.msra.mxu0 0
      %2783 = vmatprep.subr.bf16.mxu0 0
      %2784 = vmatpush2.bf16.msra.mxu0 0
      %2785 = vmatprep.subr.bf16.mxu0 0
      %2786 = vmatpush2.bf16.msra.mxu0 0
      %2787 = vmatprep.subr.bf16.mxu0 0
      %2788 = vmatpush2.bf16.msra.mxu0 0
      %2789 = vmatprep.subr.bf16.mxu0 0
      %2790 = vmatpush2.bf16.msra.mxu0 0
      %2791 = vmatprep.subr.bf16.mxu0 0
      %2792 = vmatpush2.bf16.msra.mxu0 0
      %2793 = vmatprep.subr.bf16.mxu0 0
      %2794 = vmatpush2.bf16.msra.mxu0 0
      %2795 = vmatprep.subr.bf16.mxu0 0
      %2796 = vmatpush2.bf16.msra.mxu0 0
      %2797 = vmatprep.mubr.bf16.mxu0 0
      %2798 = vmatmul.mubr.bf16.gmra.mxu0 %v2763
      %v2799 = vpop.f32.mrf.mxu0
      %v2800 = vadd.f32 0.0, %v2799
      %v2801 = vpop.f32.mrf.mxu0
      %v2802 = vadd.f32 0.0, %v2801
      %v2803 = vpop.f32.mrf.mxu0
      %v2804 = vpop.f32.mrf.mxu0
      %2805 = vdwg.mxu0
      %2806 = vmatprep.subr.bf16.mxu0 0
      %2807 = vmatpush1.bf16.msra.mxu0 0
      %2808 = vmatprep.subr.bf16.mxu0 0
      %2809 = vmatpush1.bf16.msra.mxu0 0
      %2810 = vmatprep.subr.bf16.mxu0 0
      %2811 = vmatpush1.bf16.msra.mxu0 0
      %2812 = vmatprep.subr.bf16.mxu0 0
      %2813 = vmatpush1.bf16.msra.mxu0 0
      %2814 = vmatprep.subr.bf16.mxu0 0
      %2815 = vmatpush1.bf16.msra.mxu0 0
      %2816 = vmatprep.subr.bf16.mxu0 0
      %2817 = vmatpush1.bf16.msra.mxu0 0
      %2818 = vmatprep.subr.bf16.mxu0 0
      %2819 = vmatpush1.bf16.msra.mxu0 0
      %2820 = vmatprep.subr.bf16.mxu0 0
      %2821 = vmatpush1.bf16.msra.mxu0 %v752
      %2822 = vmatprep.subr.bf16.mxu0 0
      %2823 = vmatpush2.bf16.msra.mxu0 0
      %2824 = vmatprep.subr.bf16.mxu0 0
      %2825 = vmatpush2.bf16.msra.mxu0 0
      %2826 = vmatprep.subr.bf16.mxu0 0
      %2827 = vmatpush2.bf16.msra.mxu0 0
      %2828 = vmatprep.subr.bf16.mxu0 0
      %2829 = vmatpush2.bf16.msra.mxu0 0
      %2830 = vmatprep.subr.bf16.mxu0 0
      %2831 = vmatpush2.bf16.msra.mxu0 0
      %2832 = vmatprep.subr.bf16.mxu0 0
      %2833 = vmatpush2.bf16.msra.mxu0 0
      %2834 = vmatprep.subr.bf16.mxu0 0
      %2835 = vmatpush2.bf16.msra.mxu0 0
      %2836 = vmatprep.subr.bf16.mxu0 0
      %2837 = vmatpush2.bf16.msra.mxu0 0
      %2838 = vmatprep.mubr.bf16.mxu0 0
      %2839 = vmatmul.mubr.bf16.gmra.mxu0 %v2763
      %v2840 = vpop.f32.mrf.mxu0
      %v2841 = vadd.f32 0.0, %v2840
      %v2842 = vpop.f32.mrf.mxu0
      %v2843 = vpop.f32.mrf.mxu0
      %v2844 = vpop.f32.mrf.mxu0
      %2845 = vdwg.mxu0
      %v2846 = vadd.f32 %v2758, %v2800
      %v2847 = vadd.f32 %v2759, %v2802
      %v2848 = vadd.f32 %v2760, %v2841
      %v2849 = vld [vmem:[%s6] sm:$0xff]
      %v2850 = vld [vmem:[%s6 + $0x8] sm:$0xff]
      %v2851 = vld [vmem:[%s6 + $0x10] sm:$0xff]
      %v2852 = vld [vmem:[%s6 + $0x18] sm:$0xff]
      %v2853 = vld [vmem:[%s6 + $0x20] sm:$0xff]
      %v2854 = vld [vmem:[%s6 + $0x28] sm:$0xff]
      %v2855 = vld [vmem:[%s6 + $0x30] sm:$0xff]
      %v2856 = vld [vmem:[%s6 + $0x38] sm:$0xff]
      %v2857 = vld [vmem:[%s6 + $0x40] sm:$0xff]
      %v2858 = vld [vmem:[%s6 + $0x48] sm:$0xff]
      %v2859 = vld [vmem:[%s6 + $0x50] sm:$0xff]
      %v2860 = vld [vmem:[%s6 + $0x58] sm:$0xff]
      %v2861 = vld [vmem:[%s6 + $0x60] sm:$0xff]
      %v2862 = vld [vmem:[%s6 + $0x68] sm:$0xff]
      %v2863 = vld [vmem:[%s6 + $0x70] sm:$0xff]
      %v2864 = vld [vmem:[%s6 + $0x78] sm:$0xff]
      %v2865 = vld [vmem:[%s6 + $0x80] sm:$0xff]
      %v2866 = vld [vmem:[%s6 + $0x88] sm:$0xff]
      %v2867 = vld [vmem:[%s6 + $0x90] sm:$0xff]
      %v2868 = vld [vmem:[%s6 + $0x98] sm:$0xff]
      %v2869 = vld [vmem:[%s6 + $0xa0] sm:$0xff]
      %v2870 = vld [vmem:[%s6 + $0xa8] sm:$0xff]
      %v2871 = vld [vmem:[%s6 + $0xb0] sm:$0xff]
      %v2872 = vld [vmem:[%s6 + $0xb8] sm:$0xff]
      %v2873 = vld [vmem:[%s6 + $0xc0] sm:$0xff]
      %v2874 = vld [vmem:[%s6 + $0xc8] sm:$0xff]
      %v2875 = vld [vmem:[%s6 + $0xd0] sm:$0xff]
      %v2876 = vld [vmem:[%s6 + $0xd8] sm:$0xff]
      %v2877 = vld [vmem:[%s6 + $0xe0] sm:$0xff]
      %v2878 = vld [vmem:[%s6 + $0xe8] sm:$0xff]
      %v2879 = vld [vmem:[%s6 + $0xf0] sm:$0xff]
      %v2880 = vld [vmem:[%s6 + $0xf8] sm:$0xff]
      %v2881 = vld [vmem:[%s6 + $0x100] sm:$0xff]
      %v2882 = vld [vmem:[%s6 + $0x108] sm:$0xff]
      %v2883 = vld [vmem:[%s6 + $0x110] sm:$0xff]
      %v2884 = vld [vmem:[%s6 + $0x118] sm:$0xff]
      %v2885 = vld [vmem:[%s6 + $0x120] sm:$0xff]
      %v2886 = vld [vmem:[%s6 + $0x128] sm:$0xff]
      %v2887 = vld [vmem:[%s6 + $0x130] sm:$0xff]
      %v2888 = vld [vmem:[%s6 + $0x138] sm:$0xff]
      %v2889 = vld [vmem:[%s6 + $0x140] sm:$0xff]
      %v2890 = vld [vmem:[%s6 + $0x148] sm:$0xff]
      %v2891 = vld [vmem:[%s6 + $0x150] sm:$0xff]
      %v2892 = vld [vmem:[%s6 + $0x158] sm:$0xff]
      %v2893 = vld [vmem:[%s6 + $0x160] sm:$0xff]
      %v2894 = vld [vmem:[%s6 + $0x168] sm:$0xff]
      %v2895 = vld [vmem:[%s6 + $0x170] sm:$0xff]
      %v2896 = vld [vmem:[%s6 + $0x178] sm:$0xff]
      %v2897 = vld [vmem:[%s6 + $0x180] sm:$0xff]
      %v2898 = vld [vmem:[%s6 + $0x188] sm:$0xff]
      %v2899 = vld [vmem:[%s6 + $0x190] sm:$0xff]
      %v2900 = vld [vmem:[%s6 + $0x198] sm:$0xff]
      %v2901 = vld [vmem:[%s6 + $0x1a0] sm:$0xff]
      %v2902 = vld [vmem:[%s6 + $0x1a8] sm:$0xff]
      %v2903 = vld [vmem:[%s6 + $0x1b0] sm:$0xff]
      %v2904 = vld [vmem:[%s6 + $0x1b8] sm:$0xff]
      %v2905 = vld [vmem:[%s6 + $0x1c0] sm:$0xff]
      %v2906 = vld [vmem:[%s6 + $0x1c8] sm:$0xff]
      %v2907 = vld [vmem:[%s6 + $0x1d0] sm:$0xff]
      %v2908 = vld [vmem:[%s6 + $0x1d8] sm:$0xff]
      %v2909 = vld [vmem:[%s6 + $0x1e0] sm:$0xff]
      %v2910 = vld [vmem:[%s6 + $0x1e8] sm:$0xff]
      %v2911 = vld [vmem:[%s6 + $0x1f0] sm:$0xff]
      %v2912 = vld [vmem:[%s6 + $0x1f8] sm:$0xff]
      %v2913 = vld [vmem:[%s6 + $0x200] sm:$0xff]
      %v2914 = vld [vmem:[%s6 + $0x208] sm:$0xff]
      %v2915 = vld [vmem:[%s6 + $0x210] sm:$0xff]
      %v2916 = vld [vmem:[%s6 + $0x218] sm:$0xff]
      %v2917 = vld [vmem:[%s6 + $0x220] sm:$0xff]
      %v2918 = vld [vmem:[%s6 + $0x228] sm:$0xff]
      %v2919 = vld [vmem:[%s6 + $0x230] sm:$0xff]
      %v2920 = vld [vmem:[%s6 + $0x238] sm:$0xff]
      %v2922 = vsel %vm1641, %v2848, 0
      %2924 = vmatprep.subr.mxu0 %v2880
      %2925 = vmatpush1.msra.mxu0 %v2879
      %2926 = vmatprep.subr.mxu0 %v2878
      %2927 = vmatpush1.msra.mxu0 %v2877
      %2928 = vmatprep.subr.mxu0 %v2876
      %2929 = vmatpush1.msra.mxu0 %v2875
      %2930 = vmatprep.subr.mxu0 %v2874
      %2931 = vmatpush1.msra.mxu0 %v2873
      %2932 = vmatprep.subr.mxu0 %v2872
      %2933 = vmatpush1.msra.mxu0 %v2871
      %2934 = vmatprep.subr.mxu0 %v2870
      %2935 = vmatpush1.msra.mxu0 %v2869
      %2936 = vmatprep.subr.mxu0 %v2868
      %2937 = vmatpush1.msra.mxu0 %v2867
      %2938 = vmatprep.subr.mxu0 %v2866
      %2939 = vmatpush1.msra.mxu0 %v2865
      %2940 = vmatprep.subr.mxu0 %v2864
      %2941 = vmatpush1.msra.mxu0 %v2863
      %2942 = vmatprep.subr.mxu0 %v2862
      %2943 = vmatpush1.msra.mxu0 %v2861
      %2944 = vmatprep.subr.mxu0 %v2860
      %2945 = vmatpush1.msra.mxu0 %v2859
      %2946 = vmatprep.subr.mxu0 %v2858
      %2947 = vmatpush1.msra.mxu0 %v2857
      %2948 = vmatprep.subr.mxu0 %v2856
      %2949 = vmatpush1.msra.mxu0 %v2855
      %2950 = vmatprep.subr.mxu0 %v2854
      %2951 = vmatpush1.msra.mxu0 %v2853
      %2952 = vmatprep.subr.mxu0 %v2852
      %2953 = vmatpush1.msra.mxu0 %v2851
      %2954 = vmatprep.subr.mxu0 %v2850
      %2955 = vmatpush1.msra.mxu0 %v2849
      %2956 = vmatprep.subr.mxu0 %v2912
      %2957 = vmatpush2.msra.mxu0 %v2911
      %2958 = vmatprep.subr.mxu0 %v2910
      %2959 = vmatpush2.msra.mxu0 %v2909
      %2960 = vmatprep.subr.mxu0 %v2908
      %2961 = vmatpush2.msra.mxu0 %v2907
      %2962 = vmatprep.subr.mxu0 %v2906
      %2963 = vmatpush2.msra.mxu0 %v2905
      %2964 = vmatprep.subr.mxu0 %v2904
      %2965 = vmatpush2.msra.mxu0 %v2903
      %2966 = vmatprep.subr.mxu0 %v2902
      %2967 = vmatpush2.msra.mxu0 %v2901
      %2968 = vmatprep.subr.mxu0 %v2900
      %2969 = vmatpush2.msra.mxu0 %v2899
      %2970 = vmatprep.subr.mxu0 %v2898
      %2971 = vmatpush2.msra.mxu0 %v2897
      %2972 = vmatprep.subr.mxu0 %v2896
      %2973 = vmatpush2.msra.mxu0 %v2895
      %2974 = vmatprep.subr.mxu0 %v2894
      %2975 = vmatpush2.msra.mxu0 %v2893
      %2976 = vmatprep.subr.mxu0 %v2892
      %2977 = vmatpush2.msra.mxu0 %v2891
      %2978 = vmatprep.subr.mxu0 %v2890
      %2979 = vmatpush2.msra.mxu0 %v2889
      %2980 = vmatprep.subr.mxu0 %v2888
      %2981 = vmatpush2.msra.mxu0 %v2887
      %2982 = vmatprep.subr.mxu0 %v2886
      %2983 = vmatpush2.msra.mxu0 %v2885
      %2984 = vmatprep.subr.mxu0 %v2884
      %2985 = vmatpush2.msra.mxu0 %v2883
      %2986 = vmatprep.subr.mxu0 %v2882
      %2987 = vmatpush2.msra.mxu0 %v2881
      %2988 = vmatprep.mubr.f32.mxu0 %v2847
      %2989 = vmatmul.mubr.f32.gmra.mxu0 %v2846
      %v2990 = vpop.f32.mrf.mxu0
      %v2991 = vadd.f32 0.0, %v2990
      %v2992 = vpop.f32.mrf.mxu0
      %v2993 = vadd.f32 0.0, %v2992
      %2994 = vdwg.mxu0
      %2995 = vmatprep.subr.mxu0 0.0
      %2996 = vmatpush1.msra.mxu0 0.0
      %2997 = vmatprep.subr.mxu0 0.0
      %2998 = vmatpush1.msra.mxu0 0.0
      %2999 = vmatprep.subr.mxu0 0.0
      %3000 = vmatpush1.msra.mxu0 0.0
      %3001 = vmatprep.subr.mxu0 0.0
      %3002 = vmatpush1.msra.mxu0 0.0
      %3003 = vmatprep.subr.mxu0 0.0
      %3004 = vmatpush1.msra.mxu0 0.0
      %3005 = vmatprep.subr.mxu0 0.0
      %3006 = vmatpush1.msra.mxu0 0.0
      %3007 = vmatprep.subr.mxu0 0.0
      %3008 = vmatpush1.msra.mxu0 0.0
      %3009 = vmatprep.subr.mxu0 0.0
      %3010 = vmatpush1.msra.mxu0 0.0
      %3011 = vmatprep.subr.mxu0 0.0
      %3012 = vmatpush1.msra.mxu0 0.0
      %3013 = vmatprep.subr.mxu0 0.0
      %3014 = vmatpush1.msra.mxu0 0.0
      %3015 = vmatprep.subr.mxu0 0.0
      %3016 = vmatpush1.msra.mxu0 0.0
      %3017 = vmatprep.subr.mxu0 0.0
      %3018 = vmatpush1.msra.mxu0 0.0
      %3019 = vmatprep.subr.mxu0 %v2920
      %3020 = vmatpush1.msra.mxu0 %v2919
      %3021 = vmatprep.subr.mxu0 %v2918
      %3022 = vmatpush1.msra.mxu0 %v2917
      %3023 = vmatprep.subr.mxu0 %v2916
      %3024 = vmatpush1.msra.mxu0 %v2915
      %3025 = vmatprep.subr.mxu0 %v2914
      %3026 = vmatpush1.msra.mxu0 %v2913
      %3027 = vmatprep.subr.mxu0 0.0
      %3028 = vmatpush2.msra.mxu0 0.0
      %3029 = vmatprep.subr.mxu0 0.0
      %3030 = vmatpush2.msra.mxu0 0.0
      %3031 = vmatprep.subr.mxu0 0.0
      %3032 = vmatpush2.msra.mxu0 0.0
      %3033 = vmatprep.subr.mxu0 0.0
      %3034 = vmatpush2.msra.mxu0 0.0
      %3035 = vmatprep.subr.mxu0 0.0
      %3036 = vmatpush2.msra.mxu0 0.0
      %3037 = vmatprep.subr.mxu0 0.0
      %3038 = vmatpush2.msra.mxu0 0.0
      %3039 = vmatprep.subr.mxu0 0.0
      %3040 = vmatpush2.msra.mxu0 0.0
      %3041 = vmatprep.subr.mxu0 0.0
      %3042 = vmatpush2.msra.mxu0 0.0
      %3043 = vmatprep.subr.mxu0 0.0
      %3044 = vmatpush2.msra.mxu0 0.0
      %3045 = vmatprep.subr.mxu0 0.0
      %3046 = vmatpush2.msra.mxu0 0.0
      %3047 = vmatprep.subr.mxu0 0.0
      %3048 = vmatpush2.msra.mxu0 0.0
      %3049 = vmatprep.subr.mxu0 0.0
      %3050 = vmatpush2.msra.mxu0 0.0
      %3051 = vmatprep.subr.mxu0 0.0
      %3052 = vmatpush2.msra.mxu0 0.0
      %3053 = vmatprep.subr.mxu0 0.0
      %3054 = vmatpush2.msra.mxu0 0.0
      %3055 = vmatprep.subr.mxu0 0.0
      %3056 = vmatpush2.msra.mxu0 0.0
      %3057 = vmatprep.subr.mxu0 0.0
      %3058 = vmatpush2.msra.mxu0 0.0
      %3059 = vmatprep.mubr.f32.mxu0 0.0
      %3060 = vmatmul.mubr.f32.gmra.mxu0 %v2922
      %v3061 = vpop.f32.mrf.mxu0
      %v3062 = vadd.f32 %v2991, %v3061
      %v3063 = vpop.f32.mrf.mxu0
      %v3064 = vadd.f32 %v2993, %v3063
      %3065 = vdwg.mxu0
      %3066 = vst [vmem:[%s305] sm:$0xff] %v3062
      %3067 = vst [vmem:[%s305 + $0x8] sm:$0xff] %v3064
      %p3068 = scmp.lt.s32.totalorder %s19, 1
      %s3069 = scalar_select %p3068, %s19, 1
      %s3070 = smul.addr %s3069, 2
      %s3071 = smul.addr %s3070, 8
      %s3072 = scalar_lea.vmem %s8, %s3071
      // Predicated region
      $region53: #{basic_block_forward.1} parent=51 // pred_check
        %p3073 = pneg %p210
      $region54: #{basic_block_forward.1} parent=51 // pred_check_branch
        %3075 = sbr.rel (%p3073) target = $region56
      $region55: #{basic_block_forward.1} parent=51 // pred_region
        _
      $region56: #{basic_block_forward.1} parent=51 // pred_fallthru
        _
    $region52: #{basic_block_forward.1} parent=5 // pred_fallthru
      _
    %p3076 = scmp.le.s32.totalorder 2, %s14
    // Predicated region
    $region57: #{basic_block_forward.1} parent=5 // pred_check
      %p3077 = pneg %p3076
    $region58: #{basic_block_forward.1} parent=5 // pred_check_branch
      %3079 = sbr.rel (%p3077) target = $region60
    $region59: #{basic_block_forward.1} parent=5 // pred_region
      %s3080 = ssub.s32 %s14, 2
      // Predicated region
      $region61: #{basic_block_forward.1} parent=59 // pred_check
        %p3081 = pneg %p216
      $region62: #{basic_block_forward.1} parent=59 // pred_check_branch
        %3083 = sbr.rel (%p3081) target = $region64
      $region63: #{basic_block_forward.1} parent=59 // pred_region
        %p3084 = scmp.lt.s32.totalorder %s20, 1
        %s3085 = scalar_select %p3084, %s20, 1
        %s3086 = smul.addr %s3085, 2
        %s3087 = smul.addr %s3086, 8
        %s3088 = scalar_lea.vmem %s8, %s3087
      $region64: #{basic_block_forward.1} parent=59 // pred_fallthru
        _
    $region60: #{basic_block_forward.1} parent=5 // pred_fallthru
      _
  $region6: #{basic_block_forward.1} parent=0 // loop_footer
    %s18 = sadd.s32 1, %s14
  $region7: #{basic_block_forward.1} parent=0 // loop_footer_branch
    %13 = sbr.rel target = $region3
  $region8: #{basic_block_forward.1} parent=0 // loop_exit
    _

</llo_original>
